<compile_context>
chip_gen: v6e
topology: v6e:2x2x1
jax: 0.10.0
libtpu: 0.0.40
codegen_flags: <defaults>
</compile_context>

<pallas_src>
import functools

import jax
import jax.numpy as jnp
from jax.experimental import pallas as pl
from jax.experimental.pallas import tpu as pltpu

EPS = 1e-5  # PyTorch nn.LayerNorm default eps


def _layernorm(x, gamma, beta):
    mu = jnp.mean(x, axis=-1, keepdims=True)
    var = jnp.mean(jnp.square(x - mu), axis=-1, keepdims=True)
    return (x - mu) * jax.lax.rsqrt(var + EPS) * gamma + beta


def _gelu(x):
    # TODO(synk): PyTorch nn.GELU() default is exact erf GELU; erf has no reliable
    # Mosaic lowering, so we use the tanh approximation (max abs err ~3e-3).
    c = 0.7978845608028654  # sqrt(2/pi)
    return 0.5 * x * (1.0 + jnp.tanh(c * (x + 0.044715 * x * x * x)))


def block_kernel(num_heads,
                 x_ref, g1_ref, b1_ref, wqkv_ref, wproj_ref, bproj_ref,
                 g2_ref, b2_ref, w1_ref, bb1_ref, w2_ref, bb2_ref, o_ref):
    x = x_ref[0]                                   # (N, C) f32
    n, c = x.shape
    hd = c // num_heads
    cdt = wqkv_ref.dtype                           # bf16 compute dtype for MXU inputs

    def to_heads(t):
        # (N, C) -> (H, N, hd): one structured relayout (no per-head lane slicing).
        return jnp.transpose(t.reshape(n, num_heads, hd), (1, 0, 2))

    # ---------------- MSA branch ----------------
    h1 = _layernorm(x, g1_ref[...], b1_ref[...])                       # (N, C) f32
    qkv = jnp.dot(h1.astype(cdt), wqkv_ref[...],
                  preferred_element_type=jnp.float32)                  # (N, 3C) f32, full-K MXU
    qkv = qkv.astype(cdt)

    q = to_heads(qkv[:, 0 * c:1 * c])    # scale pre-folded into wqkv Q columns (host)
    k = to_heads(qkv[:, 1 * c:2 * c])
    v = to_heads(qkv[:, 2 * c:3 * c])                                  # (H, N, hd) each, bf16

    s = jnp.einsum("hqd,hkd->hqk", q, k,
                   preferred_element_type=jnp.float32)                 # (H, N, N) f32
    s = s - jnp.max(s, axis=-1, keepdims=True)
    p = jnp.exp(s)
    p = p * pl.reciprocal(jnp.sum(p, axis=-1, keepdims=True), approx=True)

    o = jnp.einsum("hqk,hkd->hqd", p.astype(cdt), v,
                   preferred_element_type=jnp.float32)                 # (H, N, hd) f32
    # Merge heads back to (N, C) once, then a single full-depth (N,C)@(C,C) projection.
    ctx = jnp.transpose(o, (1, 0, 2)).reshape(n, c).astype(cdt)        # (N, C) bf16
    x1 = x + jnp.dot(ctx, wproj_ref[...],
                     preferred_element_type=jnp.float32) + bproj_ref[...]   # residual 1

    # ---------------- MLP branch ----------------
    h2 = _layernorm(x1, g2_ref[...], b2_ref[...])
    m = jnp.dot(h2.astype(cdt), w1_ref[...],
                preferred_element_type=jnp.float32) + bb1_ref[...]
    m = _gelu(m)
    y = jnp.dot(m.astype(cdt), w2_ref[...],
                preferred_element_type=jnp.float32) + bb2_ref[...]
    o_ref[0] = (x1 + y).astype(o_ref.dtype)                            # residual 2


def vit_block(x, p, num_heads, *, compute_dtype=jnp.bfloat16, single_buffer_weights=True):
    B, N, C = x.shape
    Hm = p["w1"].shape[1]                       # MLP hidden width
    hd = C // num_heads
    scale = hd ** -0.5

    # One-time host-side prep: fold 1/sqrt(hd) into Q columns of wqkv, cast weights
    # to bf16 (halves DMA + VMEM residency; f32 accumulation in-kernel).
    wqkv_f32 = p["wqkv"].astype(jnp.float32)
    wqkv = jnp.concatenate([wqkv_f32[:, :C] * scale, wqkv_f32[:, C:]],
                           axis=-1).astype(compute_dtype)              # (C, 3C)
    wproj = p["wproj"].astype(compute_dtype)                           # (C, C)  full-depth proj
    w1 = p["w1"].astype(compute_dtype)                                 # (C, Hm)
    w2 = p["w2"].astype(compute_dtype)                                 # (Hm, C)

    use_single_buf = single_buffer_weights and hasattr(pl, "Buffered")

    def const_spec(shape):
        kwargs = {}
        if use_single_buf:
            # Grid-invariant blocks: no need for a second pipeline buffer.
            kwargs["pipeline_mode"] = pl.Buffered(1)
        return pl.BlockSpec(shape, lambda b, _r=len(shape): (0,) * _r, **kwargs)

    # ---------- generation-aware VMEM budget ----------
    w_isz = jnp.dtype(compute_dtype).itemsize
    weight_bytes = (wqkv.size + wproj.size + w1.size + w2.size) * w_isz
    bias_bytes = (6 * C + Hm) * 4
    io_bytes = 2 * 2 * N * C * 4                                       # x in + out, double-buffered
    # f32 temporaries (qkv, h1/h2/x1, ctx/o, MLP hidden) + (H,N,N) scores/probs,
    # with ~1.5x slack for bf16 shadow copies.
    act_bytes = 6 * N * (8 * C + 2 * num_heads * N + 2 * Hm)

    try:
        phys_vmem = int(getattr(pltpu.get_tpu_info(), "vmem_capacity_bytes",
                                64 * 1024 * 1024))
    except Exception:
        phys_vmem = 64 * 1024 * 1024                                   # conservative (v7x per-TC)
    vmem_cap = int(phys_vmem * 0.85)                                   # headroom for Mosaic scratch

    wb_mult = 1 if use_single_buf else 2
    vmem_limit = int(min(vmem_cap,
                         max(32 * 1024 * 1024,
                             wb_mult * weight_bytes + bias_bytes + io_bytes + act_bytes)))

    flops = 2 * B * N * (4 * C * C + 2 * C * Hm) + 4 * B * N * N * C
    transcendentals = B * num_heads * N * N + B * N * Hm
    bytes_accessed = 2 * B * N * C * 4 + weight_bytes + bias_bytes

    kernel = functools.partial(block_kernel, num_heads)
    return pl.pallas_call(
        kernel,
        out_shape=jax.ShapeDtypeStruct((B, N, C), x.dtype),
        grid=(B,),
        in_specs=[
            pl.BlockSpec((1, N, C), lambda b: (b, 0, 0)),   # x: one batch row / step
            const_spec((1, C)), const_spec((1, C)),         # norm1 gamma, beta
            const_spec((C, 3 * C)),                         # qkv weight (qkv_bias=False)
            const_spec((C, C)),                             # proj weight (full matrix)
            const_spec((1, C)),                             # proj bias
            const_spec((1, C)), const_spec((1, C)),         # norm2 gamma, beta
            const_spec((C, Hm)), const_spec((1, Hm)),       # fc1 weight, bias
            const_spec((Hm, C)), const_spec((1, C)),        # fc2 weight, bias
        ],
        out_specs=pl.BlockSpec((1, N, C), lambda b: (b, 0, 0)),
        compiler_params=pltpu.CompilerParams(
            dimension_semantics=("parallel",),
            vmem_limit_bytes=vmem_limit),
        cost_estimate=pl.CostEstimate(flops=flops,
                                      transcendentals=transcendentals,
                                      bytes_accessed=bytes_accessed),
    )(x, p["g1"], p["b1"], wqkv, wproj, p["bproj"],
      p["g2"], p["b2"], w1, p["bb1"], w2, p["bb2"])


def init_params(key, dim, mlp_ratio=4.0):
    hidden = int(dim * mlp_ratio)
    ks = jax.random.split(key, 4)
    s = 0.02
    f32 = jnp.float32
    return dict(
        g1=jnp.ones((1, dim), f32), b1=jnp.zeros((1, dim), f32),
        wqkv=(jax.random.normal(ks[0], (dim, 3 * dim)) * s).astype(f32),
        wproj=(jax.random.normal(ks[1], (dim, dim)) * s).astype(f32),
        bproj=jnp.zeros((1, dim), f32),
        g2=jnp.ones((1, dim), f32), b2=jnp.zeros((1, dim), f32),
        w1=(jax.random.normal(ks[2], (dim, hidden)) * s).astype(f32),
        bb1=jnp.zeros((1, hidden), f32),
        w2=(jax.random.normal(ks[3], (hidden, dim)) * s).astype(f32),
        bb2=jnp.zeros((1, dim), f32),
    )


def reference(x, p, num_heads):
    """Pure-JAX f32 reference mirroring the PyTorch Block forward (drop=0)."""
    def ln(t, g, b):
        mu = t.mean(-1, keepdims=True)
        var = ((t - mu) ** 2).mean(-1, keepdims=True)
        return (t - mu) / jnp.sqrt(var + EPS) * g + b

    B, N, C = x.shape
    hd = C // num_heads
    h = ln(x, p["g1"], p["b1"])
    qkv = h @ p["wqkv"]
    q, k, v = jnp.split(qkv, 3, axis=-1)
    sh = lambda t: t.reshape(B, N, num_heads, hd).transpose(0, 2, 1, 3)
    q, k, v = map(sh, (q, k, v))
    att = jnp.einsum("bhqd,bhkd->bhqk", q, k) * hd ** -0.5
    att = jax.nn.softmax(att, axis=-1)
    o = jnp.einsum("bhqk,bhkd->bhqd", att, v).transpose(0, 2, 1, 3).reshape(B, N, C)
    x1 = x + o @ p["wproj"] + p["bproj"]
    h2 = ln(x1, p["g2"], p["b2"])
    m = h2 @ p["w1"] + p["bb1"]
    m = 0.5 * m * (1.0 + jnp.tanh(0.7978845608028654 * (m + 0.044715 * m ** 3)))
    return x1 + m @ p["w2"] + p["bb2"]


if __name__ == "__main__":
    B, N, C, NUM_HEADS = 2, 8, 32, 4   # dim % num_heads == 0, head_dim = 8
    key = jax.random.PRNGKey(0)
    kx, kp = jax.random.split(key)
    x = jax.random.normal(kx, (B, N, C), jnp.float32)
    params = init_params(kp, C, mlp_ratio=4.0)

    try:
        out = jax.block_until_ready(vit_block(x, params, NUM_HEADS))
    except Exception:
        # Fallback: drop the single-buffer hint if this jax build rejects Buffered(1).
        out = jax.block_until_ready(
            vit_block(x, params, NUM_HEADS, single_buffer_weights=False))

    ref = reference(x, params, NUM_HEADS)
    assert out.shape == (B, N, C) and out.dtype == jnp.float32
    max_err = float(jnp.max(jnp.abs(out - ref)))
    # bf16 MXU inputs (f32 accumulation) + approx reciprocal => looser tolerance than f32.
    assert jnp.allclose(out, ref, atol=3e-2, rtol=3e-2), \
        f"mismatch vs JAX reference (max abs err {max_err})"
    print("KERNEL_OK")
</pallas_src>

<mosaic_0001>
module attributes {stable_mosaic.version = 11 : i64} {
  func.func @block_kernel(%arg0: i32, %arg1: memref<1x8x32xf32, #tpu.memory_space<vmem>>, %arg2: memref<1x32xf32, #tpu.memory_space<vmem>>, %arg3: memref<1x32xf32, #tpu.memory_space<vmem>>, %arg4: memref<32x96xbf16, #tpu.memory_space<vmem>>, %arg5: memref<32x32xbf16, #tpu.memory_space<vmem>>, %arg6: memref<1x32xf32, #tpu.memory_space<vmem>>, %arg7: memref<1x32xf32, #tpu.memory_space<vmem>>, %arg8: memref<1x32xf32, #tpu.memory_space<vmem>>, %arg9: memref<32x128xbf16, #tpu.memory_space<vmem>>, %arg10: memref<1x128xf32, #tpu.memory_space<vmem>>, %arg11: memref<128x32xbf16, #tpu.memory_space<vmem>>, %arg12: memref<1x32xf32, #tpu.memory_space<vmem>>, %arg13: memref<1x8x32xf32, #tpu.memory_space<vmem>>) attributes {dimension_semantics = [#tpu.dimension_semantics<parallel>], iteration_bounds = array<i64: 2>, scalar_prefetch = 0 : i64, scratch_operands = 0 : i64, tpu.core_type = #tpu.core_type<tc>, window_params = [{transform_indices = @transform_0, window_bounds = array<i64: 1, 8, 32>}, {pipeline_mode = #tpu.pipeline_mode<synchronous>, transform_indices = @transform_1, window_bounds = array<i64: 1, 32>}, {pipeline_mode = #tpu.pipeline_mode<synchronous>, transform_indices = @transform_2, window_bounds = array<i64: 1, 32>}, {pipeline_mode = #tpu.pipeline_mode<synchronous>, transform_indices = @transform_3, window_bounds = array<i64: 32, 96>}, {pipeline_mode = #tpu.pipeline_mode<synchronous>, transform_indices = @transform_4, window_bounds = array<i64: 32, 32>}, {pipeline_mode = #tpu.pipeline_mode<synchronous>, transform_indices = @transform_5, window_bounds = array<i64: 1, 32>}, {pipeline_mode = #tpu.pipeline_mode<synchronous>, transform_indices = @transform_6, window_bounds = array<i64: 1, 32>}, {pipeline_mode = #tpu.pipeline_mode<synchronous>, transform_indices = @transform_7, window_bounds = array<i64: 1, 32>}, {pipeline_mode = #tpu.pipeline_mode<synchronous>, transform_indices = @transform_8, window_bounds = array<i64: 32, 128>}, {pipeline_mode = #tpu.pipeline_mode<synchronous>, transform_indices = @transform_9, window_bounds = array<i64: 1, 128>}, {pipeline_mode = #tpu.pipeline_mode<synchronous>, transform_indices = @transform_10, window_bounds = array<i64: 128, 32>}, {pipeline_mode = #tpu.pipeline_mode<synchronous>, transform_indices = @transform_11, window_bounds = array<i64: 1, 32>}, {transform_indices = @transform_12, window_bounds = array<i64: 1, 8, 32>}]} {
    %c0 = arith.constant 0 : index
    %c0_0 = arith.constant 0 : index
    %c0_1 = arith.constant 0 : index
    %0 = vector.load %arg1[%c0, %c0_0, %c0_1] : memref<1x8x32xf32, #tpu.memory_space<vmem>>, vector<1x8x32xf32>
    %1 = vector.shape_cast %0 : vector<1x8x32xf32> to vector<8x32xf32>
    %c0_2 = arith.constant 0 : index
    %c0_3 = arith.constant 0 : index
    %2 = vector.load %arg2[%c0_2, %c0_3] : memref<1x32xf32, #tpu.memory_space<vmem>>, vector<1x32xf32>
    %c0_4 = arith.constant 0 : index
    %c0_5 = arith.constant 0 : index
    %3 = vector.load %arg3[%c0_4, %c0_5] : memref<1x32xf32, #tpu.memory_space<vmem>>, vector<1x32xf32>
    %cst = arith.constant dense<0.000000e+00> : vector<8xf32>
    %4 = vector.multi_reduction <add>, %1, %cst [1] : vector<8x32xf32> to vector<8xf32>
    %5 = vector.shape_cast %4 : vector<8xf32> to vector<8x1xf32>
    %cst_6 = arith.constant 3.200000e+01 : f32
    %6 = vector.broadcast %cst_6 : f32 to vector<8x1xf32>
    %7 = arith.divf %5, %6 : vector<8x1xf32>
    %8 = vector.broadcast %7 : vector<8x1xf32> to vector<8x32xf32>
    %9 = arith.subf %1, %8 : vector<8x32xf32>
    %10 = arith.mulf %9, %9 : vector<8x32xf32>
    %cst_7 = arith.constant dense<0.000000e+00> : vector<8xf32>
    %11 = vector.multi_reduction <add>, %10, %cst_7 [1] : vector<8x32xf32> to vector<8xf32>
    %12 = vector.shape_cast %11 : vector<8xf32> to vector<8x1xf32>
    %cst_8 = arith.constant 3.200000e+01 : f32
    %13 = vector.broadcast %cst_8 : f32 to vector<8x1xf32>
    %14 = arith.divf %12, %13 : vector<8x1xf32>
    %15 = vector.broadcast %7 : vector<8x1xf32> to vector<8x32xf32>
    %16 = arith.subf %1, %15 : vector<8x32xf32>
    %cst_9 = arith.constant 9.99999974E-6 : f32
    %17 = vector.broadcast %cst_9 : f32 to vector<8x1xf32>
    %18 = arith.addf %14, %17 : vector<8x1xf32>
    %19 = math.rsqrt %18 : vector<8x1xf32>
    %20 = vector.broadcast %19 : vector<8x1xf32> to vector<8x32xf32>
    %21 = arith.mulf %16, %20 : vector<8x32xf32>
    %22 = vector.broadcast %2 : vector<1x32xf32> to vector<8x32xf32>
    %23 = arith.mulf %21, %22 : vector<8x32xf32>
    %24 = vector.broadcast %3 : vector<1x32xf32> to vector<8x32xf32>
    %25 = arith.addf %23, %24 : vector<8x32xf32>
    %26 = arith.truncf %25 : vector<8x32xf32> to vector<8x32xbf16>
    %c0_10 = arith.constant 0 : index
    %c0_11 = arith.constant 0 : index
    %27 = vector.load %arg4[%c0_10, %c0_11] : memref<32x96xbf16, #tpu.memory_space<vmem>>, vector<32x96xbf16>
    %cst_12 = arith.constant dense<0.000000e+00> : vector<8x96xf32>
    %28 = tpu.matmul %26, %27, %cst_12 {dimension_numbers = #tpu.dot_dimension_numbers<[1], [0], [0], [1], [0, 0, 1, 1], [], []>} : vector<8x32xbf16>, vector<32x96xbf16>, vector<8x96xf32> -> vector<8x96xf32>
    %29 = arith.truncf %28 : vector<8x96xf32> to vector<8x96xbf16>
    %30 = vector.extract_strided_slice %29 {offsets = [0, 0], sizes = [8, 32], strides = [1, 1]} : vector<8x96xbf16> to vector<8x32xbf16>
    %31 = vector.shape_cast %30 : vector<8x32xbf16> to vector<8x4x8xbf16>
    %32 = tpu.transpose %31, [1, 0, 2] : vector<8x4x8xbf16> -> vector<4x8x8xbf16>
    %33 = vector.extract_strided_slice %29 {offsets = [0, 32], sizes = [8, 32], strides = [1, 1]} : vector<8x96xbf16> to vector<8x32xbf16>
    %34 = vector.shape_cast %33 : vector<8x32xbf16> to vector<8x4x8xbf16>
    %35 = tpu.transpose %34, [1, 0, 2] : vector<8x4x8xbf16> -> vector<4x8x8xbf16>
    %36 = vector.extract_strided_slice %29 {offsets = [0, 64], sizes = [8, 32], strides = [1, 1]} : vector<8x96xbf16> to vector<8x32xbf16>
    %37 = vector.shape_cast %36 : vector<8x32xbf16> to vector<8x4x8xbf16>
    %38 = tpu.transpose %37, [1, 0, 2] : vector<8x4x8xbf16> -> vector<4x8x8xbf16>
    "tpu.trace_start"() <{level = 10 : i32, message = "hqd,hkd->hqk"}> : () -> ()
    %cst_13 = arith.constant dense<0.000000e+00> : vector<4x8x8xf32>
    %39 = tpu.matmul %32, %35, %cst_13 {dimension_numbers = #tpu.dot_dimension_numbers<[2], [2], [1], [1], [0, 0, 0, 1, 1, 1], [0], [0]>} : vector<4x8x8xbf16>, vector<4x8x8xbf16>, vector<4x8x8xf32> -> vector<4x8x8xf32>
    "tpu.trace_stop"() : () -> ()
    %cst_14 = arith.constant dense<0xFF800000> : vector<4x8xf32>
    %40 = vector.multi_reduction <maximumf>, %39, %cst_14 [2] : vector<4x8x8xf32> to vector<4x8xf32>
    %41 = vector.shape_cast %40 : vector<4x8xf32> to vector<4x8x1xf32>
    %42 = vector.broadcast %41 : vector<4x8x1xf32> to vector<4x8x8xf32>
    %43 = arith.subf %39, %42 : vector<4x8x8xf32>
    %44 = math.exp %43 : vector<4x8x8xf32>
    %cst_15 = arith.constant dense<0.000000e+00> : vector<4x8xf32>
    %45 = vector.multi_reduction <add>, %44, %cst_15 [2] : vector<4x8x8xf32> to vector<4x8xf32>
    %46 = vector.shape_cast %45 : vector<4x8xf32> to vector<4x8x1xf32>
    %47 = tpu.reciprocal %46 {approx = true} : vector<4x8x1xf32> -> vector<4x8x1xf32>
    %48 = vector.broadcast %47 : vector<4x8x1xf32> to vector<4x8x8xf32>
    %49 = arith.mulf %44, %48 : vector<4x8x8xf32>
    %50 = arith.truncf %49 : vector<4x8x8xf32> to vector<4x8x8xbf16>
    "tpu.trace_start"() <{level = 10 : i32, message = "hqk,hkd->hqd"}> : () -> ()
    %cst_16 = arith.constant dense<0.000000e+00> : vector<4x8x8xf32>
    %51 = tpu.matmul %50, %38, %cst_16 {dimension_numbers = #tpu.dot_dimension_numbers<[2], [1], [1], [2], [0, 0, 0, 1, 1, 2], [0], [0]>} : vector<4x8x8xbf16>, vector<4x8x8xbf16>, vector<4x8x8xf32> -> vector<4x8x8xf32>
    "tpu.trace_stop"() : () -> ()
    %52 = tpu.transpose %51, [1, 0, 2] : vector<4x8x8xf32> -> vector<8x4x8xf32>
    %53 = vector.shape_cast %52 : vector<8x4x8xf32> to vector<8x32xf32>
    %54 = arith.truncf %53 : vector<8x32xf32> to vector<8x32xbf16>
    %c0_17 = arith.constant 0 : index
    %c0_18 = arith.constant 0 : index
    %55 = vector.load %arg5[%c0_17, %c0_18] : memref<32x32xbf16, #tpu.memory_space<vmem>>, vector<32x32xbf16>
    %cst_19 = arith.constant dense<0.000000e+00> : vector<8x32xf32>
    %56 = tpu.matmul %54, %55, %cst_19 {dimension_numbers = #tpu.dot_dimension_numbers<[1], [0], [0], [1], [0, 0, 1, 1], [], []>} : vector<8x32xbf16>, vector<32x32xbf16>, vector<8x32xf32> -> vector<8x32xf32>
    %57 = arith.addf %1, %56 : vector<8x32xf32>
    %c0_20 = arith.constant 0 : index
    %c0_21 = arith.constant 0 : index
    %58 = vector.load %arg6[%c0_20, %c0_21] : memref<1x32xf32, #tpu.memory_space<vmem>>, vector<1x32xf32>
    %59 = vector.broadcast %58 : vector<1x32xf32> to vector<8x32xf32>
    %60 = arith.addf %57, %59 : vector<8x32xf32>
    %c0_22 = arith.constant 0 : index
    %c0_23 = arith.constant 0 : index
    %61 = vector.load %arg7[%c0_22, %c0_23] : memref<1x32xf32, #tpu.memory_space<vmem>>, vector<1x32xf32>
    %c0_24 = arith.constant 0 : index
    %c0_25 = arith.constant 0 : index
    %62 = vector.load %arg8[%c0_24, %c0_25] : memref<1x32xf32, #tpu.memory_space<vmem>>, vector<1x32xf32>
    %cst_26 = arith.constant dense<0.000000e+00> : vector<8xf32>
    %63 = vector.multi_reduction <add>, %60, %cst_26 [1] : vector<8x32xf32> to vector<8xf32>
    %64 = vector.shape_cast %63 : vector<8xf32> to vector<8x1xf32>
    %cst_27 = arith.constant 3.200000e+01 : f32
    %65 = vector.broadcast %cst_27 : f32 to vector<8x1xf32>
    %66 = arith.divf %64, %65 : vector<8x1xf32>
    %67 = vector.broadcast %66 : vector<8x1xf32> to vector<8x32xf32>
    %68 = arith.subf %60, %67 : vector<8x32xf32>
    %69 = arith.mulf %68, %68 : vector<8x32xf32>
    %cst_28 = arith.constant dense<0.000000e+00> : vector<8xf32>
    %70 = vector.multi_reduction <add>, %69, %cst_28 [1] : vector<8x32xf32> to vector<8xf32>
    %71 = vector.shape_cast %70 : vector<8xf32> to vector<8x1xf32>
    %cst_29 = arith.constant 3.200000e+01 : f32
    %72 = vector.broadcast %cst_29 : f32 to vector<8x1xf32>
    %73 = arith.divf %71, %72 : vector<8x1xf32>
    %74 = vector.broadcast %66 : vector<8x1xf32> to vector<8x32xf32>
    %75 = arith.subf %60, %74 : vector<8x32xf32>
    %cst_30 = arith.constant 9.99999974E-6 : f32
    %76 = vector.broadcast %cst_30 : f32 to vector<8x1xf32>
    %77 = arith.addf %73, %76 : vector<8x1xf32>
    %78 = math.rsqrt %77 : vector<8x1xf32>
    %79 = vector.broadcast %78 : vector<8x1xf32> to vector<8x32xf32>
    %80 = arith.mulf %75, %79 : vector<8x32xf32>
    %81 = vector.broadcast %61 : vector<1x32xf32> to vector<8x32xf32>
    %82 = arith.mulf %80, %81 : vector<8x32xf32>
    %83 = vector.broadcast %62 : vector<1x32xf32> to vector<8x32xf32>
    %84 = arith.addf %82, %83 : vector<8x32xf32>
    %85 = arith.truncf %84 : vector<8x32xf32> to vector<8x32xbf16>
    %c0_31 = arith.constant 0 : index
    %c0_32 = arith.constant 0 : index
    %86 = vector.load %arg9[%c0_31, %c0_32] : memref<32x128xbf16, #tpu.memory_space<vmem>>, vector<32x128xbf16>
    %cst_33 = arith.constant dense<0.000000e+00> : vector<8x128xf32>
    %87 = tpu.matmul %85, %86, %cst_33 {dimension_numbers = #tpu.dot_dimension_numbers<[1], [0], [0], [1], [0, 0, 1, 1], [], []>} : vector<8x32xbf16>, vector<32x128xbf16>, vector<8x128xf32> -> vector<8x128xf32>
    %c0_34 = arith.constant 0 : index
    %c0_35 = arith.constant 0 : index
    %88 = vector.load %arg10[%c0_34, %c0_35] : memref<1x128xf32, #tpu.memory_space<vmem>>, vector<1x128xf32>
    %89 = vector.broadcast %88 : vector<1x128xf32> to vector<8x128xf32>
    %90 = arith.addf %87, %89 : vector<8x128xf32>
    %cst_36 = arith.constant 5.000000e-01 : f32
    %91 = vector.broadcast %cst_36 : f32 to vector<8x128xf32>
    %92 = arith.mulf %91, %90 : vector<8x128xf32>
    %cst_37 = arith.constant 4.471500e-02 : f32
    %93 = vector.broadcast %cst_37 : f32 to vector<8x128xf32>
    %94 = arith.mulf %93, %90 : vector<8x128xf32>
    %95 = arith.mulf %94, %90 : vector<8x128xf32>
    %96 = arith.mulf %95, %90 : vector<8x128xf32>
    %97 = arith.addf %90, %96 : vector<8x128xf32>
    %cst_38 = arith.constant 0.797884583 : f32
    %98 = vector.broadcast %cst_38 : f32 to vector<8x128xf32>
    %99 = arith.mulf %98, %97 : vector<8x128xf32>
    %100 = math.tanh %99 : vector<8x128xf32>
    %cst_39 = arith.constant 1.000000e+00 : f32
    %101 = vector.broadcast %cst_39 : f32 to vector<8x128xf32>
    %102 = arith.addf %101, %100 : vector<8x128xf32>
    %103 = arith.mulf %92, %102 : vector<8x128xf32>
    %104 = arith.truncf %103 : vector<8x128xf32> to vector<8x128xbf16>
    %c0_40 = arith.constant 0 : index
    %c0_41 = arith.constant 0 : index
    %105 = vector.load %arg11[%c0_40, %c0_41] : memref<128x32xbf16, #tpu.memory_space<vmem>>, vector<128x32xbf16>
    %cst_42 = arith.constant dense<0.000000e+00> : vector<8x32xf32>
    %106 = tpu.matmul %104, %105, %cst_42 {dimension_numbers = #tpu.dot_dimension_numbers<[1], [0], [0], [1], [0, 0, 1, 1], [], []>} : vector<8x128xbf16>, vector<128x32xbf16>, vector<8x32xf32> -> vector<8x32xf32>
    %c0_43 = arith.constant 0 : index
    %c0_44 = arith.constant 0 : index
    %107 = vector.load %arg12[%c0_43, %c0_44] : memref<1x32xf32, #tpu.memory_space<vmem>>, vector<1x32xf32>
    %108 = vector.broadcast %107 : vector<1x32xf32> to vector<8x32xf32>
    %109 = arith.addf %106, %108 : vector<8x32xf32>
    %110 = arith.addf %60, %109 : vector<8x32xf32>
    %c0_45 = arith.constant 0 : index
    %c0_46 = arith.constant 0 : index
    %c0_47 = arith.constant 0 : index
    %111 = vector.load %arg13[%c0_45, %c0_46, %c0_47] : memref<1x8x32xf32, #tpu.memory_space<vmem>>, vector<1x8x32xf32>
    %112 = vector.shape_cast %111 : vector<1x8x32xf32> to vector<8x32xf32>
    %113 = vector.shape_cast %110 : vector<8x32xf32> to vector<1x8x32xf32>
    tpu.vector_store %arg13[%c0_45, %c0_46, %c0_47], %113 {strides = array<i32>} : memref<1x8x32xf32, #tpu.memory_space<vmem>>, vector<1x8x32xf32>,
    return
  }
  func.func @transform_0(%arg0: i32) -> (i32, i32, i32) {
    %c0_i32 = arith.constant 0 : i32
    %c0_i32_0 = arith.constant 0 : i32
    %c0_i32_1 = arith.constant 0 : i32
    return %arg0, %c0_i32, %c0_i32_0 : i32, i32, i32
  }
  func.func @transform_1(%arg0: i32) -> (i32, i32) {
    %c0_i32 = arith.constant 0 : i32
    %c0_i32_0 = arith.constant 0 : i32
    %c0_i32_1 = arith.constant 0 : i32
    return %c0_i32, %c0_i32_0 : i32, i32
  }
  func.func @transform_2(%arg0: i32) -> (i32, i32) {
    %c0_i32 = arith.constant 0 : i32
    %c0_i32_0 = arith.constant 0 : i32
    %c0_i32_1 = arith.constant 0 : i32
    return %c0_i32, %c0_i32_0 : i32, i32
  }
  func.func @transform_3(%arg0: i32) -> (i32, i32) {
    %c0_i32 = arith.constant 0 : i32
    %c0_i32_0 = arith.constant 0 : i32
    %c0_i32_1 = arith.constant 0 : i32
    return %c0_i32, %c0_i32_0 : i32, i32
  }
  func.func @transform_4(%arg0: i32) -> (i32, i32) {
    %c0_i32 = arith.constant 0 : i32
    %c0_i32_0 = arith.constant 0 : i32
    %c0_i32_1 = arith.constant 0 : i32
    return %c0_i32, %c0_i32_0 : i32, i32
  }
  func.func @transform_5(%arg0: i32) -> (i32, i32) {
    %c0_i32 = arith.constant 0 : i32
    %c0_i32_0 = arith.constant 0 : i32
    %c0_i32_1 = arith.constant 0 : i32
    return %c0_i32, %c0_i32_0 : i32, i32
  }
  func.func @transform_6(%arg0: i32) -> (i32, i32) {
    %c0_i32 = arith.constant 0 : i32
    %c0_i32_0 = arith.constant 0 : i32
    %c0_i32_1 = arith.constant 0 : i32
    return %c0_i32, %c0_i32_0 : i32, i32
  }
  func.func @transform_7(%arg0: i32) -> (i32, i32) {
    %c0_i32 = arith.constant 0 : i32
    %c0_i32_0 = arith.constant 0 : i32
    %c0_i32_1 = arith.constant 0 : i32
    return %c0_i32, %c0_i32_0 : i32, i32
  }
  func.func @transform_8(%arg0: i32) -> (i32, i32) {
    %c0_i32 = arith.constant 0 : i32
    %c0_i32_0 = arith.constant 0 : i32
    %c0_i32_1 = arith.constant 0 : i32
    return %c0_i32, %c0_i32_0 : i32, i32
  }
  func.func @transform_9(%arg0: i32) -> (i32, i32) {
    %c0_i32 = arith.constant 0 : i32
    %c0_i32_0 = arith.constant 0 : i32
    %c0_i32_1 = arith.constant 0 : i32
    return %c0_i32, %c0_i32_0 : i32, i32
  }
  func.func @transform_10(%arg0: i32) -> (i32, i32) {
    %c0_i32 = arith.constant 0 : i32
    %c0_i32_0 = arith.constant 0 : i32
    %c0_i32_1 = arith.constant 0 : i32
    return %c0_i32, %c0_i32_0 : i32, i32
  }
  func.func @transform_11(%arg0: i32) -> (i32, i32) {
    %c0_i32 = arith.constant 0 : i32
    %c0_i32_0 = arith.constant 0 : i32
    %c0_i32_1 = arith.constant 0 : i32
    return %c0_i32, %c0_i32_0 : i32, i32
  }
  func.func @transform_12(%arg0: i32) -> (i32, i32, i32) {
    %c0_i32 = arith.constant 0 : i32
    %c0_i32_0 = arith.constant 0 : i32
    %c0_i32_1 = arith.constant 0 : i32
    return %arg0, %c0_i32, %c0_i32_0 : i32, i32, i32
  }
}

module attributes {stable_mosaic.version = 11 : i64} {
  func.func @block_kernel(%arg0: i32, %arg1: memref<1x8x32xf32, #tpu.memory_space<vmem>>, %arg2: memref<1x32xf32, #tpu.memory_space<vmem>>, %arg3: memref<1x32xf32, #tpu.memory_space<vmem>>, %arg4: memref<32x96xbf16, #tpu.memory_space<vmem>>, %arg5: memref<32x32xbf16, #tpu.memory_space<vmem>>, %arg6: memref<1x32xf32, #tpu.memory_space<vmem>>, %arg7: memref<1x32xf32, #tpu.memory_space<vmem>>, %arg8: memref<1x32xf32, #tpu.memory_space<vmem>>, %arg9: memref<32x128xbf16, #tpu.memory_space<vmem>>, %arg10: memref<1x128xf32, #tpu.memory_space<vmem>>, %arg11: memref<128x32xbf16, #tpu.memory_space<vmem>>, %arg12: memref<1x32xf32, #tpu.memory_space<vmem>>, %arg13: memref<1x8x32xf32, #tpu.memory_space<vmem>>) attributes {dimension_semantics = [#tpu.dimension_semantics<parallel>], iteration_bounds = array<i64: 2>, scalar_prefetch = 0 : i64, scratch_operands = 0 : i64, tpu.core_type = #tpu.core_type<tc>, window_params = [{transform_indices = @transform_0, window_bounds = array<i64: 1, 8, 32>}, {pipeline_mode = #tpu.pipeline_mode<synchronous>, transform_indices = @transform_1, window_bounds = array<i64: 1, 32>}, {pipeline_mode = #tpu.pipeline_mode<synchronous>, transform_indices = @transform_2, window_bounds = array<i64: 1, 32>}, {pipeline_mode = #tpu.pipeline_mode<synchronous>, transform_indices = @transform_3, window_bounds = array<i64: 32, 96>}, {pipeline_mode = #tpu.pipeline_mode<synchronous>, transform_indices = @transform_4, window_bounds = array<i64: 32, 32>}, {pipeline_mode = #tpu.pipeline_mode<synchronous>, transform_indices = @transform_5, window_bounds = array<i64: 1, 32>}, {pipeline_mode = #tpu.pipeline_mode<synchronous>, transform_indices = @transform_6, window_bounds = array<i64: 1, 32>}, {pipeline_mode = #tpu.pipeline_mode<synchronous>, transform_indices = @transform_7, window_bounds = array<i64: 1, 32>}, {pipeline_mode = #tpu.pipeline_mode<synchronous>, transform_indices = @transform_8, window_bounds = array<i64: 32, 128>}, {pipeline_mode = #tpu.pipeline_mode<synchronous>, transform_indices = @transform_9, window_bounds = array<i64: 1, 128>}, {pipeline_mode = #tpu.pipeline_mode<synchronous>, transform_indices = @transform_10, window_bounds = array<i64: 128, 32>}, {pipeline_mode = #tpu.pipeline_mode<synchronous>, transform_indices = @transform_11, window_bounds = array<i64: 1, 32>}, {transform_indices = @transform_12, window_bounds = array<i64: 1, 8, 32>}]} {
    %c0 = arith.constant 0 : index
    %c0_0 = arith.constant 0 : index
    %c0_1 = arith.constant 0 : index
    %0 = vector.load %arg1[%c0, %c0_0, %c0_1] : memref<1x8x32xf32, #tpu.memory_space<vmem>>, vector<1x8x32xf32>
    %1 = vector.shape_cast %0 : vector<1x8x32xf32> to vector<8x32xf32>
    %c0_2 = arith.constant 0 : index
    %c0_3 = arith.constant 0 : index
    %2 = vector.load %arg2[%c0_2, %c0_3] : memref<1x32xf32, #tpu.memory_space<vmem>>, vector<1x32xf32>
    %c0_4 = arith.constant 0 : index
    %c0_5 = arith.constant 0 : index
    %3 = vector.load %arg3[%c0_4, %c0_5] : memref<1x32xf32, #tpu.memory_space<vmem>>, vector<1x32xf32>
    %cst = arith.constant dense<0.000000e+00> : vector<8xf32>
    %4 = vector.multi_reduction <add>, %1, %cst [1] : vector<8x32xf32> to vector<8xf32>
    %5 = vector.shape_cast %4 : vector<8xf32> to vector<8x1xf32>
    %cst_6 = arith.constant 3.200000e+01 : f32
    %6 = vector.broadcast %cst_6 : f32 to vector<8x1xf32>
    %7 = arith.divf %5, %6 : vector<8x1xf32>
    %8 = vector.broadcast %7 : vector<8x1xf32> to vector<8x32xf32>
    %9 = arith.subf %1, %8 : vector<8x32xf32>
    %10 = arith.mulf %9, %9 : vector<8x32xf32>
    %cst_7 = arith.constant dense<0.000000e+00> : vector<8xf32>
    %11 = vector.multi_reduction <add>, %10, %cst_7 [1] : vector<8x32xf32> to vector<8xf32>
    %12 = vector.shape_cast %11 : vector<8xf32> to vector<8x1xf32>
    %cst_8 = arith.constant 3.200000e+01 : f32
    %13 = vector.broadcast %cst_8 : f32 to vector<8x1xf32>
    %14 = arith.divf %12, %13 : vector<8x1xf32>
    %15 = vector.broadcast %7 : vector<8x1xf32> to vector<8x32xf32>
    %16 = arith.subf %1, %15 : vector<8x32xf32>
    %cst_9 = arith.constant 9.99999974E-6 : f32
    %17 = vector.broadcast %cst_9 : f32 to vector<8x1xf32>
    %18 = arith.addf %14, %17 : vector<8x1xf32>
    %19 = math.rsqrt %18 : vector<8x1xf32>
    %20 = vector.broadcast %19 : vector<8x1xf32> to vector<8x32xf32>
    %21 = arith.mulf %16, %20 : vector<8x32xf32>
    %22 = vector.broadcast %2 : vector<1x32xf32> to vector<8x32xf32>
    %23 = arith.mulf %21, %22 : vector<8x32xf32>
    %24 = vector.broadcast %3 : vector<1x32xf32> to vector<8x32xf32>
    %25 = arith.addf %23, %24 : vector<8x32xf32>
    %26 = arith.truncf %25 : vector<8x32xf32> to vector<8x32xbf16>
    %c0_10 = arith.constant 0 : index
    %c0_11 = arith.constant 0 : index
    %27 = vector.load %arg4[%c0_10, %c0_11] : memref<32x96xbf16, #tpu.memory_space<vmem>>, vector<32x96xbf16>
    %cst_12 = arith.constant dense<0.000000e+00> : vector<8x96xf32>
    %28 = tpu.matmul %26, %27, %cst_12 {dimension_numbers = #tpu.dot_dimension_numbers<[1], [0], [0], [1], [0, 0, 1, 1], [], []>} : vector<8x32xbf16>, vector<32x96xbf16>, vector<8x96xf32> -> vector<8x96xf32>
    %29 = arith.truncf %28 : vector<8x96xf32> to vector<8x96xbf16>
    %30 = vector.extract_strided_slice %29 {offsets = [0, 0], sizes = [8, 32], strides = [1, 1]} : vector<8x96xbf16> to vector<8x32xbf16>
    %31 = vector.shape_cast %30 : vector<8x32xbf16> to vector<8x4x8xbf16>
    %32 = tpu.transpose %31, [1, 0, 2] : vector<8x4x8xbf16> -> vector<4x8x8xbf16>
    %33 = vector.extract_strided_slice %29 {offsets = [0, 32], sizes = [8, 32], strides = [1, 1]} : vector<8x96xbf16> to vector<8x32xbf16>
    %34 = vector.shape_cast %33 : vector<8x32xbf16> to vector<8x4x8xbf16>
    %35 = tpu.transpose %34, [1, 0, 2] : vector<8x4x8xbf16> -> vector<4x8x8xbf16>
    %36 = vector.extract_strided_slice %29 {offsets = [0, 64], sizes = [8, 32], strides = [1, 1]} : vector<8x96xbf16> to vector<8x32xbf16>
    %37 = vector.shape_cast %36 : vector<8x32xbf16> to vector<8x4x8xbf16>
    %38 = tpu.transpose %37, [1, 0, 2] : vector<8x4x8xbf16> -> vector<4x8x8xbf16>
    "tpu.trace_start"() <{level = 10 : i32, message = "hqd,hkd->hqk"}> : () -> ()
    %cst_13 = arith.constant dense<0.000000e+00> : vector<4x8x8xf32>
    %39 = tpu.matmul %32, %35, %cst_13 {dimension_numbers = #tpu.dot_dimension_numbers<[2], [2], [1], [1], [0, 0, 0, 1, 1, 1], [0], [0]>} : vector<4x8x8xbf16>, vector<4x8x8xbf16>, vector<4x8x8xf32> -> vector<4x8x8xf32>
    "tpu.trace_stop"() : () -> ()
    %cst_14 = arith.constant dense<0xFF800000> : vector<4x8xf32>
    %40 = vector.multi_reduction <maximumf>, %39, %cst_14 [2] : vector<4x8x8xf32> to vector<4x8xf32>
    %41 = vector.shape_cast %40 : vector<4x8xf32> to vector<4x8x1xf32>
    %42 = vector.broadcast %41 : vector<4x8x1xf32> to vector<4x8x8xf32>
    %43 = arith.subf %39, %42 : vector<4x8x8xf32>
    %44 = math.exp %43 : vector<4x8x8xf32>
    %cst_15 = arith.constant dense<0.000000e+00> : vector<4x8xf32>
    %45 = vector.multi_reduction <add>, %44, %cst_15 [2] : vector<4x8x8xf32> to vector<4x8xf32>
    %46 = vector.shape_cast %45 : vector<4x8xf32> to vector<4x8x1xf32>
    %47 = tpu.reciprocal %46 {approx = true} : vector<4x8x1xf32> -> vector<4x8x1xf32>
    %48 = vector.broadcast %47 : vector<4x8x1xf32> to vector<4x8x8xf32>
    %49 = arith.mulf %44, %48 : vector<4x8x8xf32>
    %50 = arith.truncf %49 : vector<4x8x8xf32> to vector<4x8x8xbf16>
    "tpu.trace_start"() <{level = 10 : i32, message = "hqk,hkd->hqd"}> : () -> ()
    %cst_16 = arith.constant dense<0.000000e+00> : vector<4x8x8xf32>
    %51 = tpu.matmul %50, %38, %cst_16 {dimension_numbers = #tpu.dot_dimension_numbers<[2], [1], [1], [2], [0, 0, 0, 1, 1, 2], [0], [0]>} : vector<4x8x8xbf16>, vector<4x8x8xbf16>, vector<4x8x8xf32> -> vector<4x8x8xf32>
    "tpu.trace_stop"() : () -> ()
    %52 = tpu.transpose %51, [1, 0, 2] : vector<4x8x8xf32> -> vector<8x4x8xf32>
    %53 = vector.shape_cast %52 : vector<8x4x8xf32> to vector<8x32xf32>
    %54 = arith.truncf %53 : vector<8x32xf32> to vector<8x32xbf16>
    %c0_17 = arith.constant 0 : index
    %c0_18 = arith.constant 0 : index
    %55 = vector.load %arg5[%c0_17, %c0_18] : memref<32x32xbf16, #tpu.memory_space<vmem>>, vector<32x32xbf16>
    %cst_19 = arith.constant dense<0.000000e+00> : vector<8x32xf32>
    %56 = tpu.matmul %54, %55, %cst_19 {dimension_numbers = #tpu.dot_dimension_numbers<[1], [0], [0], [1], [0, 0, 1, 1], [], []>} : vector<8x32xbf16>, vector<32x32xbf16>, vector<8x32xf32> -> vector<8x32xf32>
    %57 = arith.addf %1, %56 : vector<8x32xf32>
    %c0_20 = arith.constant 0 : index
    %c0_21 = arith.constant 0 : index
    %58 = vector.load %arg6[%c0_20, %c0_21] : memref<1x32xf32, #tpu.memory_space<vmem>>, vector<1x32xf32>
    %59 = vector.broadcast %58 : vector<1x32xf32> to vector<8x32xf32>
    %60 = arith.addf %57, %59 : vector<8x32xf32>
    %c0_22 = arith.constant 0 : index
    %c0_23 = arith.constant 0 : index
    %61 = vector.load %arg7[%c0_22, %c0_23] : memref<1x32xf32, #tpu.memory_space<vmem>>, vector<1x32xf32>
    %c0_24 = arith.constant 0 : index
    %c0_25 = arith.constant 0 : index
    %62 = vector.load %arg8[%c0_24, %c0_25] : memref<1x32xf32, #tpu.memory_space<vmem>>, vector<1x32xf32>
    %cst_26 = arith.constant dense<0.000000e+00> : vector<8xf32>
    %63 = vector.multi_reduction <add>, %60, %cst_26 [1] : vector<8x32xf32> to vector<8xf32>
    %64 = vector.shape_cast %63 : vector<8xf32> to vector<8x1xf32>
    %cst_27 = arith.constant 3.200000e+01 : f32
    %65 = vector.broadcast %cst_27 : f32 to vector<8x1xf32>
    %66 = arith.divf %64, %65 : vector<8x1xf32>
    %67 = vector.broadcast %66 : vector<8x1xf32> to vector<8x32xf32>
    %68 = arith.subf %60, %67 : vector<8x32xf32>
    %69 = arith.mulf %68, %68 : vector<8x32xf32>
    %cst_28 = arith.constant dense<0.000000e+00> : vector<8xf32>
    %70 = vector.multi_reduction <add>, %69, %cst_28 [1] : vector<8x32xf32> to vector<8xf32>
    %71 = vector.shape_cast %70 : vector<8xf32> to vector<8x1xf32>
    %cst_29 = arith.constant 3.200000e+01 : f32
    %72 = vector.broadcast %cst_29 : f32 to vector<8x1xf32>
    %73 = arith.divf %71, %72 : vector<8x1xf32>
    %74 = vector.broadcast %66 : vector<8x1xf32> to vector<8x32xf32>
    %75 = arith.subf %60, %74 : vector<8x32xf32>
    %cst_30 = arith.constant 9.99999974E-6 : f32
    %76 = vector.broadcast %cst_30 : f32 to vector<8x1xf32>
    %77 = arith.addf %73, %76 : vector<8x1xf32>
    %78 = math.rsqrt %77 : vector<8x1xf32>
    %79 = vector.broadcast %78 : vector<8x1xf32> to vector<8x32xf32>
    %80 = arith.mulf %75, %79 : vector<8x32xf32>
    %81 = vector.broadcast %61 : vector<1x32xf32> to vector<8x32xf32>
    %82 = arith.mulf %80, %81 : vector<8x32xf32>
    %83 = vector.broadcast %62 : vector<1x32xf32> to vector<8x32xf32>
    %84 = arith.addf %82, %83 : vector<8x32xf32>
    %85 = arith.truncf %84 : vector<8x32xf32> to vector<8x32xbf16>
    %c0_31 = arith.constant 0 : index
    %c0_32 = arith.constant 0 : index
    %86 = vector.load %arg9[%c0_31, %c0_32] : memref<32x128xbf16, #tpu.memory_space<vmem>>, vector<32x128xbf16>
    %cst_33 = arith.constant dense<0.000000e+00> : vector<8x128xf32>
    %87 = tpu.matmul %85, %86, %cst_33 {dimension_numbers = #tpu.dot_dimension_numbers<[1], [0], [0], [1], [0, 0, 1, 1], [], []>} : vector<8x32xbf16>, vector<32x128xbf16>, vector<8x128xf32> -> vector<8x128xf32>
    %c0_34 = arith.constant 0 : index
    %c0_35 = arith.constant 0 : index
    %88 = vector.load %arg10[%c0_34, %c0_35] : memref<1x128xf32, #tpu.memory_space<vmem>>, vector<1x128xf32>
    %89 = vector.broadcast %88 : vector<1x128xf32> to vector<8x128xf32>
    %90 = arith.addf %87, %89 : vector<8x128xf32>
    %cst_36 = arith.constant 5.000000e-01 : f32
    %91 = vector.broadcast %cst_36 : f32 to vector<8x128xf32>
    %92 = arith.mulf %91, %90 : vector<8x128xf32>
    %cst_37 = arith.constant 4.471500e-02 : f32
    %93 = vector.broadcast %cst_37 : f32 to vector<8x128xf32>
    %94 = arith.mulf %93, %90 : vector<8x128xf32>
    %95 = arith.mulf %94, %90 : vector<8x128xf32>
    %96 = arith.mulf %95, %90 : vector<8x128xf32>
    %97 = arith.addf %90, %96 : vector<8x128xf32>
    %cst_38 = arith.constant 0.797884583 : f32
    %98 = vector.broadcast %cst_38 : f32 to vector<8x128xf32>
    %99 = arith.mulf %98, %97 : vector<8x128xf32>
    %100 = math.tanh %99 : vector<8x128xf32>
    %cst_39 = arith.constant 1.000000e+00 : f32
    %101 = vector.broadcast %cst_39 : f32 to vector<8x128xf32>
    %102 = arith.addf %101, %100 : vector<8x128xf32>
    %103 = arith.mulf %92, %102 : vector<8x128xf32>
    %104 = arith.truncf %103 : vector<8x128xf32> to vector<8x128xbf16>
    %c0_40 = arith.constant 0 : index
    %c0_41 = arith.constant 0 : index
    %105 = vector.load %arg11[%c0_40, %c0_41] : memref<128x32xbf16, #tpu.memory_space<vmem>>, vector<128x32xbf16>
    %cst_42 = arith.constant dense<0.000000e+00> : vector<8x32xf32>
    %106 = tpu.matmul %104, %105, %cst_42 {dimension_numbers = #tpu.dot_dimension_numbers<[1], [0], [0], [1], [0, 0, 1, 1], [], []>} : vector<8x128xbf16>, vector<128x32xbf16>, vector<8x32xf32> -> vector<8x32xf32>
    %c0_43 = arith.constant 0 : index
    %c0_44 = arith.constant 0 : index
    %107 = vector.load %arg12[%c0_43, %c0_44] : memref<1x32xf32, #tpu.memory_space<vmem>>, vector<1x32xf32>
    %108 = vector.broadcast %107 : vector<1x32xf32> to vector<8x32xf32>
    %109 = arith.addf %106, %108 : vector<8x32xf32>
    %110 = arith.addf %60, %109 : vector<8x32xf32>
    %c0_45 = arith.constant 0 : index
    %c0_46 = arith.constant 0 : index
    %c0_47 = arith.constant 0 : index
    %111 = vector.load %arg13[%c0_45, %c0_46, %c0_47] : memref<1x8x32xf32, #tpu.memory_space<vmem>>, vector<1x8x32xf32>
    %112 = vector.shape_cast %111 : vector<1x8x32xf32> to vector<8x32xf32>
    %113 = vector.shape_cast %110 : vector<8x32xf32> to vector<1x8x32xf32>
    tpu.vector_store %arg13[%c0_45, %c0_46, %c0_47], %113 {strides = array<i32>} : memref<1x8x32xf32, #tpu.memory_space<vmem>>, vector<1x8x32xf32>,
    return
  }
  func.func @transform_0(%arg0: i32) -> (i32, i32, i32) {
    %c0_i32 = arith.constant 0 : i32
    %c0_i32_0 = arith.constant 0 : i32
    %c0_i32_1 = arith.constant 0 : i32
    return %arg0, %c0_i32, %c0_i32_0 : i32, i32, i32
  }
  func.func @transform_1(%arg0: i32) -> (i32, i32) {
    %c0_i32 = arith.constant 0 : i32
    %c0_i32_0 = arith.constant 0 : i32
    %c0_i32_1 = arith.constant 0 : i32
    return %c0_i32, %c0_i32_0 : i32, i32
  }
  func.func @transform_2(%arg0: i32) -> (i32, i32) {
    %c0_i32 = arith.constant 0 : i32
    %c0_i32_0 = arith.constant 0 : i32
    %c0_i32_1 = arith.constant 0 : i32
    return %c0_i32, %c0_i32_0 : i32, i32
  }
  func.func @transform_3(%arg0: i32) -> (i32, i32) {
    %c0_i32 = arith.constant 0 : i32
    %c0_i32_0 = arith.constant 0 : i32
    %c0_i32_1 = arith.constant 0 : i32
    return %c0_i32, %c0_i32_0 : i32, i32
  }
  func.func @transform_4(%arg0: i32) -> (i32, i32) {
    %c0_i32 = arith.constant 0 : i32
    %c0_i32_0 = arith.constant 0 : i32
    %c0_i32_1 = arith.constant 0 : i32
    return %c0_i32, %c0_i32_0 : i32, i32
  }
  func.func @transform_5(%arg0: i32) -> (i32, i32) {
    %c0_i32 = arith.constant 0 : i32
    %c0_i32_0 = arith.constant 0 : i32
    %c0_i32_1 = arith.constant 0 : i32
    return %c0_i32, %c0_i32_0 : i32, i32
  }
  func.func @transform_6(%arg0: i32) -> (i32, i32) {
    %c0_i32 = arith.constant 0 : i32
    %c0_i32_0 = arith.constant 0 : i32
    %c0_i32_1 = arith.constant 0 : i32
    return %c0_i32, %c0_i32_0 : i32, i32
  }
  func.func @transform_7(%arg0: i32) -> (i32, i32) {
    %c0_i32 = arith.constant 0 : i32
    %c0_i32_0 = arith.constant 0 : i32
    %c0_i32_1 = arith.constant 0 : i32
    return %c0_i32, %c0_i32_0 : i32, i32
  }
  func.func @transform_8(%arg0: i32) -> (i32, i32) {
    %c0_i32 = arith.constant 0 : i32
    %c0_i32_0 = arith.constant 0 : i32
    %c0_i32_1 = arith.constant 0 : i32
    return %c0_i32, %c0_i32_0 : i32, i32
  }
  func.func @transform_9(%arg0: i32) -> (i32, i32) {
    %c0_i32 = arith.constant 0 : i32
    %c0_i32_0 = arith.constant 0 : i32
    %c0_i32_1 = arith.constant 0 : i32
    return %c0_i32, %c0_i32_0 : i32, i32
  }
  func.func @transform_10(%arg0: i32) -> (i32, i32) {
    %c0_i32 = arith.constant 0 : i32
    %c0_i32_0 = arith.constant 0 : i32
    %c0_i32_1 = arith.constant 0 : i32
    return %c0_i32, %c0_i32_0 : i32, i32
  }
  func.func @transform_11(%arg0: i32) -> (i32, i32) {
    %c0_i32 = arith.constant 0 : i32
    %c0_i32_0 = arith.constant 0 : i32
    %c0_i32_1 = arith.constant 0 : i32
    return %c0_i32, %c0_i32_0 : i32, i32
  }
  func.func @transform_12(%arg0: i32) -> (i32, i32, i32) {
    %c0_i32 = arith.constant 0 : i32
    %c0_i32_0 = arith.constant 0 : i32
    %c0_i32_1 = arith.constant 0 : i32
    return %arg0, %c0_i32, %c0_i32_0 : i32, i32, i32
  }
}

</mosaic_0001>

<llo_original>
// kernel: tpu_custom_call.1
$region0: #{tpu_custom_call.1}
  #allocation0 [shape = 'u32[]', space=smem, size = 0x4, offset = 0x4, fixed_abs, tag = 'smem constant byte address 0x4 - core index']
  #allocation1 [shape = 'u32[144,128]{1,0:T(1,128)}', space=vmem, size = 0x12000, scoped, tag = 'internal scratch']
  %s0 = inlined_call_operand.vmem [shape: f32[2,8,32], index: 0, kind: input, shape index: {}]
  %s1 = inlined_call_operand.vmem [shape: f32[1,32], index: 1, kind: input, shape index: {}]
  %s2 = inlined_call_operand.vmem [shape: f32[1,32], index: 2, kind: input, shape index: {}]
  %s3 = inlined_call_operand.vmem [shape: bf16[32,96], index: 3, kind: input, shape index: {}]
  %s4 = inlined_call_operand.vmem [shape: bf16[32,32], index: 4, kind: input, shape index: {}]
  %s5 = inlined_call_operand.vmem [shape: f32[1,32], index: 5, kind: input, shape index: {}]
  %s6 = inlined_call_operand.vmem [shape: f32[1,32], index: 6, kind: input, shape index: {}]
  %s7 = inlined_call_operand.vmem [shape: f32[1,32], index: 7, kind: input, shape index: {}]
  %s8 = inlined_call_operand.vmem [shape: bf16[32,128], index: 8, kind: input, shape index: {}]
  %s9 = inlined_call_operand.vmem [shape: f32[1,128], index: 9, kind: input, shape index: {}]
  %s10 = inlined_call_operand.vmem [shape: bf16[128,32], index: 10, kind: input, shape index: {}]
  %s11 = inlined_call_operand.vmem [shape: f32[1,32], index: 11, kind: input, shape index: {}]
  %s12 = inlined_call_operand.hbm [shape: f32[2,8,32], index: 12, kind: output, shape index: {}]
  %s13 = sld [smem:[#allocation0]]
  $region81: #{tpu_custom_call.1} parent=0
    _
  %s15 = ssub.s32 1, %s13
  %s16 = scalar_select 0, %s15, %s13
  $region1: #{tpu_custom_call.1} parent=0
    #allocation2 [shape = 'u8[8192]{0}', space=vmem, size = 0x2000, scoped, tag = 'output window, operand 0']
    #allocation3 [shape = 's32[2]{0}', space=sflag, size = 0x8, scoped, tag = 'scoped memory for tpu_custom_call.1']
    %17 = vsyncpa [#allocation3], 0
    %s18 = scalar_lea.sflag [#allocation3], 1
    %19 = vsyncpa %s18, 0
    loop: start=0, step=1, limit=4
    $region2: #{tpu_custom_call.1} parent=1 // loop_pre_header
      _
    $region3: #{tpu_custom_call.1} parent=1 // loop_header
      %s21 = sphi 0, %s25
      %p22 = scmp.ge.s32.totalorder %s21, 4
      %s31 = sphi 0, %s33
      %s34 = sphi 0, %s31
      %s35 = sphi 0, %s34
      %s51 = sphi 0, %s35
      %s55 = sphi 0, %s55
      %s57 = sphi 0, %s55
      %s58 = sphi 0, %s57
      %s72 = sphi 0, %s58
      %s76 = sphi 0, %s76
      %s78 = sphi 0, %s76
      %s79 = sphi 0, %s78
      %s93 = sphi 0, %s79
      %s97 = sphi 0, %s97
      %s99 = sphi 0, %s97
      %s100 = sphi 0, %s99
      %s114 = sphi 0, %s100
      %s118 = sphi 0, %s118
      %s120 = sphi 0, %s118
      %s121 = sphi 0, %s120
      %s135 = sphi 0, %s121
      %s139 = sphi 0, %s139
      %s141 = sphi 0, %s139
      %s142 = sphi 0, %s141
      %s156 = sphi 0, %s142
      %s160 = sphi 0, %s160
      %s162 = sphi 0, %s160
      %s163 = sphi 0, %s162
      %s177 = sphi 0, %s163
      %s181 = sphi 0, %s181
      %s183 = sphi 0, %s181
      %s184 = sphi 0, %s183
      %s198 = sphi 0, %s184
      %s202 = sphi 0, %s202
      %s204 = sphi 0, %s202
      %s205 = sphi 0, %s204
      %s219 = sphi 0, %s205
      %s223 = sphi 0, %s223
      %s225 = sphi 0, %s223
      %s226 = sphi 0, %s225
      %s240 = sphi 0, %s226
      %s244 = sphi 0, %s244
      %s246 = sphi 0, %s244
      %s247 = sphi 0, %s246
      %s261 = sphi 0, %s247
      %s265 = sphi 0, %s265
      %s267 = sphi 0, %s265
      %s268 = sphi 0, %s267
      %s282 = sphi 0, %s268
      %s288 = sphi 0, %s290
      %s291 = sphi 0, %s288
      %s292 = sphi 0, %s291
      %s308 = sphi 0, %s292
    $region4: #{tpu_custom_call.1} parent=1 // loop_header_branch
      %24 = sbr.rel (%p22) target = $region8
    $region5: #{tpu_custom_call.1} parent=1 // loop_body
      %s26 = ssub.s32 %s21, 1
      %s27 = ssub.s32 %s21, 2
      %s28 = sadd.s32 %s21, 1
      %s29 = ssub.s32 %s21, %s28
      %p30 = scmp.eq.s32.totalorder %s29, 0
      %s32 = sadd.s32 %s31, 1
      %s33 = scalar_select %p30, %s31, %s32
      %p36 = pneg %p30
      %p37 = scmp.eq.s32.totalorder %s21, 1
      %p38 = por %p36, %p37
      %p39 = scmp.ne.s32.totalorder %s31, %s34
      %p40 = scmp.eq.s32.totalorder %s21, 0
      %p41 = por %p39, %p40
      %p42 = scmp.ne.s32.totalorder %s31, %s34
      %p43 = scmp.eq.s32.totalorder %s26, 1
      %p44 = por %p42, %p43
      %p45 = scmp.ne.s32.totalorder %s34, %s35
      %p46 = scmp.eq.s32.totalorder %s26, 0
      %p47 = por %p45, %p46
      %p48 = scmp.ne.s32.totalorder %s34, %s35
      %p49 = scmp.eq.s32.totalorder %s27, 1
      %p50 = por %p48, %p49
      %p52 = scmp.ne.s32.totalorder %s35, %s51
      %p53 = scmp.eq.s32.totalorder %s27, 0
      %p54 = por %p52, %p53
      %s56 = sadd.s32 %s55, 1
      %p59 = scmp.eq.s32.totalorder %s21, 1
      %p60 = scmp.ne.s32.totalorder %s55, %s57
      %p61 = scmp.eq.s32.totalorder %s21, 0
      %p62 = por %p60, %p61
      %p63 = scmp.ne.s32.totalorder %s55, %s57
      %p64 = scmp.eq.s32.totalorder %s26, 1
      %p65 = por %p63, %p64
      %p66 = scmp.ne.s32.totalorder %s57, %s58
      %p67 = scmp.eq.s32.totalorder %s26, 0
      %p68 = por %p66, %p67
      %p69 = scmp.ne.s32.totalorder %s57, %s58
      %p70 = scmp.eq.s32.totalorder %s27, 1
      %p71 = por %p69, %p70
      %p73 = scmp.ne.s32.totalorder %s58, %s72
      %p74 = scmp.eq.s32.totalorder %s27, 0
      %p75 = por %p73, %p74
      %s77 = sadd.s32 %s76, 1
      %p80 = scmp.eq.s32.totalorder %s21, 1
      %p81 = scmp.ne.s32.totalorder %s76, %s78
      %p82 = scmp.eq.s32.totalorder %s21, 0
      %p83 = por %p81, %p82
      %p84 = scmp.ne.s32.totalorder %s76, %s78
      %p85 = scmp.eq.s32.totalorder %s26, 1
      %p86 = por %p84, %p85
      %p87 = scmp.ne.s32.totalorder %s78, %s79
      %p88 = scmp.eq.s32.totalorder %s26, 0
      %p89 = por %p87, %p88
      %p90 = scmp.ne.s32.totalorder %s78, %s79
      %p91 = scmp.eq.s32.totalorder %s27, 1
      %p92 = por %p90, %p91
      %p94 = scmp.ne.s32.totalorder %s79, %s93
      %p95 = scmp.eq.s32.totalorder %s27, 0
      %p96 = por %p94, %p95
      %s98 = sadd.s32 %s97, 1
      %p101 = scmp.eq.s32.totalorder %s21, 1
      %p102 = scmp.ne.s32.totalorder %s97, %s99
      %p103 = scmp.eq.s32.totalorder %s21, 0
      %p104 = por %p102, %p103
      %p105 = scmp.ne.s32.totalorder %s97, %s99
      %p106 = scmp.eq.s32.totalorder %s26, 1
      %p107 = por %p105, %p106
      %p108 = scmp.ne.s32.totalorder %s99, %s100
      %p109 = scmp.eq.s32.totalorder %s26, 0
      %p110 = por %p108, %p109
      %p111 = scmp.ne.s32.totalorder %s99, %s100
      %p112 = scmp.eq.s32.totalorder %s27, 1
      %p113 = por %p111, %p112
      %p115 = scmp.ne.s32.totalorder %s100, %s114
      %p116 = scmp.eq.s32.totalorder %s27, 0
      %p117 = por %p115, %p116
      %s119 = sadd.s32 %s118, 1
      %p122 = scmp.eq.s32.totalorder %s21, 1
      %p123 = scmp.ne.s32.totalorder %s118, %s120
      %p124 = scmp.eq.s32.totalorder %s21, 0
      %p125 = por %p123, %p124
      %p126 = scmp.ne.s32.totalorder %s118, %s120
      %p127 = scmp.eq.s32.totalorder %s26, 1
      %p128 = por %p126, %p127
      %p129 = scmp.ne.s32.totalorder %s120, %s121
      %p130 = scmp.eq.s32.totalorder %s26, 0
      %p131 = por %p129, %p130
      %p132 = scmp.ne.s32.totalorder %s120, %s121
      %p133 = scmp.eq.s32.totalorder %s27, 1
      %p134 = por %p132, %p133
      %p136 = scmp.ne.s32.totalorder %s121, %s135
      %p137 = scmp.eq.s32.totalorder %s27, 0
      %p138 = por %p136, %p137
      %s140 = sadd.s32 %s139, 1
      %p143 = scmp.eq.s32.totalorder %s21, 1
      %p144 = scmp.ne.s32.totalorder %s139, %s141
      %p145 = scmp.eq.s32.totalorder %s21, 0
      %p146 = por %p144, %p145
      %p147 = scmp.ne.s32.totalorder %s139, %s141
      %p148 = scmp.eq.s32.totalorder %s26, 1
      %p149 = por %p147, %p148
      %p150 = scmp.ne.s32.totalorder %s141, %s142
      %p151 = scmp.eq.s32.totalorder %s26, 0
      %p152 = por %p150, %p151
      %p153 = scmp.ne.s32.totalorder %s141, %s142
      %p154 = scmp.eq.s32.totalorder %s27, 1
      %p155 = por %p153, %p154
      %p157 = scmp.ne.s32.totalorder %s142, %s156
      %p158 = scmp.eq.s32.totalorder %s27, 0
      %p159 = por %p157, %p158
      %s161 = sadd.s32 %s160, 1
      %p164 = scmp.eq.s32.totalorder %s21, 1
      %p165 = scmp.ne.s32.totalorder %s160, %s162
      %p166 = scmp.eq.s32.totalorder %s21, 0
      %p167 = por %p165, %p166
      %p168 = scmp.ne.s32.totalorder %s160, %s162
      %p169 = scmp.eq.s32.totalorder %s26, 1
      %p170 = por %p168, %p169
      %p171 = scmp.ne.s32.totalorder %s162, %s163
      %p172 = scmp.eq.s32.totalorder %s26, 0
      %p173 = por %p171, %p172
      %p174 = scmp.ne.s32.totalorder %s162, %s163
      %p175 = scmp.eq.s32.totalorder %s27, 1
      %p176 = por %p174, %p175
      %p178 = scmp.ne.s32.totalorder %s163, %s177
      %p179 = scmp.eq.s32.totalorder %s27, 0
      %p180 = por %p178, %p179
      %s182 = sadd.s32 %s181, 1
      %p185 = scmp.eq.s32.totalorder %s21, 1
      %p186 = scmp.ne.s32.totalorder %s181, %s183
      %p187 = scmp.eq.s32.totalorder %s21, 0
      %p188 = por %p186, %p187
      %p189 = scmp.ne.s32.totalorder %s181, %s183
      %p190 = scmp.eq.s32.totalorder %s26, 1
      %p191 = por %p189, %p190
      %p192 = scmp.ne.s32.totalorder %s183, %s184
      %p193 = scmp.eq.s32.totalorder %s26, 0
      %p194 = por %p192, %p193
      %p195 = scmp.ne.s32.totalorder %s183, %s184
      %p196 = scmp.eq.s32.totalorder %s27, 1
      %p197 = por %p195, %p196
      %p199 = scmp.ne.s32.totalorder %s184, %s198
      %p200 = scmp.eq.s32.totalorder %s27, 0
      %p201 = por %p199, %p200
      %s203 = sadd.s32 %s202, 1
      %p206 = scmp.eq.s32.totalorder %s21, 1
      %p207 = scmp.ne.s32.totalorder %s202, %s204
      %p208 = scmp.eq.s32.totalorder %s21, 0
      %p209 = por %p207, %p208
      %p210 = scmp.ne.s32.totalorder %s202, %s204
      %p211 = scmp.eq.s32.totalorder %s26, 1
      %p212 = por %p210, %p211
      %p213 = scmp.ne.s32.totalorder %s204, %s205
      %p214 = scmp.eq.s32.totalorder %s26, 0
      %p215 = por %p213, %p214
      %p216 = scmp.ne.s32.totalorder %s204, %s205
      %p217 = scmp.eq.s32.totalorder %s27, 1
      %p218 = por %p216, %p217
      %p220 = scmp.ne.s32.totalorder %s205, %s219
      %p221 = scmp.eq.s32.totalorder %s27, 0
      %p222 = por %p220, %p221
      %s224 = sadd.s32 %s223, 1
      %p227 = scmp.eq.s32.totalorder %s21, 1
      %p228 = scmp.ne.s32.totalorder %s223, %s225
      %p229 = scmp.eq.s32.totalorder %s21, 0
      %p230 = por %p228, %p229
      %p231 = scmp.ne.s32.totalorder %s223, %s225
      %p232 = scmp.eq.s32.totalorder %s26, 1
      %p233 = por %p231, %p232
      %p234 = scmp.ne.s32.totalorder %s225, %s226
      %p235 = scmp.eq.s32.totalorder %s26, 0
      %p236 = por %p234, %p235
      %p237 = scmp.ne.s32.totalorder %s225, %s226
      %p238 = scmp.eq.s32.totalorder %s27, 1
      %p239 = por %p237, %p238
      %p241 = scmp.ne.s32.totalorder %s226, %s240
      %p242 = scmp.eq.s32.totalorder %s27, 0
      %p243 = por %p241, %p242
      %s245 = sadd.s32 %s244, 1
      %p248 = scmp.eq.s32.totalorder %s21, 1
      %p249 = scmp.ne.s32.totalorder %s244, %s246
      %p250 = scmp.eq.s32.totalorder %s21, 0
      %p251 = por %p249, %p250
      %p252 = scmp.ne.s32.totalorder %s244, %s246
      %p253 = scmp.eq.s32.totalorder %s26, 1
      %p254 = por %p252, %p253
      %p255 = scmp.ne.s32.totalorder %s246, %s247
      %p256 = scmp.eq.s32.totalorder %s26, 0
      %p257 = por %p255, %p256
      %p258 = scmp.ne.s32.totalorder %s246, %s247
      %p259 = scmp.eq.s32.totalorder %s27, 1
      %p260 = por %p258, %p259
      %p262 = scmp.ne.s32.totalorder %s247, %s261
      %p263 = scmp.eq.s32.totalorder %s27, 0
      %p264 = por %p262, %p263
      %s266 = sadd.s32 %s265, 1
      %p269 = scmp.eq.s32.totalorder %s21, 1
      %p270 = scmp.ne.s32.totalorder %s265, %s267
      %p271 = scmp.eq.s32.totalorder %s21, 0
      %p272 = por %p270, %p271
      %p273 = scmp.ne.s32.totalorder %s265, %s267
      %p274 = scmp.eq.s32.totalorder %s26, 1
      %p275 = por %p273, %p274
      %p276 = scmp.ne.s32.totalorder %s267, %s268
      %p277 = scmp.eq.s32.totalorder %s26, 0
      %p278 = por %p276, %p277
      %p279 = scmp.ne.s32.totalorder %s267, %s268
      %p280 = scmp.eq.s32.totalorder %s27, 1
      %p281 = por %p279, %p280
      %p283 = scmp.ne.s32.totalorder %s268, %s282
      %p284 = scmp.eq.s32.totalorder %s27, 0
      %p285 = por %p283, %p284
      %s286 = ssub.s32 %s21, %s28
      %p287 = scmp.eq.s32.totalorder %s286, 0
      %s289 = sadd.s32 %s288, 1
      %s290 = scalar_select %p287, %s288, %s289
      %p293 = pneg %p287
      %p294 = scmp.eq.s32.totalorder %s21, 1
      %p295 = por %p293, %p294
      %p296 = scmp.ne.s32.totalorder %s288, %s291
      %p297 = scmp.eq.s32.totalorder %s21, 0
      %p298 = por %p296, %p297
      %p299 = scmp.ne.s32.totalorder %s288, %s291
      %p300 = scmp.eq.s32.totalorder %s26, 1
      %p301 = por %p299, %p300
      %p302 = scmp.ne.s32.totalorder %s291, %s292
      %p303 = scmp.eq.s32.totalorder %s26, 0
      %p304 = por %p302, %p303
      %p305 = scmp.ne.s32.totalorder %s291, %s292
      %p306 = scmp.eq.s32.totalorder %s27, 1
      %p307 = por %p305, %p306
      %p309 = scmp.ne.s32.totalorder %s292, %s308
      %p310 = scmp.eq.s32.totalorder %s27, 0
      %p311 = por %p309, %p310
      %p312 = scmp.le.s32.totalorder 1, %s21
      %p313 = scmp.lt.s32.totalorder %s21, 3
      %p314 = pnand %p312, %p313
      %p315 = pneg %p314
      // Predicated region
      $region9: #{tpu_custom_call.1} parent=5 // pred_check
        _
      $region10: #{tpu_custom_call.1} parent=5 // pred_check_branch
        %317 = sbr.rel (%p314) target = $region12
      $region11: #{tpu_custom_call.1} parent=5 // pred_region
        %s318 = ssub.s32 %s21, 1
        // Predicated region
        $region13: #{tpu_custom_call.1} parent=11 // pred_check
          %p319 = pneg %p68
        $region14: #{tpu_custom_call.1} parent=11 // pred_check_branch
          %321 = sbr.rel (%p319) target = $region16
        $region15: #{tpu_custom_call.1} parent=11 // pred_region
          _
        $region16: #{tpu_custom_call.1} parent=11 // pred_fallthru
          _
        // Predicated region
        $region17: #{tpu_custom_call.1} parent=11 // pred_check
          %p322 = pneg %p89
        $region18: #{tpu_custom_call.1} parent=11 // pred_check_branch
          %324 = sbr.rel (%p322) target = $region20
        $region19: #{tpu_custom_call.1} parent=11 // pred_region
          _
        $region20: #{tpu_custom_call.1} parent=11 // pred_fallthru
          _
        // Predicated region
        $region21: #{tpu_custom_call.1} parent=11 // pred_check
          %p325 = pneg %p110
        $region22: #{tpu_custom_call.1} parent=11 // pred_check_branch
          %327 = sbr.rel (%p325) target = $region24
        $region23: #{tpu_custom_call.1} parent=11 // pred_region
          _
        $region24: #{tpu_custom_call.1} parent=11 // pred_fallthru
          _
        // Predicated region
        $region25: #{tpu_custom_call.1} parent=11 // pred_check
          %p328 = pneg %p131
        $region26: #{tpu_custom_call.1} parent=11 // pred_check_branch
          %330 = sbr.rel (%p328) target = $region28
        $region27: #{tpu_custom_call.1} parent=11 // pred_region
          _
        $region28: #{tpu_custom_call.1} parent=11 // pred_fallthru
          _
        // Predicated region
        $region29: #{tpu_custom_call.1} parent=11 // pred_check
          %p331 = pneg %p152
        $region30: #{tpu_custom_call.1} parent=11 // pred_check_branch
          %333 = sbr.rel (%p331) target = $region32
        $region31: #{tpu_custom_call.1} parent=11 // pred_region
          _
        $region32: #{tpu_custom_call.1} parent=11 // pred_fallthru
          _
        // Predicated region
        $region33: #{tpu_custom_call.1} parent=11 // pred_check
          %p334 = pneg %p173
        $region34: #{tpu_custom_call.1} parent=11 // pred_check_branch
          %336 = sbr.rel (%p334) target = $region36
        $region35: #{tpu_custom_call.1} parent=11 // pred_region
          _
        $region36: #{tpu_custom_call.1} parent=11 // pred_fallthru
          _
        // Predicated region
        $region37: #{tpu_custom_call.1} parent=11 // pred_check
          %p337 = pneg %p194
        $region38: #{tpu_custom_call.1} parent=11 // pred_check_branch
          %339 = sbr.rel (%p337) target = $region40
        $region39: #{tpu_custom_call.1} parent=11 // pred_region
          _
        $region40: #{tpu_custom_call.1} parent=11 // pred_fallthru
          _
        // Predicated region
        $region41: #{tpu_custom_call.1} parent=11 // pred_check
          %p340 = pneg %p215
        $region42: #{tpu_custom_call.1} parent=11 // pred_check_branch
          %342 = sbr.rel (%p340) target = $region44
        $region43: #{tpu_custom_call.1} parent=11 // pred_region
          _
        $region44: #{tpu_custom_call.1} parent=11 // pred_fallthru
          _
        // Predicated region
        $region45: #{tpu_custom_call.1} parent=11 // pred_check
          %p343 = pneg %p236
        $region46: #{tpu_custom_call.1} parent=11 // pred_check_branch
          %345 = sbr.rel (%p343) target = $region48
        $region47: #{tpu_custom_call.1} parent=11 // pred_region
          _
        $region48: #{tpu_custom_call.1} parent=11 // pred_fallthru
          _
        // Predicated region
        $region49: #{tpu_custom_call.1} parent=11 // pred_check
          %p346 = pneg %p257
        $region50: #{tpu_custom_call.1} parent=11 // pred_check_branch
          %348 = sbr.rel (%p346) target = $region52
        $region51: #{tpu_custom_call.1} parent=11 // pred_region
          _
        $region52: #{tpu_custom_call.1} parent=11 // pred_fallthru
          _
        // Predicated region
        $region53: #{tpu_custom_call.1} parent=11 // pred_check
          %p349 = pneg %p278
        $region54: #{tpu_custom_call.1} parent=11 // pred_check_branch
          %351 = sbr.rel (%p349) target = $region56
        $region55: #{tpu_custom_call.1} parent=11 // pred_region
          _
        $region56: #{tpu_custom_call.1} parent=11 // pred_fallthru
          _
      $region12: #{tpu_custom_call.1} parent=5 // pred_fallthru
        _
      %p352 = scmp.lt.s32.totalorder %s21, 2
      // Predicated region
      $region57: #{tpu_custom_call.1} parent=5 // pred_check
        %p353 = pneg %p352
      $region58: #{tpu_custom_call.1} parent=5 // pred_check_branch
        %355 = sbr.rel (%p353) target = $region60
      $region59: #{tpu_custom_call.1} parent=5 // pred_region
        // Predicated region
        $region61: #{tpu_custom_call.1} parent=59 // pred_check
          %p356 = pneg %p41
        $region62: #{tpu_custom_call.1} parent=59 // pred_check_branch
          %358 = sbr.rel (%p356) target = $region64
        $region63: #{tpu_custom_call.1} parent=59 // pred_region
          %p359 = scmp.lt.s32.totalorder %s21, 1
          %s360 = scalar_select %p359, %s21, 1
          %s361 = smul.addr %s360, 8
          %s362 = scalar_lea.vmem %s0, %s361
        $region64: #{tpu_custom_call.1} parent=59 // pred_fallthru
          _
      $region60: #{tpu_custom_call.1} parent=5 // pred_fallthru
        _
      %p363 = scmp.le.s32.totalorder 1, %s21
      %p364 = scmp.lt.s32.totalorder %s21, 3
      %p365 = pnand %p363, %p364
      %p366 = pneg %p365
      // Predicated region
      $region65: #{tpu_custom_call.1} parent=5 // pred_check
        _
      $region66: #{tpu_custom_call.1} parent=5 // pred_check_branch
        %368 = sbr.rel (%p365) target = $region68
      $region67: #{tpu_custom_call.1} parent=5 // pred_region
        %s369 = ssub.s32 %s21, 1
        %p370 = scmp.lt.s32.totalorder %s26, 1
        %s371 = scalar_select %p370, %s26, 1
        %s372 = smul.addr %s371, 8
        %s373 = scalar_lea.vmem %s0, %s372
        %p374 = pneg %p47
        %p375 = pneg %p44
        %p376 = pneg %p68
        %p377 = pneg %p65
        %p378 = pneg %p89
        %p379 = pneg %p86
        %p380 = pneg %p110
        %p381 = pneg %p107
        %p382 = pneg %p131
        %p383 = pneg %p128
        %p384 = pneg %p152
        %p385 = pneg %p149
        %p386 = pneg %p173
        %p387 = pneg %p170
        %p388 = pneg %p194
        %p389 = pneg %p191
        %p390 = pneg %p215
        %p391 = pneg %p212
        %p392 = pneg %p236
        %p393 = pneg %p233
        %p394 = pneg %p257
        %p395 = pneg %p254
        %p396 = pneg %p278
        %p397 = pneg %p275
        %p398 = pneg %p304
        %p399 = pneg %p301
        %s400 = sand.u32 %s291, 1
        %s401 = scalar_lea.sflag [#allocation3], %s400
        %s402 = sand.u32 %s291, 1
        %s403 = smul.addr %s402, 8
        %s404 = scalar_lea.vmem [#allocation2], %s403
        %p405 = scmp.lt.s32.totalorder %s26, 1
        %s406 = scalar_select %p405, %s26, 1
        %s407 = smul.addr %s406, 8
        %s408 = scalar_lea.vmem %s0, %s407
        %v410 = vld [vmem:[%s408] sm:$0xff]
        %v411 = vld [vmem:[%s1] sm:$0x1]
        %v412 = vld [vmem:[%s2] sm:$0x1]
        %vm413 = vcmask 261120
        %v414 = vsel %vm413, %v410, 0.0
        %415 = vadd.xlane.f32.xlu0 %v414
        %v416 = vpop.xlane.xlu0 %415
        %v417 = vrcp.pop 32.0
        %v418 = vmul.f32 %v416, %v417
        %v419 = vsub.f32 %v410, %v418
        %v420 = vmul.f32 %v419, %v419
        %v421 = vsel %vm413, %v420, 0.0
        %422 = vadd.xlane.f32.xlu0 %v421
        %v423 = vpop.xlane.xlu0 %422
        %v424 = vmul.f32 %v423, %v417
        %v425 = vadd.f32 %v424, 1e-05
        %v426 = vrsqrt.pop %v425
        %v427 = vmul.f32 %v419, %v426
        %v429 = vlaneseq
        %v430 = vshrl.u32 %v429, 7
        %v431 = vsub.s32 0, %v430
        %v432 = vrot.slane %v411, %v431
        %v434 = vmul.f32 %v427, %v432
        %v436 = vlaneseq
        %v437 = vshrl.u32 %v436, 7
        %v438 = vsub.s32 0, %v437
        %v439 = vrot.slane %v412, %v438
        %v441 = vadd.f32 %v434, %v439
        %v442 = vpack.c.bf16 %v441, %v441
        %v443 = vld [vmem:[%s3] sm:$0xf]
        %v444 = vld [vmem:[%s3 + $0x4] sm:$0xf]
        %v445 = vld [vmem:[%s3 + $0x8] sm:$0xf]
        %v446 = vld [vmem:[%s3 + $0xc] sm:$0xf]
        %v451 = vunpack.c.l.b16 %v443
        %v452 = vunpack.c.l.b16 %v444
        %v453 = vunpack.c.l.b16 %v445
        %v454 = vunpack.c.l.b16 %v446
        %v455 = vpack.c.b16 %v452, %v451
        %v456 = vpack.c.b16 %v454, %v453
        %v460 = vsel %vm413, %v442, 0
        %462 = vmatprep.subr.bf16.mxu0 0
        %463 = vmatpush1.bf16.msra.mxu0 0
        %464 = vmatprep.subr.bf16.mxu0 0
        %465 = vmatpush1.bf16.msra.mxu0 0
        %466 = vmatprep.subr.bf16.mxu0 0
        %467 = vmatpush1.bf16.msra.mxu0 0
        %468 = vmatprep.subr.bf16.mxu0 0
        %469 = vmatpush1.bf16.msra.mxu0 0
        %470 = vmatprep.subr.bf16.mxu0 0
        %471 = vmatpush1.bf16.msra.mxu0 0
        %472 = vmatprep.subr.bf16.mxu0 0
        %473 = vmatpush1.bf16.msra.mxu0 0
        %474 = vmatprep.subr.bf16.mxu0 0
        %475 = vmatpush1.bf16.msra.mxu0 %v456
        %476 = vmatprep.subr.bf16.mxu0 0
        %477 = vmatpush1.bf16.msra.mxu0 %v455
        %478 = vmatprep.subr.bf16.mxu0 0
        %479 = vmatpush2.bf16.msra.mxu0 0
        %480 = vmatprep.subr.bf16.mxu0 0
        %481 = vmatpush2.bf16.msra.mxu0 0
        %482 = vmatprep.subr.bf16.mxu0 0
        %483 = vmatpush2.bf16.msra.mxu0 0
        %484 = vmatprep.subr.bf16.mxu0 0
        %485 = vmatpush2.bf16.msra.mxu0 0
        %486 = vmatprep.subr.bf16.mxu0 0
        %487 = vmatpush2.bf16.msra.mxu0 0
        %488 = vmatprep.subr.bf16.mxu0 0
        %489 = vmatpush2.bf16.msra.mxu0 0
        %490 = vmatprep.subr.bf16.mxu0 0
        %491 = vmatpush2.bf16.msra.mxu0 0
        %492 = vmatprep.subr.bf16.mxu0 0
        %493 = vmatpush2.bf16.msra.mxu0 0
        %494 = vmatprep.mubr.bf16.mxu0 0
        %495 = vmatmul.mubr.bf16.gmra.mxu0 %v460
        %v496 = vpop.f32.mrf.mxu0
        %v497 = vadd.f32 0.0, %v496
        %v498 = vpop.f32.mrf.mxu0
        %v499 = vpop.f32.mrf.mxu0
        %v500 = vpop.f32.mrf.mxu0
        %501 = vdwg.mxu0
        %v502 = vpack.c.bf16 %v497, %v497
        %504 = vrot.lane.b32.xlu0 %v502, 120
        %v505 = vpop.permute.xlu0 %504
        %506 = vrot.lane.b32.xlu0 %v502, 112
        %v507 = vpop.permute.xlu0 %506
        %508 = vrot.lane.b32.xlu0 %v502, 104
        %v509 = vpop.permute.xlu0 %508
        %v511 = vunpack.c.l.s4 1983009808
        %v512 = vunpack.c.0.s8 %v511
        %v513 = vlaneseq
        %v514 = vshrl.u32 %v513, 7
        %v515 = vsub.s32 %v512, %v514
        %v516 = vrot.slane %v502, %v515
        %v519 = vunpack.c.l.s4 1983009808
        %v520 = vunpack.c.0.s8 %v519
        %v521 = vlaneseq
        %v522 = vshrl.u32 %v521, 7
        %v523 = vsub.s32 %v520, %v522
        %v524 = vrot.slane %v507, %v523
        %v525 = vcombine.low %v516, %v524
        %v526 = vcombine.high %v516, %v524
        %v528 = vunpack.c.l.s4 1934713408
        %v529 = vunpack.c.0.s8 %v528
        %v530 = vlaneseq
        %v531 = vshrl.u32 %v530, 7
        %v532 = vsub.s32 %v529, %v531
        %v533 = vrot.slane %v525, %v532
        %v535 = vunpack.c.l.s4 1934713408
        %v536 = vunpack.c.0.s8 %v535
        %v537 = vlaneseq
        %v538 = vshrl.u32 %v537, 7
        %v539 = vsub.s32 %v536, %v538
        %v540 = vrot.slane %v526, %v539
        %v541 = vcombine.high %v533, 0
        %v542 = vcombine.high %v540, 0
        %v545 = vunpack.c.l.s4 1983009808
        %v546 = vunpack.c.0.s8 %v545
        %v547 = vlaneseq
        %v548 = vshrl.u32 %v547, 7
        %v549 = vsub.s32 %v546, %v548
        %v550 = vrot.slane %v505, %v549
        %v553 = vunpack.c.l.s4 1983009808
        %v554 = vunpack.c.0.s8 %v553
        %v555 = vlaneseq
        %v556 = vshrl.u32 %v555, 7
        %v557 = vsub.s32 %v554, %v556
        %v558 = vrot.slane %v509, %v557
        %v559 = vcombine.low %v550, %v558
        %v560 = vcombine.high %v550, %v558
        %v562 = vunpack.c.l.s4 1934713408
        %v563 = vunpack.c.0.s8 %v562
        %v564 = vlaneseq
        %v565 = vshrl.u32 %v564, 7
        %v566 = vsub.s32 %v563, %v565
        %v567 = vrot.slane %v559, %v566
        %v569 = vunpack.c.l.s4 1934713408
        %v570 = vunpack.c.0.s8 %v569
        %v571 = vlaneseq
        %v572 = vshrl.u32 %v571, 7
        %v573 = vsub.s32 %v570, %v572
        %v574 = vrot.slane %v560, %v573
        %v575 = vcombine.high %v567, 0
        %v576 = vcombine.high %v574, 0
        %v579 = vpack.i.b16 %v567, %v533
        %v581 = vshrl.u32 %v533, 16
        %v582 = vshrl.u32 %v567, 16
        %v583 = vpack.i.b16 %v582, %v581
        %v587 = vpack.i.b16 %v575, %v541
        %v589 = vshrl.u32 %v541, 16
        %v590 = vshrl.u32 %v575, 16
        %v591 = vpack.i.b16 %v590, %v589
        %v595 = vpack.i.b16 %v574, %v540
        %v597 = vshrl.u32 %v540, 16
        %v598 = vshrl.u32 %v574, 16
        %v599 = vpack.i.b16 %v598, %v597
        %v603 = vpack.i.b16 %v576, %v542
        %v605 = vshrl.u32 %v542, 16
        %v606 = vshrl.u32 %v576, 16
        %v607 = vpack.i.b16 %v606, %v605
        %v609 = vcombine.low %v579, %v595
        %v611 = vunpack.c.l.s4 1983009808
        %v612 = vunpack.c.0.s8 %v611
        %v613 = vlaneseq
        %v614 = vshrl.u32 %v613, 7
        %v615 = vsub.s32 %v612, %v614
        %v616 = vrot.slane %v609, %v615
        %v617 = vcombine.low %v587, %v603
        %v619 = vunpack.c.l.s4 1983009808
        %v620 = vunpack.c.0.s8 %v619
        %v621 = vlaneseq
        %v622 = vshrl.u32 %v621, 7
        %v623 = vsub.s32 %v620, %v622
        %v624 = vrot.slane %v617, %v623
        %v625 = vcombine.low %v616, %v624
        %v627 = vunpack.c.l.s4 1934713408
        %v628 = vunpack.c.0.s8 %v627
        %v629 = vlaneseq
        %v630 = vshrl.u32 %v629, 7
        %v631 = vsub.s32 %v628, %v630
        %v632 = vrot.slane %v625, %v631
        %v633 = vcombine.high %v632, 0
        %v634 = vcombine.low %v583, %v599
        %v636 = vunpack.c.l.s4 1983009808
        %v637 = vunpack.c.0.s8 %v636
        %v638 = vlaneseq
        %v639 = vshrl.u32 %v638, 7
        %v640 = vsub.s32 %v637, %v639
        %v641 = vrot.slane %v634, %v640
        %v642 = vcombine.low %v591, %v607
        %v644 = vunpack.c.l.s4 1983009808
        %v645 = vunpack.c.0.s8 %v644
        %v646 = vlaneseq
        %v647 = vshrl.u32 %v646, 7
        %v648 = vsub.s32 %v645, %v647
        %v649 = vrot.slane %v642, %v648
        %v650 = vcombine.low %v641, %v649
        %v652 = vunpack.c.l.s4 1934713408
        %v653 = vunpack.c.0.s8 %v652
        %v654 = vlaneseq
        %v655 = vshrl.u32 %v654, 7
        %v656 = vsub.s32 %v653, %v655
        %v657 = vrot.slane %v650, %v656
        %v658 = vcombine.high %v657, 0
        %v661 = vpack.i.b16 %v657, %v632
        %v662 = vshrl.u32 %v632, 16
        %v663 = vshrl.u32 %v657, 16
        %v664 = vpack.i.b16 %v663, %v662
        %v667 = vpack.i.b16 %v658, %v633
        %v668 = vshrl.u32 %v633, 16
        %v669 = vshrl.u32 %v658, 16
        %v670 = vpack.i.b16 %v669, %v668
        %671 = vrot.lane.b32.xlu0 %v502, 96
        %v672 = vpop.permute.xlu0 %671
        %673 = vrot.lane.b32.xlu0 %v505, 96
        %v674 = vpop.permute.xlu0 %673
        %675 = vrot.lane.b32.xlu0 %v507, 96
        %v676 = vpop.permute.xlu0 %675
        %677 = vrot.lane.b32.xlu0 %v509, 96
        %v678 = vpop.permute.xlu0 %677
        %v681 = vunpack.c.l.s4 1983009808
        %v682 = vunpack.c.0.s8 %v681
        %v683 = vlaneseq
        %v684 = vshrl.u32 %v683, 7
        %v685 = vsub.s32 %v682, %v684
        %v686 = vrot.slane %v672, %v685
        %v689 = vunpack.c.l.s4 1983009808
        %v690 = vunpack.c.0.s8 %v689
        %v691 = vlaneseq
        %v692 = vshrl.u32 %v691, 7
        %v693 = vsub.s32 %v690, %v692
        %v694 = vrot.slane %v676, %v693
        %v695 = vcombine.low %v686, %v694
        %v696 = vcombine.high %v686, %v694
        %v698 = vunpack.c.l.s4 1934713408
        %v699 = vunpack.c.0.s8 %v698
        %v700 = vlaneseq
        %v701 = vshrl.u32 %v700, 7
        %v702 = vsub.s32 %v699, %v701
        %v703 = vrot.slane %v695, %v702
        %v705 = vunpack.c.l.s4 1934713408
        %v706 = vunpack.c.0.s8 %v705
        %v707 = vlaneseq
        %v708 = vshrl.u32 %v707, 7
        %v709 = vsub.s32 %v706, %v708
        %v710 = vrot.slane %v696, %v709
        %v711 = vcombine.high %v703, 0
        %v712 = vcombine.high %v710, 0
        %v715 = vunpack.c.l.s4 1983009808
        %v716 = vunpack.c.0.s8 %v715
        %v717 = vlaneseq
        %v718 = vshrl.u32 %v717, 7
        %v719 = vsub.s32 %v716, %v718
        %v720 = vrot.slane %v674, %v719
        %v723 = vunpack.c.l.s4 1983009808
        %v724 = vunpack.c.0.s8 %v723
        %v725 = vlaneseq
        %v726 = vshrl.u32 %v725, 7
        %v727 = vsub.s32 %v724, %v726
        %v728 = vrot.slane %v678, %v727
        %v729 = vcombine.low %v720, %v728
        %v730 = vcombine.high %v720, %v728
        %v732 = vunpack.c.l.s4 1934713408
        %v733 = vunpack.c.0.s8 %v732
        %v734 = vlaneseq
        %v735 = vshrl.u32 %v734, 7
        %v736 = vsub.s32 %v733, %v735
        %v737 = vrot.slane %v729, %v736
        %v739 = vunpack.c.l.s4 1934713408
        %v740 = vunpack.c.0.s8 %v739
        %v741 = vlaneseq
        %v742 = vshrl.u32 %v741, 7
        %v743 = vsub.s32 %v740, %v742
        %v744 = vrot.slane %v730, %v743
        %v745 = vcombine.high %v737, 0
        %v746 = vcombine.high %v744, 0
        %v749 = vpack.i.b16 %v737, %v703
        %v751 = vshrl.u32 %v703, 16
        %v752 = vshrl.u32 %v737, 16
        %v753 = vpack.i.b16 %v752, %v751
        %v757 = vpack.i.b16 %v745, %v711
        %v759 = vshrl.u32 %v711, 16
        %v760 = vshrl.u32 %v745, 16
        %v761 = vpack.i.b16 %v760, %v759
        %v765 = vpack.i.b16 %v744, %v710
        %v767 = vshrl.u32 %v710, 16
        %v768 = vshrl.u32 %v744, 16
        %v769 = vpack.i.b16 %v768, %v767
        %v773 = vpack.i.b16 %v746, %v712
        %v775 = vshrl.u32 %v712, 16
        %v776 = vshrl.u32 %v746, 16
        %v777 = vpack.i.b16 %v776, %v775
        %v779 = vcombine.low %v749, %v765
        %v781 = vunpack.c.l.s4 1983009808
        %v782 = vunpack.c.0.s8 %v781
        %v783 = vlaneseq
        %v784 = vshrl.u32 %v783, 7
        %v785 = vsub.s32 %v782, %v784
        %v786 = vrot.slane %v779, %v785
        %v787 = vcombine.low %v757, %v773
        %v789 = vunpack.c.l.s4 1983009808
        %v790 = vunpack.c.0.s8 %v789
        %v791 = vlaneseq
        %v792 = vshrl.u32 %v791, 7
        %v793 = vsub.s32 %v790, %v792
        %v794 = vrot.slane %v787, %v793
        %v795 = vcombine.low %v786, %v794
        %v797 = vunpack.c.l.s4 1934713408
        %v798 = vunpack.c.0.s8 %v797
        %v799 = vlaneseq
        %v800 = vshrl.u32 %v799, 7
        %v801 = vsub.s32 %v798, %v800
        %v802 = vrot.slane %v795, %v801
        %v803 = vcombine.high %v802, 0
        %v804 = vcombine.low %v753, %v769
        %v806 = vunpack.c.l.s4 1983009808
        %v807 = vunpack.c.0.s8 %v806
        %v808 = vlaneseq
        %v809 = vshrl.u32 %v808, 7
        %v810 = vsub.s32 %v807, %v809
        %v811 = vrot.slane %v804, %v810
        %v812 = vcombine.low %v761, %v777
        %v814 = vunpack.c.l.s4 1983009808
        %v815 = vunpack.c.0.s8 %v814
        %v816 = vlaneseq
        %v817 = vshrl.u32 %v816, 7
        %v818 = vsub.s32 %v815, %v817
        %v819 = vrot.slane %v812, %v818
        %v820 = vcombine.low %v811, %v819
        %v822 = vunpack.c.l.s4 1934713408
        %v823 = vunpack.c.0.s8 %v822
        %v824 = vlaneseq
        %v825 = vshrl.u32 %v824, 7
        %v826 = vsub.s32 %v823, %v825
        %v827 = vrot.slane %v820, %v826
        %v828 = vcombine.high %v827, 0
        %v831 = vpack.i.b16 %v827, %v802
        %v832 = vshrl.u32 %v802, 16
        %v833 = vshrl.u32 %v827, 16
        %v834 = vpack.i.b16 %v833, %v832
        %v837 = vpack.i.b16 %v828, %v803
        %v838 = vshrl.u32 %v803, 16
        %v839 = vshrl.u32 %v828, 16
        %v840 = vpack.i.b16 %v839, %v838
        %841 = vrot.lane.b32.xlu0 %v502, 64
        %v842 = vpop.permute.xlu0 %841
        %843 = vrot.lane.b32.xlu0 %v505, 64
        %v844 = vpop.permute.xlu0 %843
        %845 = vrot.lane.b32.xlu0 %v507, 64
        %v846 = vpop.permute.xlu0 %845
        %847 = vrot.lane.b32.xlu0 %v509, 64
        %v848 = vpop.permute.xlu0 %847
        %v851 = vunpack.c.l.s4 1983009808
        %v852 = vunpack.c.0.s8 %v851
        %v853 = vlaneseq
        %v854 = vshrl.u32 %v853, 7
        %v855 = vsub.s32 %v852, %v854
        %v856 = vrot.slane %v842, %v855
        %v859 = vunpack.c.l.s4 1983009808
        %v860 = vunpack.c.0.s8 %v859
        %v861 = vlaneseq
        %v862 = vshrl.u32 %v861, 7
        %v863 = vsub.s32 %v860, %v862
        %v864 = vrot.slane %v846, %v863
        %v865 = vcombine.low %v856, %v864
        %v866 = vcombine.high %v856, %v864
        %v868 = vunpack.c.l.s4 1934713408
        %v869 = vunpack.c.0.s8 %v868
        %v870 = vlaneseq
        %v871 = vshrl.u32 %v870, 7
        %v872 = vsub.s32 %v869, %v871
        %v873 = vrot.slane %v865, %v872
        %v875 = vunpack.c.l.s4 1934713408
        %v876 = vunpack.c.0.s8 %v875
        %v877 = vlaneseq
        %v878 = vshrl.u32 %v877, 7
        %v879 = vsub.s32 %v876, %v878
        %v880 = vrot.slane %v866, %v879
        %v881 = vcombine.high %v873, 0
        %v882 = vcombine.high %v880, 0
        %v885 = vunpack.c.l.s4 1983009808
        %v886 = vunpack.c.0.s8 %v885
        %v887 = vlaneseq
        %v888 = vshrl.u32 %v887, 7
        %v889 = vsub.s32 %v886, %v888
        %v890 = vrot.slane %v844, %v889
        %v893 = vunpack.c.l.s4 1983009808
        %v894 = vunpack.c.0.s8 %v893
        %v895 = vlaneseq
        %v896 = vshrl.u32 %v895, 7
        %v897 = vsub.s32 %v894, %v896
        %v898 = vrot.slane %v848, %v897
        %v899 = vcombine.low %v890, %v898
        %v900 = vcombine.high %v890, %v898
        %v902 = vunpack.c.l.s4 1934713408
        %v903 = vunpack.c.0.s8 %v902
        %v904 = vlaneseq
        %v905 = vshrl.u32 %v904, 7
        %v906 = vsub.s32 %v903, %v905
        %v907 = vrot.slane %v899, %v906
        %v909 = vunpack.c.l.s4 1934713408
        %v910 = vunpack.c.0.s8 %v909
        %v911 = vlaneseq
        %v912 = vshrl.u32 %v911, 7
        %v913 = vsub.s32 %v910, %v912
        %v914 = vrot.slane %v900, %v913
        %v915 = vcombine.high %v907, 0
        %v916 = vcombine.high %v914, 0
        %v919 = vpack.i.b16 %v907, %v873
        %v921 = vshrl.u32 %v873, 16
        %v922 = vshrl.u32 %v907, 16
        %v923 = vpack.i.b16 %v922, %v921
        %v927 = vpack.i.b16 %v915, %v881
        %v929 = vshrl.u32 %v881, 16
        %v930 = vshrl.u32 %v915, 16
        %v931 = vpack.i.b16 %v930, %v929
        %v935 = vpack.i.b16 %v914, %v880
        %v937 = vshrl.u32 %v880, 16
        %v938 = vshrl.u32 %v914, 16
        %v939 = vpack.i.b16 %v938, %v937
        %v943 = vpack.i.b16 %v916, %v882
        %v945 = vshrl.u32 %v882, 16
        %v946 = vshrl.u32 %v916, 16
        %v947 = vpack.i.b16 %v946, %v945
        %v949 = vcombine.low %v919, %v935
        %v951 = vunpack.c.l.s4 1983009808
        %v952 = vunpack.c.0.s8 %v951
        %v953 = vlaneseq
        %v954 = vshrl.u32 %v953, 7
        %v955 = vsub.s32 %v952, %v954
        %v956 = vrot.slane %v949, %v955
        %v957 = vcombine.low %v927, %v943
        %v959 = vunpack.c.l.s4 1983009808
        %v960 = vunpack.c.0.s8 %v959
        %v961 = vlaneseq
        %v962 = vshrl.u32 %v961, 7
        %v963 = vsub.s32 %v960, %v962
        %v964 = vrot.slane %v957, %v963
        %v965 = vcombine.low %v956, %v964
        %v967 = vunpack.c.l.s4 1934713408
        %v968 = vunpack.c.0.s8 %v967
        %v969 = vlaneseq
        %v970 = vshrl.u32 %v969, 7
        %v971 = vsub.s32 %v968, %v970
        %v972 = vrot.slane %v965, %v971
        %v973 = vcombine.high %v972, 0
        %v974 = vcombine.low %v923, %v939
        %v976 = vunpack.c.l.s4 1983009808
        %v977 = vunpack.c.0.s8 %v976
        %v978 = vlaneseq
        %v979 = vshrl.u32 %v978, 7
        %v980 = vsub.s32 %v977, %v979
        %v981 = vrot.slane %v974, %v980
        %v982 = vcombine.low %v931, %v947
        %v984 = vunpack.c.l.s4 1983009808
        %v985 = vunpack.c.0.s8 %v984
        %v986 = vlaneseq
        %v987 = vshrl.u32 %v986, 7
        %v988 = vsub.s32 %v985, %v987
        %v989 = vrot.slane %v982, %v988
        %v990 = vcombine.low %v981, %v989
        %v992 = vunpack.c.l.s4 1934713408
        %v993 = vunpack.c.0.s8 %v992
        %v994 = vlaneseq
        %v995 = vshrl.u32 %v994, 7
        %v996 = vsub.s32 %v993, %v995
        %v997 = vrot.slane %v990, %v996
        %v998 = vcombine.high %v997, 0
        %v1001 = vpack.i.b16 %v997, %v972
        %v1002 = vshrl.u32 %v972, 16
        %v1003 = vshrl.u32 %v997, 16
        %v1004 = vpack.i.b16 %v1003, %v1002
        %v1007 = vpack.i.b16 %v998, %v973
        %v1008 = vshrl.u32 %v973, 16
        %v1009 = vshrl.u32 %v998, 16
        %v1010 = vpack.i.b16 %v1009, %v1008
        %vm1011 = vcmask 64512
        %v1013 = vsel %vm1011, %v661, 0
        %v1016 = vsel %vm1011, %v831, 0
        %1018 = vmatprep.subr.bf16.mxu0 0
        %1019 = vmatpush1.bf16.xpose.msra.mxu0 0
        %1020 = vmatprep.subr.bf16.mxu0 0
        %1021 = vmatpush1.bf16.xpose.msra.mxu0 0
        %1022 = vmatprep.subr.bf16.mxu0 0
        %1023 = vmatpush1.bf16.xpose.msra.mxu0 0
        %1024 = vmatprep.subr.bf16.mxu0 0
        %1025 = vmatpush1.bf16.xpose.msra.mxu0 0
        %1026 = vmatprep.subr.bf16.mxu0 0
        %1027 = vmatpush1.bf16.xpose.msra.mxu0 0
        %1028 = vmatprep.subr.bf16.mxu0 0
        %1029 = vmatpush1.bf16.xpose.msra.mxu0 0
        %1030 = vmatprep.subr.bf16.mxu0 0
        %1031 = vmatpush1.bf16.xpose.msra.mxu0 0
        %1032 = vmatprep.subr.bf16.mxu0 0
        %1033 = vmatpush1.bf16.xpose.msra.mxu0 %v1016
        %1034 = vmatprep.subr.bf16.mxu0 0
        %1035 = vmatpush2.bf16.xpose.msra.mxu0 0
        %1036 = vmatprep.subr.bf16.mxu0 0
        %1037 = vmatpush2.bf16.xpose.msra.mxu0 0
        %1038 = vmatprep.subr.bf16.mxu0 0
        %1039 = vmatpush2.bf16.xpose.msra.mxu0 0
        %1040 = vmatprep.subr.bf16.mxu0 0
        %1041 = vmatpush2.bf16.xpose.msra.mxu0 0
        %1042 = vmatprep.subr.bf16.mxu0 0
        %1043 = vmatpush2.bf16.xpose.msra.mxu0 0
        %1044 = vmatprep.subr.bf16.mxu0 0
        %1045 = vmatpush2.bf16.xpose.msra.mxu0 0
        %1046 = vmatprep.subr.bf16.mxu0 0
        %1047 = vmatpush2.bf16.xpose.msra.mxu0 0
        %1048 = vmatprep.subr.bf16.mxu0 0
        %1049 = vmatpush2.bf16.xpose.msra.mxu0 0
        %1050 = vmatprep.mubr.bf16.mxu0 0
        %1051 = vmatmul.mubr.bf16.gmra.mxu0 %v1013
        %v1052 = vpop.f32.mrf.mxu0
        %v1053 = vadd.f32 0.0, %v1052
        %v1054 = vpop.f32.mrf.mxu0
        %v1055 = vpop.f32.mrf.mxu0
        %v1056 = vpop.f32.mrf.mxu0
        %1057 = vdwg.mxu0
        %v1059 = vsel %vm1011, %v664, 0
        %v1062 = vsel %vm1011, %v834, 0
        %1064 = vmatprep.subr.bf16.mxu0 0
        %1065 = vmatpush1.bf16.xpose.msra.mxu0 0
        %1066 = vmatprep.subr.bf16.mxu0 0
        %1067 = vmatpush1.bf16.xpose.msra.mxu0 0
        %1068 = vmatprep.subr.bf16.mxu0 0
        %1069 = vmatpush1.bf16.xpose.msra.mxu0 0
        %1070 = vmatprep.subr.bf16.mxu0 0
        %1071 = vmatpush1.bf16.xpose.msra.mxu0 0
        %1072 = vmatprep.subr.bf16.mxu0 0
        %1073 = vmatpush1.bf16.xpose.msra.mxu0 0
        %1074 = vmatprep.subr.bf16.mxu0 0
        %1075 = vmatpush1.bf16.xpose.msra.mxu0 0
        %1076 = vmatprep.subr.bf16.mxu0 0
        %1077 = vmatpush1.bf16.xpose.msra.mxu0 0
        %1078 = vmatprep.subr.bf16.mxu0 0
        %1079 = vmatpush1.bf16.xpose.msra.mxu0 %v1062
        %1080 = vmatprep.subr.bf16.mxu0 0
        %1081 = vmatpush2.bf16.xpose.msra.mxu0 0
        %1082 = vmatprep.subr.bf16.mxu0 0
        %1083 = vmatpush2.bf16.xpose.msra.mxu0 0
        %1084 = vmatprep.subr.bf16.mxu0 0
        %1085 = vmatpush2.bf16.xpose.msra.mxu0 0
        %1086 = vmatprep.subr.bf16.mxu0 0
        %1087 = vmatpush2.bf16.xpose.msra.mxu0 0
        %1088 = vmatprep.subr.bf16.mxu0 0
        %1089 = vmatpush2.bf16.xpose.msra.mxu0 0
        %1090 = vmatprep.subr.bf16.mxu0 0
        %1091 = vmatpush2.bf16.xpose.msra.mxu0 0
        %1092 = vmatprep.subr.bf16.mxu0 0
        %1093 = vmatpush2.bf16.xpose.msra.mxu0 0
        %1094 = vmatprep.subr.bf16.mxu0 0
        %1095 = vmatpush2.bf16.xpose.msra.mxu0 0
        %1096 = vmatprep.mubr.bf16.mxu0 0
        %1097 = vmatmul.mubr.bf16.gmra.mxu0 %v1059
        %v1098 = vpop.f32.mrf.mxu0
        %v1099 = vadd.f32 0.0, %v1098
        %v1100 = vpop.f32.mrf.mxu0
        %v1101 = vpop.f32.mrf.mxu0
        %v1102 = vpop.f32.mrf.mxu0
        %1103 = vdwg.mxu0
        %v1105 = vsel %vm1011, %v667, 0
        %v1108 = vsel %vm1011, %v837, 0
        %1110 = vmatprep.subr.bf16.mxu0 0
        %1111 = vmatpush1.bf16.xpose.msra.mxu0 0
        %1112 = vmatprep.subr.bf16.mxu0 0
        %1113 = vmatpush1.bf16.xpose.msra.mxu0 0
        %1114 = vmatprep.subr.bf16.mxu0 0
        %1115 = vmatpush1.bf16.xpose.msra.mxu0 0
        %1116 = vmatprep.subr.bf16.mxu0 0
        %1117 = vmatpush1.bf16.xpose.msra.mxu0 0
        %1118 = vmatprep.subr.bf16.mxu0 0
        %1119 = vmatpush1.bf16.xpose.msra.mxu0 0
        %1120 = vmatprep.subr.bf16.mxu0 0
        %1121 = vmatpush1.bf16.xpose.msra.mxu0 0
        %1122 = vmatprep.subr.bf16.mxu0 0
        %1123 = vmatpush1.bf16.xpose.msra.mxu0 0
        %1124 = vmatprep.subr.bf16.mxu0 0
        %1125 = vmatpush1.bf16.xpose.msra.mxu0 %v1108
        %1126 = vmatprep.subr.bf16.mxu0 0
        %1127 = vmatpush2.bf16.xpose.msra.mxu0 0
        %1128 = vmatprep.subr.bf16.mxu0 0
        %1129 = vmatpush2.bf16.xpose.msra.mxu0 0
        %1130 = vmatprep.subr.bf16.mxu0 0
        %1131 = vmatpush2.bf16.xpose.msra.mxu0 0
        %1132 = vmatprep.subr.bf16.mxu0 0
        %1133 = vmatpush2.bf16.xpose.msra.mxu0 0
        %1134 = vmatprep.subr.bf16.mxu0 0
        %1135 = vmatpush2.bf16.xpose.msra.mxu0 0
        %1136 = vmatprep.subr.bf16.mxu0 0
        %1137 = vmatpush2.bf16.xpose.msra.mxu0 0
        %1138 = vmatprep.subr.bf16.mxu0 0
        %1139 = vmatpush2.bf16.xpose.msra.mxu0 0
        %1140 = vmatprep.subr.bf16.mxu0 0
        %1141 = vmatpush2.bf16.xpose.msra.mxu0 0
        %1142 = vmatprep.mubr.bf16.mxu0 0
        %1143 = vmatmul.mubr.bf16.gmra.mxu0 %v1105
        %v1144 = vpop.f32.mrf.mxu0
        %v1145 = vadd.f32 0.0, %v1144
        %v1146 = vpop.f32.mrf.mxu0
        %v1147 = vpop.f32.mrf.mxu0
        %v1148 = vpop.f32.mrf.mxu0
        %1149 = vdwg.mxu0
        %v1151 = vsel %vm1011, %v670, 0
        %v1154 = vsel %vm1011, %v840, 0
        %1156 = vmatprep.subr.bf16.mxu0 0
        %1157 = vmatpush1.bf16.xpose.msra.mxu0 0
        %1158 = vmatprep.subr.bf16.mxu0 0
        %1159 = vmatpush1.bf16.xpose.msra.mxu0 0
        %1160 = vmatprep.subr.bf16.mxu0 0
        %1161 = vmatpush1.bf16.xpose.msra.mxu0 0
        %1162 = vmatprep.subr.bf16.mxu0 0
        %1163 = vmatpush1.bf16.xpose.msra.mxu0 0
        %1164 = vmatprep.subr.bf16.mxu0 0
        %1165 = vmatpush1.bf16.xpose.msra.mxu0 0
        %1166 = vmatprep.subr.bf16.mxu0 0
        %1167 = vmatpush1.bf16.xpose.msra.mxu0 0
        %1168 = vmatprep.subr.bf16.mxu0 0
        %1169 = vmatpush1.bf16.xpose.msra.mxu0 0
        %1170 = vmatprep.subr.bf16.mxu0 0
        %1171 = vmatpush1.bf16.xpose.msra.mxu0 %v1154
        %1172 = vmatprep.subr.bf16.mxu0 0
        %1173 = vmatpush2.bf16.xpose.msra.mxu0 0
        %1174 = vmatprep.subr.bf16.mxu0 0
        %1175 = vmatpush2.bf16.xpose.msra.mxu0 0
        %1176 = vmatprep.subr.bf16.mxu0 0
        %1177 = vmatpush2.bf16.xpose.msra.mxu0 0
        %1178 = vmatprep.subr.bf16.mxu0 0
        %1179 = vmatpush2.bf16.xpose.msra.mxu0 0
        %1180 = vmatprep.subr.bf16.mxu0 0
        %1181 = vmatpush2.bf16.xpose.msra.mxu0 0
        %1182 = vmatprep.subr.bf16.mxu0 0
        %1183 = vmatpush2.bf16.xpose.msra.mxu0 0
        %1184 = vmatprep.subr.bf16.mxu0 0
        %1185 = vmatpush2.bf16.xpose.msra.mxu0 0
        %1186 = vmatprep.subr.bf16.mxu0 0
        %1187 = vmatpush2.bf16.xpose.msra.mxu0 0
        %1188 = vmatprep.mubr.bf16.mxu0 0
        %1189 = vmatmul.mubr.bf16.gmra.mxu0 %v1151
        %v1190 = vpop.f32.mrf.mxu0
        %v1191 = vadd.f32 0.0, %v1190
        %v1192 = vpop.f32.mrf.mxu0
        %v1193 = vpop.f32.mrf.mxu0
        %v1194 = vpop.f32.mrf.mxu0
        %1195 = vdwg.mxu0
        %v1196 = vsel %vm1011, %v1053, -inf
        %1197 = vmax.xlane.f32.xlu0 %v1196
        %v1198 = vpop.xlane.xlu0 %1197
        %v1199 = vsel %vm1011, %v1099, -inf
        %1200 = vmax.xlane.f32.xlu0 %v1199
        %v1201 = vpop.xlane.xlu0 %1200
        %v1202 = vsel %vm1011, %v1145, -inf
        %1203 = vmax.xlane.f32.xlu0 %v1202
        %v1204 = vpop.xlane.xlu0 %1203
        %v1205 = vsel %vm1011, %v1191, -inf
        %1206 = vmax.xlane.f32.xlu0 %v1205
        %v1207 = vpop.xlane.xlu0 %1206
        %v1208 = vsub.f32 %v1053, %v1198
        %v1209 = vsub.f32 %v1099, %v1201
        %v1210 = vsub.f32 %v1145, %v1204
        %v1211 = vsub.f32 %v1191, %v1207
        %v1212 = vmul.f32 %v1208, 1.442695
        %v1213 = vpow.pop %v1212
        %v1214 = vmul.f32 %v1209, 1.442695
        %v1215 = vpow.pop %v1214
        %v1216 = vmul.f32 %v1210, 1.442695
        %v1217 = vpow.pop %v1216
        %v1218 = vmul.f32 %v1211, 1.442695
        %v1219 = vpow.pop %v1218
        %v1220 = vsel %vm1011, %v1213, 0.0
        %1221 = vadd.xlane.f32.xlu0 %v1220
        %v1222 = vpop.xlane.xlu0 %1221
        %v1223 = vsel %vm1011, %v1215, 0.0
        %1224 = vadd.xlane.f32.xlu0 %v1223
        %v1225 = vpop.xlane.xlu0 %1224
        %v1226 = vsel %vm1011, %v1217, 0.0
        %1227 = vadd.xlane.f32.xlu0 %v1226
        %v1228 = vpop.xlane.xlu0 %1227
        %v1229 = vsel %vm1011, %v1219, 0.0
        %1230 = vadd.xlane.f32.xlu0 %v1229
        %v1231 = vpop.xlane.xlu0 %1230
        %v1232 = vrcp.pop %v1222
        %v1233 = vrcp.pop %v1225
        %v1234 = vrcp.pop %v1228
        %v1235 = vrcp.pop %v1231
        %v1236 = vmul.f32 %v1213, %v1232
        %v1237 = vmul.f32 %v1215, %v1233
        %v1238 = vmul.f32 %v1217, %v1234
        %v1239 = vmul.f32 %v1219, %v1235
        %v1240 = vpack.c.bf16 %v1236, %v1236
        %v1241 = vpack.c.bf16 %v1237, %v1237
        %v1242 = vpack.c.bf16 %v1238, %v1238
        %v1243 = vpack.c.bf16 %v1239, %v1239
        %v1245 = vsel %vm1011, %v1240, 0
        %vm1247 = vcmask 1043456
        %v1249 = vsel %vm1247, %v1001, 0
        %1251 = vmatprep.subr.bf16.mxu0 0
        %1252 = vmatpush1.bf16.msra.mxu0 0
        %1253 = vmatprep.subr.bf16.mxu0 0
        %1254 = vmatpush1.bf16.msra.mxu0 0
        %1255 = vmatprep.subr.bf16.mxu0 0
        %1256 = vmatpush1.bf16.msra.mxu0 0
        %1257 = vmatprep.subr.bf16.mxu0 0
        %1258 = vmatpush1.bf16.msra.mxu0 0
        %1259 = vmatprep.subr.bf16.mxu0 0
        %1260 = vmatpush1.bf16.msra.mxu0 0
        %1261 = vmatprep.subr.bf16.mxu0 0
        %1262 = vmatpush1.bf16.msra.mxu0 0
        %1263 = vmatprep.subr.bf16.mxu0 0
        %1264 = vmatpush1.bf16.msra.mxu0 0
        %1265 = vmatprep.subr.bf16.mxu0 0
        %1266 = vmatpush1.bf16.msra.mxu0 %v1249
        %1267 = vmatprep.subr.bf16.mxu0 0
        %1268 = vmatpush2.bf16.msra.mxu0 0
        %1269 = vmatprep.subr.bf16.mxu0 0
        %1270 = vmatpush2.bf16.msra.mxu0 0
        %1271 = vmatprep.subr.bf16.mxu0 0
        %1272 = vmatpush2.bf16.msra.mxu0 0
        %1273 = vmatprep.subr.bf16.mxu0 0
        %1274 = vmatpush2.bf16.msra.mxu0 0
        %1275 = vmatprep.subr.bf16.mxu0 0
        %1276 = vmatpush2.bf16.msra.mxu0 0
        %1277 = vmatprep.subr.bf16.mxu0 0
        %1278 = vmatpush2.bf16.msra.mxu0 0
        %1279 = vmatprep.subr.bf16.mxu0 0
        %1280 = vmatpush2.bf16.msra.mxu0 0
        %1281 = vmatprep.subr.bf16.mxu0 0
        %1282 = vmatpush2.bf16.msra.mxu0 0
        %1283 = vmatprep.mubr.bf16.mxu0 0
        %1284 = vmatmul.mubr.bf16.gmra.mxu0 %v1245
        %v1285 = vpop.f32.mrf.mxu0
        %v1286 = vadd.f32 0.0, %v1285
        %v1287 = vpop.f32.mrf.mxu0
        %v1288 = vpop.f32.mrf.mxu0
        %v1289 = vpop.f32.mrf.mxu0
        %1290 = vdwg.mxu0
        %v1292 = vsel %vm1011, %v1241, 0
        %v1295 = vsel %vm1247, %v1004, 0
        %1297 = vmatprep.subr.bf16.mxu0 0
        %1298 = vmatpush1.bf16.msra.mxu0 0
        %1299 = vmatprep.subr.bf16.mxu0 0
        %1300 = vmatpush1.bf16.msra.mxu0 0
        %1301 = vmatprep.subr.bf16.mxu0 0
        %1302 = vmatpush1.bf16.msra.mxu0 0
        %1303 = vmatprep.subr.bf16.mxu0 0
        %1304 = vmatpush1.bf16.msra.mxu0 0
        %1305 = vmatprep.subr.bf16.mxu0 0
        %1306 = vmatpush1.bf16.msra.mxu0 0
        %1307 = vmatprep.subr.bf16.mxu0 0
        %1308 = vmatpush1.bf16.msra.mxu0 0
        %1309 = vmatprep.subr.bf16.mxu0 0
        %1310 = vmatpush1.bf16.msra.mxu0 0
        %1311 = vmatprep.subr.bf16.mxu0 0
        %1312 = vmatpush1.bf16.msra.mxu0 %v1295
        %1313 = vmatprep.subr.bf16.mxu0 0
        %1314 = vmatpush2.bf16.msra.mxu0 0
        %1315 = vmatprep.subr.bf16.mxu0 0
        %1316 = vmatpush2.bf16.msra.mxu0 0
        %1317 = vmatprep.subr.bf16.mxu0 0
        %1318 = vmatpush2.bf16.msra.mxu0 0
        %1319 = vmatprep.subr.bf16.mxu0 0
        %1320 = vmatpush2.bf16.msra.mxu0 0
        %1321 = vmatprep.subr.bf16.mxu0 0
        %1322 = vmatpush2.bf16.msra.mxu0 0
        %1323 = vmatprep.subr.bf16.mxu0 0
        %1324 = vmatpush2.bf16.msra.mxu0 0
        %1325 = vmatprep.subr.bf16.mxu0 0
        %1326 = vmatpush2.bf16.msra.mxu0 0
        %1327 = vmatprep.subr.bf16.mxu0 0
        %1328 = vmatpush2.bf16.msra.mxu0 0
        %1329 = vmatprep.mubr.bf16.mxu0 0
        %1330 = vmatmul.mubr.bf16.gmra.mxu0 %v1292
        %v1331 = vpop.f32.mrf.mxu0
        %v1332 = vadd.f32 0.0, %v1331
        %v1333 = vpop.f32.mrf.mxu0
        %v1334 = vpop.f32.mrf.mxu0
        %v1335 = vpop.f32.mrf.mxu0
        %1336 = vdwg.mxu0
        %v1338 = vsel %vm1011, %v1242, 0
        %v1341 = vsel %vm1247, %v1007, 0
        %1343 = vmatprep.subr.bf16.mxu0 0
        %1344 = vmatpush1.bf16.msra.mxu0 0
        %1345 = vmatprep.subr.bf16.mxu0 0
        %1346 = vmatpush1.bf16.msra.mxu0 0
        %1347 = vmatprep.subr.bf16.mxu0 0
        %1348 = vmatpush1.bf16.msra.mxu0 0
        %1349 = vmatprep.subr.bf16.mxu0 0
        %1350 = vmatpush1.bf16.msra.mxu0 0
        %1351 = vmatprep.subr.bf16.mxu0 0
        %1352 = vmatpush1.bf16.msra.mxu0 0
        %1353 = vmatprep.subr.bf16.mxu0 0
        %1354 = vmatpush1.bf16.msra.mxu0 0
        %1355 = vmatprep.subr.bf16.mxu0 0
        %1356 = vmatpush1.bf16.msra.mxu0 0
        %1357 = vmatprep.subr.bf16.mxu0 0
        %1358 = vmatpush1.bf16.msra.mxu0 %v1341
        %1359 = vmatprep.subr.bf16.mxu0 0
        %1360 = vmatpush2.bf16.msra.mxu0 0
        %1361 = vmatprep.subr.bf16.mxu0 0
        %1362 = vmatpush2.bf16.msra.mxu0 0
        %1363 = vmatprep.subr.bf16.mxu0 0
        %1364 = vmatpush2.bf16.msra.mxu0 0
        %1365 = vmatprep.subr.bf16.mxu0 0
        %1366 = vmatpush2.bf16.msra.mxu0 0
        %1367 = vmatprep.subr.bf16.mxu0 0
        %1368 = vmatpush2.bf16.msra.mxu0 0
        %1369 = vmatprep.subr.bf16.mxu0 0
        %1370 = vmatpush2.bf16.msra.mxu0 0
        %1371 = vmatprep.subr.bf16.mxu0 0
        %1372 = vmatpush2.bf16.msra.mxu0 0
        %1373 = vmatprep.subr.bf16.mxu0 0
        %1374 = vmatpush2.bf16.msra.mxu0 0
        %1375 = vmatprep.mubr.bf16.mxu0 0
        %1376 = vmatmul.mubr.bf16.gmra.mxu0 %v1338
        %v1377 = vpop.f32.mrf.mxu0
        %v1378 = vadd.f32 0.0, %v1377
        %v1379 = vpop.f32.mrf.mxu0
        %v1380 = vpop.f32.mrf.mxu0
        %v1381 = vpop.f32.mrf.mxu0
        %1382 = vdwg.mxu0
        %v1384 = vsel %vm1011, %v1243, 0
        %v1387 = vsel %vm1247, %v1010, 0
        %1389 = vmatprep.subr.bf16.mxu0 0
        %1390 = vmatpush1.bf16.msra.mxu0 0
        %1391 = vmatprep.subr.bf16.mxu0 0
        %1392 = vmatpush1.bf16.msra.mxu0 0
        %1393 = vmatprep.subr.bf16.mxu0 0
        %1394 = vmatpush1.bf16.msra.mxu0 0
        %1395 = vmatprep.subr.bf16.mxu0 0
        %1396 = vmatpush1.bf16.msra.mxu0 0
        %1397 = vmatprep.subr.bf16.mxu0 0
        %1398 = vmatpush1.bf16.msra.mxu0 0
        %1399 = vmatprep.subr.bf16.mxu0 0
        %1400 = vmatpush1.bf16.msra.mxu0 0
        %1401 = vmatprep.subr.bf16.mxu0 0
        %1402 = vmatpush1.bf16.msra.mxu0 0
        %1403 = vmatprep.subr.bf16.mxu0 0
        %1404 = vmatpush1.bf16.msra.mxu0 %v1387
        %1405 = vmatprep.subr.bf16.mxu0 0
        %1406 = vmatpush2.bf16.msra.mxu0 0
        %1407 = vmatprep.subr.bf16.mxu0 0
        %1408 = vmatpush2.bf16.msra.mxu0 0
        %1409 = vmatprep.subr.bf16.mxu0 0
        %1410 = vmatpush2.bf16.msra.mxu0 0
        %1411 = vmatprep.subr.bf16.mxu0 0
        %1412 = vmatpush2.bf16.msra.mxu0 0
        %1413 = vmatprep.subr.bf16.mxu0 0
        %1414 = vmatpush2.bf16.msra.mxu0 0
        %1415 = vmatprep.subr.bf16.mxu0 0
        %1416 = vmatpush2.bf16.msra.mxu0 0
        %1417 = vmatprep.subr.bf16.mxu0 0
        %1418 = vmatpush2.bf16.msra.mxu0 0
        %1419 = vmatprep.subr.bf16.mxu0 0
        %1420 = vmatpush2.bf16.msra.mxu0 0
        %1421 = vmatprep.mubr.bf16.mxu0 0
        %1422 = vmatmul.mubr.bf16.gmra.mxu0 %v1384
        %v1423 = vpop.f32.mrf.mxu0
        %v1424 = vadd.f32 0.0, %v1423
        %v1425 = vpop.f32.mrf.mxu0
        %v1426 = vpop.f32.mrf.mxu0
        %v1427 = vpop.f32.mrf.mxu0
        %1428 = vdwg.mxu0
        %v1429 = vcombine.low %v1286, %v1378
        %v1430 = vcombine.high %v1286, %v1378
        %v1432 = vunpack.c.l.s4 1983009808
        %v1433 = vunpack.c.0.s8 %v1432
        %v1434 = vlaneseq
        %v1435 = vshrl.u32 %v1434, 7
        %v1436 = vsub.s32 %v1433, %v1435
        %v1437 = vrot.slane %v1429, %v1436
        %v1439 = vunpack.c.l.s4 1983009808
        %v1440 = vunpack.c.0.s8 %v1439
        %v1441 = vlaneseq
        %v1442 = vshrl.u32 %v1441, 7
        %v1443 = vsub.s32 %v1440, %v1442
        %v1444 = vrot.slane %v1430, %v1443
        %v1445 = vcombine.low %v1332, %v1424
        %v1446 = vcombine.high %v1332, %v1424
        %v1448 = vunpack.c.l.s4 1983009808
        %v1449 = vunpack.c.0.s8 %v1448
        %v1450 = vlaneseq
        %v1451 = vshrl.u32 %v1450, 7
        %v1452 = vsub.s32 %v1449, %v1451
        %v1453 = vrot.slane %v1445, %v1452
        %v1455 = vunpack.c.l.s4 1983009808
        %v1456 = vunpack.c.0.s8 %v1455
        %v1457 = vlaneseq
        %v1458 = vshrl.u32 %v1457, 7
        %v1459 = vsub.s32 %v1456, %v1458
        %v1460 = vrot.slane %v1446, %v1459
        %v1461 = vcombine.low %v1437, %v1453
        %v1462 = vcombine.high %v1437, %v1453
        %v1464 = vunpack.c.l.s4 1934713408
        %v1465 = vunpack.c.0.s8 %v1464
        %v1466 = vlaneseq
        %v1467 = vshrl.u32 %v1466, 7
        %v1468 = vsub.s32 %v1465, %v1467
        %v1469 = vrot.slane %v1461, %v1468
        %v1471 = vunpack.c.l.s4 1934713408
        %v1472 = vunpack.c.0.s8 %v1471
        %v1473 = vlaneseq
        %v1474 = vshrl.u32 %v1473, 7
        %v1475 = vsub.s32 %v1472, %v1474
        %v1476 = vrot.slane %v1462, %v1475
        %v1477 = vcombine.low %v1444, %v1460
        %v1478 = vcombine.high %v1444, %v1460
        %v1480 = vunpack.c.l.s4 1934713408
        %v1481 = vunpack.c.0.s8 %v1480
        %v1482 = vlaneseq
        %v1483 = vshrl.u32 %v1482, 7
        %v1484 = vsub.s32 %v1481, %v1483
        %v1485 = vrot.slane %v1477, %v1484
        %v1487 = vunpack.c.l.s4 1934713408
        %v1488 = vunpack.c.0.s8 %v1487
        %v1489 = vlaneseq
        %v1490 = vshrl.u32 %v1489, 7
        %v1491 = vsub.s32 %v1488, %v1490
        %v1492 = vrot.slane %v1478, %v1491
        %v1493 = vcombine.high %v1469, 0.0
        %v1494 = vcombine.high %v1476, 0.0
        %v1495 = vcombine.high %v1485, 0.0
        %v1496 = vcombine.high %v1492, 0.0
        %v1497 = vcombine.low %v1469, %v1476
        %v1499 = vunpack.c.l.s4 1983009808
        %v1500 = vunpack.c.0.s8 %v1499
        %v1501 = vlaneseq
        %v1502 = vshrl.u32 %v1501, 7
        %v1503 = vsub.s32 %v1500, %v1502
        %v1504 = vrot.slane %v1497, %v1503
        %v1505 = vcombine.low %v1493, %v1494
        %v1507 = vunpack.c.l.s4 1983009808
        %v1508 = vunpack.c.0.s8 %v1507
        %v1509 = vlaneseq
        %v1510 = vshrl.u32 %v1509, 7
        %v1511 = vsub.s32 %v1508, %v1510
        %v1512 = vrot.slane %v1505, %v1511
        %v1513 = vcombine.low %v1485, %v1492
        %v1515 = vunpack.c.l.s4 1983009808
        %v1516 = vunpack.c.0.s8 %v1515
        %v1517 = vlaneseq
        %v1518 = vshrl.u32 %v1517, 7
        %v1519 = vsub.s32 %v1516, %v1518
        %v1520 = vrot.slane %v1513, %v1519
        %v1521 = vcombine.low %v1495, %v1496
        %v1523 = vunpack.c.l.s4 1983009808
        %v1524 = vunpack.c.0.s8 %v1523
        %v1525 = vlaneseq
        %v1526 = vshrl.u32 %v1525, 7
        %v1527 = vsub.s32 %v1524, %v1526
        %v1528 = vrot.slane %v1521, %v1527
        %v1529 = vcombine.low %v1504, %v1512
        %v1530 = vcombine.high %v1504, %v1512
        %v1532 = vunpack.c.l.s4 1934713408
        %v1533 = vunpack.c.0.s8 %v1532
        %v1534 = vlaneseq
        %v1535 = vshrl.u32 %v1534, 7
        %v1536 = vsub.s32 %v1533, %v1535
        %v1537 = vrot.slane %v1529, %v1536
        %v1539 = vunpack.c.l.s4 1934713408
        %v1540 = vunpack.c.0.s8 %v1539
        %v1541 = vlaneseq
        %v1542 = vshrl.u32 %v1541, 7
        %v1543 = vsub.s32 %v1540, %v1542
        %v1544 = vrot.slane %v1530, %v1543
        %v1545 = vcombine.low %v1520, %v1528
        %v1546 = vcombine.high %v1520, %v1528
        %v1548 = vunpack.c.l.s4 1934713408
        %v1549 = vunpack.c.0.s8 %v1548
        %v1550 = vlaneseq
        %v1551 = vshrl.u32 %v1550, 7
        %v1552 = vsub.s32 %v1549, %v1551
        %v1553 = vrot.slane %v1545, %v1552
        %v1555 = vunpack.c.l.s4 1934713408
        %v1556 = vunpack.c.0.s8 %v1555
        %v1557 = vlaneseq
        %v1558 = vshrl.u32 %v1557, 7
        %v1559 = vsub.s32 %v1556, %v1558
        %v1560 = vrot.slane %v1546, %v1559
        %v1561 = vcombine.low %v1537, %v1553
        %v1562 = vcombine.high %v1537, %v1553
        %v1563 = vcombine.low %v1544, %v1560
        %v1564 = vcombine.high %v1544, %v1560
        %1566 = vrot.lane.b32.xlu0 %v1562, 8
        %v1567 = vpop.permute.xlu0 %1566
        %1570 = vrot.lane.b32.xlu0 %v1563, 16
        %v1571 = vpop.permute.xlu0 %1570
        %1574 = vrot.lane.b32.xlu0 %v1564, 24
        %v1575 = vpop.permute.xlu0 %1574
        %v1577 = vsel %vm1011, %v1561, %v1567
        %vm1578 = vcmask 130048
        %v1579 = vsel %vm1578, %v1577, %v1571
        %vm1580 = vcmask 195584
        %v1581 = vsel %vm1580, %v1579, %v1575
        %v1582 = vpack.c.bf16 %v1581, %v1581
        %v1583 = vld [vmem:[%s4] sm:$0xf]
        %v1584 = vld [vmem:[%s4 + $0x4] sm:$0xf]
        %v1585 = vld [vmem:[%s4 + $0x8] sm:$0xf]
        %v1586 = vld [vmem:[%s4 + $0xc] sm:$0xf]
        %v1591 = vunpack.c.l.b16 %v1583
        %v1592 = vunpack.c.l.b16 %v1584
        %v1593 = vunpack.c.l.b16 %v1585
        %v1594 = vunpack.c.l.b16 %v1586
        %v1595 = vpack.c.b16 %v1592, %v1591
        %v1596 = vpack.c.b16 %v1594, %v1593
        %v1600 = vsel %vm413, %v1582, 0
        %1602 = vmatprep.subr.bf16.mxu0 0
        %1603 = vmatpush1.bf16.msra.mxu0 0
        %1604 = vmatprep.subr.bf16.mxu0 0
        %1605 = vmatpush1.bf16.msra.mxu0 0
        %1606 = vmatprep.subr.bf16.mxu0 0
        %1607 = vmatpush1.bf16.msra.mxu0 0
        %1608 = vmatprep.subr.bf16.mxu0 0
        %1609 = vmatpush1.bf16.msra.mxu0 0
        %1610 = vmatprep.subr.bf16.mxu0 0
        %1611 = vmatpush1.bf16.msra.mxu0 0
        %1612 = vmatprep.subr.bf16.mxu0 0
        %1613 = vmatpush1.bf16.msra.mxu0 0
        %1614 = vmatprep.subr.bf16.mxu0 0
        %1615 = vmatpush1.bf16.msra.mxu0 %v1596
        %1616 = vmatprep.subr.bf16.mxu0 0
        %1617 = vmatpush1.bf16.msra.mxu0 %v1595
        %1618 = vmatprep.subr.bf16.mxu0 0
        %1619 = vmatpush2.bf16.msra.mxu0 0
        %1620 = vmatprep.subr.bf16.mxu0 0
        %1621 = vmatpush2.bf16.msra.mxu0 0
        %1622 = vmatprep.subr.bf16.mxu0 0
        %1623 = vmatpush2.bf16.msra.mxu0 0
        %1624 = vmatprep.subr.bf16.mxu0 0
        %1625 = vmatpush2.bf16.msra.mxu0 0
        %1626 = vmatprep.subr.bf16.mxu0 0
        %1627 = vmatpush2.bf16.msra.mxu0 0
        %1628 = vmatprep.subr.bf16.mxu0 0
        %1629 = vmatpush2.bf16.msra.mxu0 0
        %1630 = vmatprep.subr.bf16.mxu0 0
        %1631 = vmatpush2.bf16.msra.mxu0 0
        %1632 = vmatprep.subr.bf16.mxu0 0
        %1633 = vmatpush2.bf16.msra.mxu0 0
        %1634 = vmatprep.mubr.bf16.mxu0 0
        %1635 = vmatmul.mubr.bf16.gmra.mxu0 %v1600
        %v1636 = vpop.f32.mrf.mxu0
        %v1637 = vadd.f32 0.0, %v1636
        %v1638 = vpop.f32.mrf.mxu0
        %v1639 = vpop.f32.mrf.mxu0
        %v1640 = vpop.f32.mrf.mxu0
        %1641 = vdwg.mxu0
        %v1642 = vadd.f32 %v410, %v1637
        %v1643 = vld [vmem:[%s5] sm:$0x1]
        %v1645 = vlaneseq
        %v1646 = vshrl.u32 %v1645, 7
        %v1647 = vsub.s32 0, %v1646
        %v1648 = vrot.slane %v1643, %v1647
        %v1650 = vadd.f32 %v1642, %v1648
        %v1651 = vld [vmem:[%s6] sm:$0x1]
        %v1652 = vld [vmem:[%s7] sm:$0x1]
        %v1653 = vsel %vm413, %v1650, 0.0
        %1654 = vadd.xlane.f32.xlu0 %v1653
        %v1655 = vpop.xlane.xlu0 %1654
        %v1656 = vmul.f32 %v1655, %v417
        %v1657 = vsub.f32 %v1650, %v1656
        %v1658 = vmul.f32 %v1657, %v1657
        %v1659 = vsel %vm413, %v1658, 0.0
        %1660 = vadd.xlane.f32.xlu0 %v1659
        %v1661 = vpop.xlane.xlu0 %1660
        %v1662 = vmul.f32 %v1661, %v417
        %v1663 = vadd.f32 %v1662, 1e-05
        %v1664 = vrsqrt.pop %v1663
        %v1665 = vmul.f32 %v1657, %v1664
        %v1667 = vlaneseq
        %v1668 = vshrl.u32 %v1667, 7
        %v1669 = vsub.s32 0, %v1668
        %v1670 = vrot.slane %v1651, %v1669
        %v1672 = vmul.f32 %v1665, %v1670
        %v1674 = vlaneseq
        %v1675 = vshrl.u32 %v1674, 7
        %v1676 = vsub.s32 0, %v1675
        %v1677 = vrot.slane %v1652, %v1676
        %v1679 = vadd.f32 %v1672, %v1677
        %v1680 = vpack.c.bf16 %v1679, %v1679
        %v1681 = vld [vmem:[%s8] sm:$0xf]
        %v1682 = vld [vmem:[%s8 + $0x4] sm:$0xf]
        %v1683 = vld [vmem:[%s8 + $0x8] sm:$0xf]
        %v1684 = vld [vmem:[%s8 + $0xc] sm:$0xf]
        %v1685 = vld [vmem:[%s9] sm:$0x1]
        %v1687 = vlaneseq
        %v1688 = vshrl.u32 %v1687, 7
        %v1689 = vsub.s32 0, %v1688
        %v1690 = vrot.slane %v1685, %v1689
        %v1696 = vunpack.c.l.b16 %v1681
        %v1697 = vunpack.c.l.b16 %v1682
        %v1698 = vunpack.c.l.b16 %v1683
        %v1699 = vunpack.c.l.b16 %v1684
        %v1700 = vpack.c.b16 %v1697, %v1696
        %v1701 = vpack.c.b16 %v1699, %v1698
        %v1705 = vsel %vm413, %v1680, 0
        %1707 = vmatprep.subr.bf16.mxu0 0
        %1708 = vmatpush1.bf16.msra.mxu0 0
        %1709 = vmatprep.subr.bf16.mxu0 0
        %1710 = vmatpush1.bf16.msra.mxu0 0
        %1711 = vmatprep.subr.bf16.mxu0 0
        %1712 = vmatpush1.bf16.msra.mxu0 0
        %1713 = vmatprep.subr.bf16.mxu0 0
        %1714 = vmatpush1.bf16.msra.mxu0 0
        %1715 = vmatprep.subr.bf16.mxu0 0
        %1716 = vmatpush1.bf16.msra.mxu0 0
        %1717 = vmatprep.subr.bf16.mxu0 0
        %1718 = vmatpush1.bf16.msra.mxu0 0
        %1719 = vmatprep.subr.bf16.mxu0 0
        %1720 = vmatpush1.bf16.msra.mxu0 %v1701
        %1721 = vmatprep.subr.bf16.mxu0 0
        %1722 = vmatpush1.bf16.msra.mxu0 %v1700
        %1723 = vmatprep.subr.bf16.mxu0 0
        %1724 = vmatpush2.bf16.msra.mxu0 0
        %1725 = vmatprep.subr.bf16.mxu0 0
        %1726 = vmatpush2.bf16.msra.mxu0 0
        %1727 = vmatprep.subr.bf16.mxu0 0
        %1728 = vmatpush2.bf16.msra.mxu0 0
        %1729 = vmatprep.subr.bf16.mxu0 0
        %1730 = vmatpush2.bf16.msra.mxu0 0
        %1731 = vmatprep.subr.bf16.mxu0 0
        %1732 = vmatpush2.bf16.msra.mxu0 0
        %1733 = vmatprep.subr.bf16.mxu0 0
        %1734 = vmatpush2.bf16.msra.mxu0 0
        %1735 = vmatprep.subr.bf16.mxu0 0
        %1736 = vmatpush2.bf16.msra.mxu0 0
        %1737 = vmatprep.subr.bf16.mxu0 0
        %1738 = vmatpush2.bf16.msra.mxu0 0
        %1739 = vmatprep.mubr.bf16.mxu0 0
        %1740 = vmatmul.mubr.bf16.gmra.mxu0 %v1705
        %v1741 = vpop.f32.mrf.mxu0
        %v1742 = vadd.f32 %v1690, %v1741
        %v1743 = vpop.f32.mrf.mxu0
        %v1744 = vpop.f32.mrf.mxu0
        %v1745 = vpop.f32.mrf.mxu0
        %1746 = vdwg.mxu0
        %v1747 = vmul.f32 %v1742, 0.5
        %v1748 = vmul.f32 %v1742, 0.044715
        %v1749 = vmul.f32 %v1748, %v1742
        %v1750 = vmul.f32 %v1749, %v1742
        %v1751 = vadd.f32 %v1742, %v1750
        %v1752 = vmul.f32 %v1751, 0.7978846
        %v1753 = vtanh.pop %v1752
        %v1754 = vadd.f32 %v1753, 1.0
        %v1755 = vmul.f32 %v1747, %v1754
        %v1756 = vpack.c.bf16 %v1755, %v1755
        %v1757 = vld [vmem:[%s10] sm:$0xf]
        %v1758 = vld [vmem:[%s10 + $0x4] sm:$0xf]
        %v1759 = vld [vmem:[%s10 + $0x8] sm:$0xf]
        %v1760 = vld [vmem:[%s10 + $0xc] sm:$0xf]
        %v1761 = vld [vmem:[%s10 + $0x10] sm:$0xf]
        %v1762 = vld [vmem:[%s10 + $0x14] sm:$0xf]
        %v1763 = vld [vmem:[%s10 + $0x18] sm:$0xf]
        %v1764 = vld [vmem:[%s10 + $0x1c] sm:$0xf]
        %v1765 = vld [vmem:[%s10 + $0x20] sm:$0xf]
        %v1766 = vld [vmem:[%s10 + $0x24] sm:$0xf]
        %v1767 = vld [vmem:[%s10 + $0x28] sm:$0xf]
        %v1768 = vld [vmem:[%s10 + $0x2c] sm:$0xf]
        %v1769 = vld [vmem:[%s10 + $0x30] sm:$0xf]
        %v1770 = vld [vmem:[%s10 + $0x34] sm:$0xf]
        %v1771 = vld [vmem:[%s10 + $0x38] sm:$0xf]
        %v1772 = vld [vmem:[%s10 + $0x3c] sm:$0xf]
        %v1773 = vld [vmem:[%s11] sm:$0x1]
        %v1775 = vlaneseq
        %v1776 = vshrl.u32 %v1775, 7
        %v1777 = vsub.s32 0, %v1776
        %v1778 = vrot.slane %v1773, %v1777
        %v1796 = vunpack.c.l.b16 %v1757
        %v1797 = vunpack.c.l.b16 %v1758
        %v1798 = vunpack.c.l.b16 %v1759
        %v1799 = vunpack.c.l.b16 %v1760
        %v1800 = vunpack.c.l.b16 %v1761
        %v1801 = vunpack.c.l.b16 %v1762
        %v1802 = vunpack.c.l.b16 %v1763
        %v1803 = vunpack.c.l.b16 %v1764
        %v1804 = vunpack.c.l.b16 %v1765
        %v1805 = vunpack.c.l.b16 %v1766
        %v1806 = vunpack.c.l.b16 %v1767
        %v1807 = vunpack.c.l.b16 %v1768
        %v1808 = vunpack.c.l.b16 %v1769
        %v1809 = vunpack.c.l.b16 %v1770
        %v1810 = vunpack.c.l.b16 %v1771
        %v1811 = vunpack.c.l.b16 %v1772
        %v1812 = vpack.c.b16 %v1797, %v1796
        %v1813 = vpack.c.b16 %v1799, %v1798
        %v1814 = vpack.c.b16 %v1801, %v1800
        %v1815 = vpack.c.b16 %v1803, %v1802
        %v1816 = vpack.c.b16 %v1805, %v1804
        %v1817 = vpack.c.b16 %v1807, %v1806
        %v1818 = vpack.c.b16 %v1809, %v1808
        %v1819 = vpack.c.b16 %v1811, %v1810
        %1828 = vmatprep.subr.bf16.mxu0 0
        %1829 = vmatpush1.bf16.msra.mxu0 %v1819
        %1830 = vmatprep.subr.bf16.mxu0 0
        %1831 = vmatpush1.bf16.msra.mxu0 %v1818
        %1832 = vmatprep.subr.bf16.mxu0 0
        %1833 = vmatpush1.bf16.msra.mxu0 %v1817
        %1834 = vmatprep.subr.bf16.mxu0 0
        %1835 = vmatpush1.bf16.msra.mxu0 %v1816
        %1836 = vmatprep.subr.bf16.mxu0 0
        %1837 = vmatpush1.bf16.msra.mxu0 %v1815
        %1838 = vmatprep.subr.bf16.mxu0 0
        %1839 = vmatpush1.bf16.msra.mxu0 %v1814
        %1840 = vmatprep.subr.bf16.mxu0 0
        %1841 = vmatpush1.bf16.msra.mxu0 %v1813
        %1842 = vmatprep.subr.bf16.mxu0 0
        %1843 = vmatpush1.bf16.msra.mxu0 %v1812
        %1844 = vmatprep.subr.bf16.mxu0 0
        %1845 = vmatpush2.bf16.msra.mxu0 0
        %1846 = vmatprep.subr.bf16.mxu0 0
        %1847 = vmatpush2.bf16.msra.mxu0 0
        %1848 = vmatprep.subr.bf16.mxu0 0
        %1849 = vmatpush2.bf16.msra.mxu0 0
        %1850 = vmatprep.subr.bf16.mxu0 0
        %1851 = vmatpush2.bf16.msra.mxu0 0
        %1852 = vmatprep.subr.bf16.mxu0 0
        %1853 = vmatpush2.bf16.msra.mxu0 0
        %1854 = vmatprep.subr.bf16.mxu0 0
        %1855 = vmatpush2.bf16.msra.mxu0 0
        %1856 = vmatprep.subr.bf16.mxu0 0
        %1857 = vmatpush2.bf16.msra.mxu0 0
        %1858 = vmatprep.subr.bf16.mxu0 0
        %1859 = vmatpush2.bf16.msra.mxu0 0
        %1860 = vmatprep.mubr.bf16.mxu0 0
        %1861 = vmatmul.mubr.bf16.gmra.mxu0 %v1756
        %v1862 = vpop.f32.mrf.mxu0
        %v1863 = vadd.f32 %v1778, %v1862
        %v1864 = vpop.f32.mrf.mxu0
        %v1865 = vpop.f32.mrf.mxu0
        %v1866 = vpop.f32.mrf.mxu0
        %1867 = vdwg.mxu0
        %v1868 = vadd.f32 %v1650, %v1863
        %1869 = vst.msk [vmem:[%s404] sm:$0xff] %vm413, %v1868
        %s1870 = sand.u32 %s291, 1
        %s1871 = scalar_lea.sflag [#allocation3], %s1870
        %s1872 = sand.u32 %s291, 1
        %s1873 = smul.addr %s1872, 8
        %s1874 = scalar_lea.vmem [#allocation2], %s1873
        // Predicated region
        $region69: #{tpu_custom_call.1} parent=67 // pred_check
          %p1875 = pneg %p301
        $region70: #{tpu_custom_call.1} parent=67 // pred_check_branch
          %1877 = sbr.rel (%p1875) target = $region72
        $region71: #{tpu_custom_call.1} parent=67 // pred_region
          %s1879 = ssub.s32 128, 128
          %1880 = vsyncadd %s1871, %s1879
          %s1881 = smul.addr %s26, 128
          %s1882 = scalar_lea.hbm %s12, %s1881
          %s1884 = sshll.u32 %s1874, 4
          %s1885 = int_to_ptr.vmem [resolvable:$true] %s1884
          %1887 = dma.vmem_to_hbm [thread:$0]  %s1885, 128, %s1882, %s1871
        $region72: #{tpu_custom_call.1} parent=67 // pred_fallthru
          _
      $region68: #{tpu_custom_call.1} parent=5 // pred_fallthru
        _
      %p1888 = scmp.le.s32.totalorder 2, %s21
      // Predicated region
      $region73: #{tpu_custom_call.1} parent=5 // pred_check
        %p1889 = pneg %p1888
      $region74: #{tpu_custom_call.1} parent=5 // pred_check_branch
        %1891 = sbr.rel (%p1889) target = $region76
      $region75: #{tpu_custom_call.1} parent=5 // pred_region
        %s1892 = ssub.s32 %s21, 2
        // Predicated region
        $region77: #{tpu_custom_call.1} parent=75 // pred_check
          %p1893 = pneg %p307
        $region78: #{tpu_custom_call.1} parent=75 // pred_check_branch
          %1895 = sbr.rel (%p1893) target = $region80
        $region79: #{tpu_custom_call.1} parent=75 // pred_region
          %s1896 = sand.u32 %s292, 1
          %s1897 = scalar_lea.sflag [#allocation3], %s1896
          %s1898 = sand.u32 %s292, 1
          %s1899 = smul.addr %s1898, 8
          %s1900 = scalar_lea.vmem [#allocation2], %s1899
          %1901 = dma.done %s1897, 128
        $region80: #{tpu_custom_call.1} parent=75 // pred_fallthru
          _
      $region76: #{tpu_custom_call.1} parent=5 // pred_fallthru
        _
    $region6: #{tpu_custom_call.1} parent=1 // loop_footer
      %s25 = sadd.s32 1, %s21
    $region7: #{tpu_custom_call.1} parent=1 // loop_footer_branch
      %20 = sbr.rel target = $region3
    $region8: #{tpu_custom_call.1} parent=1 // loop_exit
      _
    %1902 = vsyncpa [#allocation3], 1
    %s1903 = scalar_lea.sflag [#allocation3], 1
    %1904 = vsyncpa %s1903, 1

// kernel: tpu_custom_call.1
$region0: #{tpu_custom_call.1}
  #allocation0 [shape = 'u32[]', space=smem, size = 0x4, offset = 0x4, fixed_abs, tag = 'smem constant byte address 0x4 - core index']
  #allocation1 [shape = 'u32[144,128]{1,0:T(1,128)}', space=vmem, size = 0x12000, scoped, tag = 'internal scratch']
  %s0 = inlined_call_operand.vmem [shape: f32[2,8,32], index: 0, kind: input, shape index: {}]
  %s1 = inlined_call_operand.vmem [shape: f32[1,32], index: 1, kind: input, shape index: {}]
  %s2 = inlined_call_operand.vmem [shape: f32[1,32], index: 2, kind: input, shape index: {}]
  %s3 = inlined_call_operand.vmem [shape: bf16[32,96], index: 3, kind: input, shape index: {}]
  %s4 = inlined_call_operand.vmem [shape: bf16[32,32], index: 4, kind: input, shape index: {}]
  %s5 = inlined_call_operand.vmem [shape: f32[1,32], index: 5, kind: input, shape index: {}]
  %s6 = inlined_call_operand.vmem [shape: f32[1,32], index: 6, kind: input, shape index: {}]
  %s7 = inlined_call_operand.vmem [shape: f32[1,32], index: 7, kind: input, shape index: {}]
  %s8 = inlined_call_operand.vmem [shape: bf16[32,128], index: 8, kind: input, shape index: {}]
  %s9 = inlined_call_operand.vmem [shape: f32[1,128], index: 9, kind: input, shape index: {}]
  %s10 = inlined_call_operand.vmem [shape: bf16[128,32], index: 10, kind: input, shape index: {}]
  %s11 = inlined_call_operand.vmem [shape: f32[1,32], index: 11, kind: input, shape index: {}]
  %s12 = inlined_call_operand.hbm [shape: f32[2,8,32], index: 12, kind: output, shape index: {}]
  %s13 = sld [smem:[#allocation0]]
  $region81: #{tpu_custom_call.1} parent=0
    _
  %s15 = ssub.s32 1, %s13
  %s16 = scalar_select 0, %s15, %s13
  $region1: #{tpu_custom_call.1} parent=0
    #allocation2 [shape = 'u8[8192]{0}', space=vmem, size = 0x2000, scoped, tag = 'output window, operand 0']
    #allocation3 [shape = 's32[2]{0}', space=sflag, size = 0x8, scoped, tag = 'scoped memory for tpu_custom_call.1']
    %17 = vsyncpa [#allocation3], 0
    %s18 = scalar_lea.sflag [#allocation3], 1
    %19 = vsyncpa %s18, 0
    loop: start=0, step=1, limit=4
    $region2: #{tpu_custom_call.1} parent=1 // loop_pre_header
      _
    $region3: #{tpu_custom_call.1} parent=1 // loop_header
      %s21 = sphi 0, %s25
      %p22 = scmp.ge.s32.totalorder %s21, 4
      %s31 = sphi 0, %s33
      %s34 = sphi 0, %s31
      %s35 = sphi 0, %s34
      %s51 = sphi 0, %s35
      %s55 = sphi 0, %s55
      %s57 = sphi 0, %s55
      %s58 = sphi 0, %s57
      %s72 = sphi 0, %s58
      %s76 = sphi 0, %s76
      %s78 = sphi 0, %s76
      %s79 = sphi 0, %s78
      %s93 = sphi 0, %s79
      %s97 = sphi 0, %s97
      %s99 = sphi 0, %s97
      %s100 = sphi 0, %s99
      %s114 = sphi 0, %s100
      %s118 = sphi 0, %s118
      %s120 = sphi 0, %s118
      %s121 = sphi 0, %s120
      %s135 = sphi 0, %s121
      %s139 = sphi 0, %s139
      %s141 = sphi 0, %s139
      %s142 = sphi 0, %s141
      %s156 = sphi 0, %s142
      %s160 = sphi 0, %s160
      %s162 = sphi 0, %s160
      %s163 = sphi 0, %s162
      %s177 = sphi 0, %s163
      %s181 = sphi 0, %s181
      %s183 = sphi 0, %s181
      %s184 = sphi 0, %s183
      %s198 = sphi 0, %s184
      %s202 = sphi 0, %s202
      %s204 = sphi 0, %s202
      %s205 = sphi 0, %s204
      %s219 = sphi 0, %s205
      %s223 = sphi 0, %s223
      %s225 = sphi 0, %s223
      %s226 = sphi 0, %s225
      %s240 = sphi 0, %s226
      %s244 = sphi 0, %s244
      %s246 = sphi 0, %s244
      %s247 = sphi 0, %s246
      %s261 = sphi 0, %s247
      %s265 = sphi 0, %s265
      %s267 = sphi 0, %s265
      %s268 = sphi 0, %s267
      %s282 = sphi 0, %s268
      %s288 = sphi 0, %s290
      %s291 = sphi 0, %s288
      %s292 = sphi 0, %s291
      %s308 = sphi 0, %s292
    $region4: #{tpu_custom_call.1} parent=1 // loop_header_branch
      %24 = sbr.rel (%p22) target = $region8
    $region5: #{tpu_custom_call.1} parent=1 // loop_body
      %s26 = ssub.s32 %s21, 1
      %s27 = ssub.s32 %s21, 2
      %s28 = sadd.s32 %s21, 1
      %s29 = ssub.s32 %s21, %s28
      %p30 = scmp.eq.s32.totalorder %s29, 0
      %s32 = sadd.s32 %s31, 1
      %s33 = scalar_select %p30, %s31, %s32
      %p36 = pneg %p30
      %p37 = scmp.eq.s32.totalorder %s21, 1
      %p38 = por %p36, %p37
      %p39 = scmp.ne.s32.totalorder %s31, %s34
      %p40 = scmp.eq.s32.totalorder %s21, 0
      %p41 = por %p39, %p40
      %p42 = scmp.ne.s32.totalorder %s31, %s34
      %p43 = scmp.eq.s32.totalorder %s26, 1
      %p44 = por %p42, %p43
      %p45 = scmp.ne.s32.totalorder %s34, %s35
      %p46 = scmp.eq.s32.totalorder %s26, 0
      %p47 = por %p45, %p46
      %p48 = scmp.ne.s32.totalorder %s34, %s35
      %p49 = scmp.eq.s32.totalorder %s27, 1
      %p50 = por %p48, %p49
      %p52 = scmp.ne.s32.totalorder %s35, %s51
      %p53 = scmp.eq.s32.totalorder %s27, 0
      %p54 = por %p52, %p53
      %s56 = sadd.s32 %s55, 1
      %p59 = scmp.eq.s32.totalorder %s21, 1
      %p60 = scmp.ne.s32.totalorder %s55, %s57
      %p61 = scmp.eq.s32.totalorder %s21, 0
      %p62 = por %p60, %p61
      %p63 = scmp.ne.s32.totalorder %s55, %s57
      %p64 = scmp.eq.s32.totalorder %s26, 1
      %p65 = por %p63, %p64
      %p66 = scmp.ne.s32.totalorder %s57, %s58
      %p67 = scmp.eq.s32.totalorder %s26, 0
      %p68 = por %p66, %p67
      %p69 = scmp.ne.s32.totalorder %s57, %s58
      %p70 = scmp.eq.s32.totalorder %s27, 1
      %p71 = por %p69, %p70
      %p73 = scmp.ne.s32.totalorder %s58, %s72
      %p74 = scmp.eq.s32.totalorder %s27, 0
      %p75 = por %p73, %p74
      %s77 = sadd.s32 %s76, 1
      %p80 = scmp.eq.s32.totalorder %s21, 1
      %p81 = scmp.ne.s32.totalorder %s76, %s78
      %p82 = scmp.eq.s32.totalorder %s21, 0
      %p83 = por %p81, %p82
      %p84 = scmp.ne.s32.totalorder %s76, %s78
      %p85 = scmp.eq.s32.totalorder %s26, 1
      %p86 = por %p84, %p85
      %p87 = scmp.ne.s32.totalorder %s78, %s79
      %p88 = scmp.eq.s32.totalorder %s26, 0
      %p89 = por %p87, %p88
      %p90 = scmp.ne.s32.totalorder %s78, %s79
      %p91 = scmp.eq.s32.totalorder %s27, 1
      %p92 = por %p90, %p91
      %p94 = scmp.ne.s32.totalorder %s79, %s93
      %p95 = scmp.eq.s32.totalorder %s27, 0
      %p96 = por %p94, %p95
      %s98 = sadd.s32 %s97, 1
      %p101 = scmp.eq.s32.totalorder %s21, 1
      %p102 = scmp.ne.s32.totalorder %s97, %s99
      %p103 = scmp.eq.s32.totalorder %s21, 0
      %p104 = por %p102, %p103
      %p105 = scmp.ne.s32.totalorder %s97, %s99
      %p106 = scmp.eq.s32.totalorder %s26, 1
      %p107 = por %p105, %p106
      %p108 = scmp.ne.s32.totalorder %s99, %s100
      %p109 = scmp.eq.s32.totalorder %s26, 0
      %p110 = por %p108, %p109
      %p111 = scmp.ne.s32.totalorder %s99, %s100
      %p112 = scmp.eq.s32.totalorder %s27, 1
      %p113 = por %p111, %p112
      %p115 = scmp.ne.s32.totalorder %s100, %s114
      %p116 = scmp.eq.s32.totalorder %s27, 0
      %p117 = por %p115, %p116
      %s119 = sadd.s32 %s118, 1
      %p122 = scmp.eq.s32.totalorder %s21, 1
      %p123 = scmp.ne.s32.totalorder %s118, %s120
      %p124 = scmp.eq.s32.totalorder %s21, 0
      %p125 = por %p123, %p124
      %p126 = scmp.ne.s32.totalorder %s118, %s120
      %p127 = scmp.eq.s32.totalorder %s26, 1
      %p128 = por %p126, %p127
      %p129 = scmp.ne.s32.totalorder %s120, %s121
      %p130 = scmp.eq.s32.totalorder %s26, 0
      %p131 = por %p129, %p130
      %p132 = scmp.ne.s32.totalorder %s120, %s121
      %p133 = scmp.eq.s32.totalorder %s27, 1
      %p134 = por %p132, %p133
      %p136 = scmp.ne.s32.totalorder %s121, %s135
      %p137 = scmp.eq.s32.totalorder %s27, 0
      %p138 = por %p136, %p137
      %s140 = sadd.s32 %s139, 1
      %p143 = scmp.eq.s32.totalorder %s21, 1
      %p144 = scmp.ne.s32.totalorder %s139, %s141
      %p145 = scmp.eq.s32.totalorder %s21, 0
      %p146 = por %p144, %p145
      %p147 = scmp.ne.s32.totalorder %s139, %s141
      %p148 = scmp.eq.s32.totalorder %s26, 1
      %p149 = por %p147, %p148
      %p150 = scmp.ne.s32.totalorder %s141, %s142
      %p151 = scmp.eq.s32.totalorder %s26, 0
      %p152 = por %p150, %p151
      %p153 = scmp.ne.s32.totalorder %s141, %s142
      %p154 = scmp.eq.s32.totalorder %s27, 1
      %p155 = por %p153, %p154
      %p157 = scmp.ne.s32.totalorder %s142, %s156
      %p158 = scmp.eq.s32.totalorder %s27, 0
      %p159 = por %p157, %p158
      %s161 = sadd.s32 %s160, 1
      %p164 = scmp.eq.s32.totalorder %s21, 1
      %p165 = scmp.ne.s32.totalorder %s160, %s162
      %p166 = scmp.eq.s32.totalorder %s21, 0
      %p167 = por %p165, %p166
      %p168 = scmp.ne.s32.totalorder %s160, %s162
      %p169 = scmp.eq.s32.totalorder %s26, 1
      %p170 = por %p168, %p169
      %p171 = scmp.ne.s32.totalorder %s162, %s163
      %p172 = scmp.eq.s32.totalorder %s26, 0
      %p173 = por %p171, %p172
      %p174 = scmp.ne.s32.totalorder %s162, %s163
      %p175 = scmp.eq.s32.totalorder %s27, 1
      %p176 = por %p174, %p175
      %p178 = scmp.ne.s32.totalorder %s163, %s177
      %p179 = scmp.eq.s32.totalorder %s27, 0
      %p180 = por %p178, %p179
      %s182 = sadd.s32 %s181, 1
      %p185 = scmp.eq.s32.totalorder %s21, 1
      %p186 = scmp.ne.s32.totalorder %s181, %s183
      %p187 = scmp.eq.s32.totalorder %s21, 0
      %p188 = por %p186, %p187
      %p189 = scmp.ne.s32.totalorder %s181, %s183
      %p190 = scmp.eq.s32.totalorder %s26, 1
      %p191 = por %p189, %p190
      %p192 = scmp.ne.s32.totalorder %s183, %s184
      %p193 = scmp.eq.s32.totalorder %s26, 0
      %p194 = por %p192, %p193
      %p195 = scmp.ne.s32.totalorder %s183, %s184
      %p196 = scmp.eq.s32.totalorder %s27, 1
      %p197 = por %p195, %p196
      %p199 = scmp.ne.s32.totalorder %s184, %s198
      %p200 = scmp.eq.s32.totalorder %s27, 0
      %p201 = por %p199, %p200
      %s203 = sadd.s32 %s202, 1
      %p206 = scmp.eq.s32.totalorder %s21, 1
      %p207 = scmp.ne.s32.totalorder %s202, %s204
      %p208 = scmp.eq.s32.totalorder %s21, 0
      %p209 = por %p207, %p208
      %p210 = scmp.ne.s32.totalorder %s202, %s204
      %p211 = scmp.eq.s32.totalorder %s26, 1
      %p212 = por %p210, %p211
      %p213 = scmp.ne.s32.totalorder %s204, %s205
      %p214 = scmp.eq.s32.totalorder %s26, 0
      %p215 = por %p213, %p214
      %p216 = scmp.ne.s32.totalorder %s204, %s205
      %p217 = scmp.eq.s32.totalorder %s27, 1
      %p218 = por %p216, %p217
      %p220 = scmp.ne.s32.totalorder %s205, %s219
      %p221 = scmp.eq.s32.totalorder %s27, 0
      %p222 = por %p220, %p221
      %s224 = sadd.s32 %s223, 1
      %p227 = scmp.eq.s32.totalorder %s21, 1
      %p228 = scmp.ne.s32.totalorder %s223, %s225
      %p229 = scmp.eq.s32.totalorder %s21, 0
      %p230 = por %p228, %p229
      %p231 = scmp.ne.s32.totalorder %s223, %s225
      %p232 = scmp.eq.s32.totalorder %s26, 1
      %p233 = por %p231, %p232
      %p234 = scmp.ne.s32.totalorder %s225, %s226
      %p235 = scmp.eq.s32.totalorder %s26, 0
      %p236 = por %p234, %p235
      %p237 = scmp.ne.s32.totalorder %s225, %s226
      %p238 = scmp.eq.s32.totalorder %s27, 1
      %p239 = por %p237, %p238
      %p241 = scmp.ne.s32.totalorder %s226, %s240
      %p242 = scmp.eq.s32.totalorder %s27, 0
      %p243 = por %p241, %p242
      %s245 = sadd.s32 %s244, 1
      %p248 = scmp.eq.s32.totalorder %s21, 1
      %p249 = scmp.ne.s32.totalorder %s244, %s246
      %p250 = scmp.eq.s32.totalorder %s21, 0
      %p251 = por %p249, %p250
      %p252 = scmp.ne.s32.totalorder %s244, %s246
      %p253 = scmp.eq.s32.totalorder %s26, 1
      %p254 = por %p252, %p253
      %p255 = scmp.ne.s32.totalorder %s246, %s247
      %p256 = scmp.eq.s32.totalorder %s26, 0
      %p257 = por %p255, %p256
      %p258 = scmp.ne.s32.totalorder %s246, %s247
      %p259 = scmp.eq.s32.totalorder %s27, 1
      %p260 = por %p258, %p259
      %p262 = scmp.ne.s32.totalorder %s247, %s261
      %p263 = scmp.eq.s32.totalorder %s27, 0
      %p264 = por %p262, %p263
      %s266 = sadd.s32 %s265, 1
      %p269 = scmp.eq.s32.totalorder %s21, 1
      %p270 = scmp.ne.s32.totalorder %s265, %s267
      %p271 = scmp.eq.s32.totalorder %s21, 0
      %p272 = por %p270, %p271
      %p273 = scmp.ne.s32.totalorder %s265, %s267
      %p274 = scmp.eq.s32.totalorder %s26, 1
      %p275 = por %p273, %p274
      %p276 = scmp.ne.s32.totalorder %s267, %s268
      %p277 = scmp.eq.s32.totalorder %s26, 0
      %p278 = por %p276, %p277
      %p279 = scmp.ne.s32.totalorder %s267, %s268
      %p280 = scmp.eq.s32.totalorder %s27, 1
      %p281 = por %p279, %p280
      %p283 = scmp.ne.s32.totalorder %s268, %s282
      %p284 = scmp.eq.s32.totalorder %s27, 0
      %p285 = por %p283, %p284
      %s286 = ssub.s32 %s21, %s28
      %p287 = scmp.eq.s32.totalorder %s286, 0
      %s289 = sadd.s32 %s288, 1
      %s290 = scalar_select %p287, %s288, %s289
      %p293 = pneg %p287
      %p294 = scmp.eq.s32.totalorder %s21, 1
      %p295 = por %p293, %p294
      %p296 = scmp.ne.s32.totalorder %s288, %s291
      %p297 = scmp.eq.s32.totalorder %s21, 0
      %p298 = por %p296, %p297
      %p299 = scmp.ne.s32.totalorder %s288, %s291
      %p300 = scmp.eq.s32.totalorder %s26, 1
      %p301 = por %p299, %p300
      %p302 = scmp.ne.s32.totalorder %s291, %s292
      %p303 = scmp.eq.s32.totalorder %s26, 0
      %p304 = por %p302, %p303
      %p305 = scmp.ne.s32.totalorder %s291, %s292
      %p306 = scmp.eq.s32.totalorder %s27, 1
      %p307 = por %p305, %p306
      %p309 = scmp.ne.s32.totalorder %s292, %s308
      %p310 = scmp.eq.s32.totalorder %s27, 0
      %p311 = por %p309, %p310
      %p312 = scmp.le.s32.totalorder 1, %s21
      %p313 = scmp.lt.s32.totalorder %s21, 3
      %p314 = pnand %p312, %p313
      %p315 = pneg %p314
      // Predicated region
      $region9: #{tpu_custom_call.1} parent=5 // pred_check
        _
      $region10: #{tpu_custom_call.1} parent=5 // pred_check_branch
        %317 = sbr.rel (%p314) target = $region12
      $region11: #{tpu_custom_call.1} parent=5 // pred_region
        %s318 = ssub.s32 %s21, 1
        // Predicated region
        $region13: #{tpu_custom_call.1} parent=11 // pred_check
          %p319 = pneg %p68
        $region14: #{tpu_custom_call.1} parent=11 // pred_check_branch
          %321 = sbr.rel (%p319) target = $region16
        $region15: #{tpu_custom_call.1} parent=11 // pred_region
          _
        $region16: #{tpu_custom_call.1} parent=11 // pred_fallthru
          _
        // Predicated region
        $region17: #{tpu_custom_call.1} parent=11 // pred_check
          %p322 = pneg %p89
        $region18: #{tpu_custom_call.1} parent=11 // pred_check_branch
          %324 = sbr.rel (%p322) target = $region20
        $region19: #{tpu_custom_call.1} parent=11 // pred_region
          _
        $region20: #{tpu_custom_call.1} parent=11 // pred_fallthru
          _
        // Predicated region
        $region21: #{tpu_custom_call.1} parent=11 // pred_check
          %p325 = pneg %p110
        $region22: #{tpu_custom_call.1} parent=11 // pred_check_branch
          %327 = sbr.rel (%p325) target = $region24
        $region23: #{tpu_custom_call.1} parent=11 // pred_region
          _
        $region24: #{tpu_custom_call.1} parent=11 // pred_fallthru
          _
        // Predicated region
        $region25: #{tpu_custom_call.1} parent=11 // pred_check
          %p328 = pneg %p131
        $region26: #{tpu_custom_call.1} parent=11 // pred_check_branch
          %330 = sbr.rel (%p328) target = $region28
        $region27: #{tpu_custom_call.1} parent=11 // pred_region
          _
        $region28: #{tpu_custom_call.1} parent=11 // pred_fallthru
          _
        // Predicated region
        $region29: #{tpu_custom_call.1} parent=11 // pred_check
          %p331 = pneg %p152
        $region30: #{tpu_custom_call.1} parent=11 // pred_check_branch
          %333 = sbr.rel (%p331) target = $region32
        $region31: #{tpu_custom_call.1} parent=11 // pred_region
          _
        $region32: #{tpu_custom_call.1} parent=11 // pred_fallthru
          _
        // Predicated region
        $region33: #{tpu_custom_call.1} parent=11 // pred_check
          %p334 = pneg %p173
        $region34: #{tpu_custom_call.1} parent=11 // pred_check_branch
          %336 = sbr.rel (%p334) target = $region36
        $region35: #{tpu_custom_call.1} parent=11 // pred_region
          _
        $region36: #{tpu_custom_call.1} parent=11 // pred_fallthru
          _
        // Predicated region
        $region37: #{tpu_custom_call.1} parent=11 // pred_check
          %p337 = pneg %p194
        $region38: #{tpu_custom_call.1} parent=11 // pred_check_branch
          %339 = sbr.rel (%p337) target = $region40
        $region39: #{tpu_custom_call.1} parent=11 // pred_region
          _
        $region40: #{tpu_custom_call.1} parent=11 // pred_fallthru
          _
        // Predicated region
        $region41: #{tpu_custom_call.1} parent=11 // pred_check
          %p340 = pneg %p215
        $region42: #{tpu_custom_call.1} parent=11 // pred_check_branch
          %342 = sbr.rel (%p340) target = $region44
        $region43: #{tpu_custom_call.1} parent=11 // pred_region
          _
        $region44: #{tpu_custom_call.1} parent=11 // pred_fallthru
          _
        // Predicated region
        $region45: #{tpu_custom_call.1} parent=11 // pred_check
          %p343 = pneg %p236
        $region46: #{tpu_custom_call.1} parent=11 // pred_check_branch
          %345 = sbr.rel (%p343) target = $region48
        $region47: #{tpu_custom_call.1} parent=11 // pred_region
          _
        $region48: #{tpu_custom_call.1} parent=11 // pred_fallthru
          _
        // Predicated region
        $region49: #{tpu_custom_call.1} parent=11 // pred_check
          %p346 = pneg %p257
        $region50: #{tpu_custom_call.1} parent=11 // pred_check_branch
          %348 = sbr.rel (%p346) target = $region52
        $region51: #{tpu_custom_call.1} parent=11 // pred_region
          _
        $region52: #{tpu_custom_call.1} parent=11 // pred_fallthru
          _
        // Predicated region
        $region53: #{tpu_custom_call.1} parent=11 // pred_check
          %p349 = pneg %p278
        $region54: #{tpu_custom_call.1} parent=11 // pred_check_branch
          %351 = sbr.rel (%p349) target = $region56
        $region55: #{tpu_custom_call.1} parent=11 // pred_region
          _
        $region56: #{tpu_custom_call.1} parent=11 // pred_fallthru
          _
      $region12: #{tpu_custom_call.1} parent=5 // pred_fallthru
        _
      %p352 = scmp.lt.s32.totalorder %s21, 2
      // Predicated region
      $region57: #{tpu_custom_call.1} parent=5 // pred_check
        %p353 = pneg %p352
      $region58: #{tpu_custom_call.1} parent=5 // pred_check_branch
        %355 = sbr.rel (%p353) target = $region60
      $region59: #{tpu_custom_call.1} parent=5 // pred_region
        // Predicated region
        $region61: #{tpu_custom_call.1} parent=59 // pred_check
          %p356 = pneg %p41
        $region62: #{tpu_custom_call.1} parent=59 // pred_check_branch
          %358 = sbr.rel (%p356) target = $region64
        $region63: #{tpu_custom_call.1} parent=59 // pred_region
          %p359 = scmp.lt.s32.totalorder %s21, 1
          %s360 = scalar_select %p359, %s21, 1
          %s361 = smul.addr %s360, 8
          %s362 = scalar_lea.vmem %s0, %s361
        $region64: #{tpu_custom_call.1} parent=59 // pred_fallthru
          _
      $region60: #{tpu_custom_call.1} parent=5 // pred_fallthru
        _
      %p363 = scmp.le.s32.totalorder 1, %s21
      %p364 = scmp.lt.s32.totalorder %s21, 3
      %p365 = pnand %p363, %p364
      %p366 = pneg %p365
      // Predicated region
      $region65: #{tpu_custom_call.1} parent=5 // pred_check
        _
      $region66: #{tpu_custom_call.1} parent=5 // pred_check_branch
        %368 = sbr.rel (%p365) target = $region68
      $region67: #{tpu_custom_call.1} parent=5 // pred_region
        %s369 = ssub.s32 %s21, 1
        %p370 = scmp.lt.s32.totalorder %s26, 1
        %s371 = scalar_select %p370, %s26, 1
        %s372 = smul.addr %s371, 8
        %s373 = scalar_lea.vmem %s0, %s372
        %p374 = pneg %p47
        %p375 = pneg %p44
        %p376 = pneg %p68
        %p377 = pneg %p65
        %p378 = pneg %p89
        %p379 = pneg %p86
        %p380 = pneg %p110
        %p381 = pneg %p107
        %p382 = pneg %p131
        %p383 = pneg %p128
        %p384 = pneg %p152
        %p385 = pneg %p149
        %p386 = pneg %p173
        %p387 = pneg %p170
        %p388 = pneg %p194
        %p389 = pneg %p191
        %p390 = pneg %p215
        %p391 = pneg %p212
        %p392 = pneg %p236
        %p393 = pneg %p233
        %p394 = pneg %p257
        %p395 = pneg %p254
        %p396 = pneg %p278
        %p397 = pneg %p275
        %p398 = pneg %p304
        %p399 = pneg %p301
        %s400 = sand.u32 %s291, 1
        %s401 = scalar_lea.sflag [#allocation3], %s400
        %s402 = sand.u32 %s291, 1
        %s403 = smul.addr %s402, 8
        %s404 = scalar_lea.vmem [#allocation2], %s403
        %p405 = scmp.lt.s32.totalorder %s26, 1
        %s406 = scalar_select %p405, %s26, 1
        %s407 = smul.addr %s406, 8
        %s408 = scalar_lea.vmem %s0, %s407
        %v410 = vld [vmem:[%s408] sm:$0xff]
        %v411 = vld [vmem:[%s1] sm:$0x1]
        %v412 = vld [vmem:[%s2] sm:$0x1]
        %vm413 = vcmask 261120
        %v414 = vsel %vm413, %v410, 0.0
        %415 = vadd.xlane.f32.xlu0 %v414
        %v416 = vpop.xlane.xlu0 %415
        %v417 = vrcp.pop 32.0
        %v418 = vmul.f32 %v416, %v417
        %v419 = vsub.f32 %v410, %v418
        %v420 = vmul.f32 %v419, %v419
        %v421 = vsel %vm413, %v420, 0.0
        %422 = vadd.xlane.f32.xlu0 %v421
        %v423 = vpop.xlane.xlu0 %422
        %v424 = vmul.f32 %v423, %v417
        %v425 = vadd.f32 %v424, 1e-05
        %v426 = vrsqrt.pop %v425
        %v427 = vmul.f32 %v419, %v426
        %v429 = vlaneseq
        %v430 = vshrl.u32 %v429, 7
        %v431 = vsub.s32 0, %v430
        %v432 = vrot.slane %v411, %v431
        %v434 = vmul.f32 %v427, %v432
        %v436 = vlaneseq
        %v437 = vshrl.u32 %v436, 7
        %v438 = vsub.s32 0, %v437
        %v439 = vrot.slane %v412, %v438
        %v441 = vadd.f32 %v434, %v439
        %v442 = vpack.c.bf16 %v441, %v441
        %v443 = vld [vmem:[%s3] sm:$0xf]
        %v444 = vld [vmem:[%s3 + $0x4] sm:$0xf]
        %v445 = vld [vmem:[%s3 + $0x8] sm:$0xf]
        %v446 = vld [vmem:[%s3 + $0xc] sm:$0xf]
        %v451 = vunpack.c.l.b16 %v443
        %v452 = vunpack.c.l.b16 %v444
        %v453 = vunpack.c.l.b16 %v445
        %v454 = vunpack.c.l.b16 %v446
        %v455 = vpack.c.b16 %v452, %v451
        %v456 = vpack.c.b16 %v454, %v453
        %v460 = vsel %vm413, %v442, 0
        %462 = vmatprep.subr.bf16.mxu0 0
        %463 = vmatpush1.bf16.msra.mxu0 0
        %464 = vmatprep.subr.bf16.mxu0 0
        %465 = vmatpush1.bf16.msra.mxu0 0
        %466 = vmatprep.subr.bf16.mxu0 0
        %467 = vmatpush1.bf16.msra.mxu0 0
        %468 = vmatprep.subr.bf16.mxu0 0
        %469 = vmatpush1.bf16.msra.mxu0 0
        %470 = vmatprep.subr.bf16.mxu0 0
        %471 = vmatpush1.bf16.msra.mxu0 0
        %472 = vmatprep.subr.bf16.mxu0 0
        %473 = vmatpush1.bf16.msra.mxu0 0
        %474 = vmatprep.subr.bf16.mxu0 0
        %475 = vmatpush1.bf16.msra.mxu0 %v456
        %476 = vmatprep.subr.bf16.mxu0 0
        %477 = vmatpush1.bf16.msra.mxu0 %v455
        %478 = vmatprep.subr.bf16.mxu0 0
        %479 = vmatpush2.bf16.msra.mxu0 0
        %480 = vmatprep.subr.bf16.mxu0 0
        %481 = vmatpush2.bf16.msra.mxu0 0
        %482 = vmatprep.subr.bf16.mxu0 0
        %483 = vmatpush2.bf16.msra.mxu0 0
        %484 = vmatprep.subr.bf16.mxu0 0
        %485 = vmatpush2.bf16.msra.mxu0 0
        %486 = vmatprep.subr.bf16.mxu0 0
        %487 = vmatpush2.bf16.msra.mxu0 0
        %488 = vmatprep.subr.bf16.mxu0 0
        %489 = vmatpush2.bf16.msra.mxu0 0
        %490 = vmatprep.subr.bf16.mxu0 0
        %491 = vmatpush2.bf16.msra.mxu0 0
        %492 = vmatprep.subr.bf16.mxu0 0
        %493 = vmatpush2.bf16.msra.mxu0 0
        %494 = vmatprep.mubr.bf16.mxu0 0
        %495 = vmatmul.mubr.bf16.gmra.mxu0 %v460
        %v496 = vpop.f32.mrf.mxu0
        %v497 = vadd.f32 0.0, %v496
        %v498 = vpop.f32.mrf.mxu0
        %v499 = vpop.f32.mrf.mxu0
        %v500 = vpop.f32.mrf.mxu0
        %501 = vdwg.mxu0
        %v502 = vpack.c.bf16 %v497, %v497
        %504 = vrot.lane.b32.xlu0 %v502, 120
        %v505 = vpop.permute.xlu0 %504
        %506 = vrot.lane.b32.xlu0 %v502, 112
        %v507 = vpop.permute.xlu0 %506
        %508 = vrot.lane.b32.xlu0 %v502, 104
        %v509 = vpop.permute.xlu0 %508
        %v511 = vunpack.c.l.s4 1983009808
        %v512 = vunpack.c.0.s8 %v511
        %v513 = vlaneseq
        %v514 = vshrl.u32 %v513, 7
        %v515 = vsub.s32 %v512, %v514
        %v516 = vrot.slane %v502, %v515
        %v519 = vunpack.c.l.s4 1983009808
        %v520 = vunpack.c.0.s8 %v519
        %v521 = vlaneseq
        %v522 = vshrl.u32 %v521, 7
        %v523 = vsub.s32 %v520, %v522
        %v524 = vrot.slane %v507, %v523
        %v525 = vcombine.low %v516, %v524
        %v526 = vcombine.high %v516, %v524
        %v528 = vunpack.c.l.s4 1934713408
        %v529 = vunpack.c.0.s8 %v528
        %v530 = vlaneseq
        %v531 = vshrl.u32 %v530, 7
        %v532 = vsub.s32 %v529, %v531
        %v533 = vrot.slane %v525, %v532
        %v535 = vunpack.c.l.s4 1934713408
        %v536 = vunpack.c.0.s8 %v535
        %v537 = vlaneseq
        %v538 = vshrl.u32 %v537, 7
        %v539 = vsub.s32 %v536, %v538
        %v540 = vrot.slane %v526, %v539
        %v541 = vcombine.high %v533, 0
        %v542 = vcombine.high %v540, 0
        %v545 = vunpack.c.l.s4 1983009808
        %v546 = vunpack.c.0.s8 %v545
        %v547 = vlaneseq
        %v548 = vshrl.u32 %v547, 7
        %v549 = vsub.s32 %v546, %v548
        %v550 = vrot.slane %v505, %v549
        %v553 = vunpack.c.l.s4 1983009808
        %v554 = vunpack.c.0.s8 %v553
        %v555 = vlaneseq
        %v556 = vshrl.u32 %v555, 7
        %v557 = vsub.s32 %v554, %v556
        %v558 = vrot.slane %v509, %v557
        %v559 = vcombine.low %v550, %v558
        %v560 = vcombine.high %v550, %v558
        %v562 = vunpack.c.l.s4 1934713408
        %v563 = vunpack.c.0.s8 %v562
        %v564 = vlaneseq
        %v565 = vshrl.u32 %v564, 7
        %v566 = vsub.s32 %v563, %v565
        %v567 = vrot.slane %v559, %v566
        %v569 = vunpack.c.l.s4 1934713408
        %v570 = vunpack.c.0.s8 %v569
        %v571 = vlaneseq
        %v572 = vshrl.u32 %v571, 7
        %v573 = vsub.s32 %v570, %v572
        %v574 = vrot.slane %v560, %v573
        %v575 = vcombine.high %v567, 0
        %v576 = vcombine.high %v574, 0
        %v579 = vpack.i.b16 %v567, %v533
        %v581 = vshrl.u32 %v533, 16
        %v582 = vshrl.u32 %v567, 16
        %v583 = vpack.i.b16 %v582, %v581
        %v587 = vpack.i.b16 %v575, %v541
        %v589 = vshrl.u32 %v541, 16
        %v590 = vshrl.u32 %v575, 16
        %v591 = vpack.i.b16 %v590, %v589
        %v595 = vpack.i.b16 %v574, %v540
        %v597 = vshrl.u32 %v540, 16
        %v598 = vshrl.u32 %v574, 16
        %v599 = vpack.i.b16 %v598, %v597
        %v603 = vpack.i.b16 %v576, %v542
        %v605 = vshrl.u32 %v542, 16
        %v606 = vshrl.u32 %v576, 16
        %v607 = vpack.i.b16 %v606, %v605
        %v609 = vcombine.low %v579, %v595
        %v611 = vunpack.c.l.s4 1983009808
        %v612 = vunpack.c.0.s8 %v611
        %v613 = vlaneseq
        %v614 = vshrl.u32 %v613, 7
        %v615 = vsub.s32 %v612, %v614
        %v616 = vrot.slane %v609, %v615
        %v617 = vcombine.low %v587, %v603
        %v619 = vunpack.c.l.s4 1983009808
        %v620 = vunpack.c.0.s8 %v619
        %v621 = vlaneseq
        %v622 = vshrl.u32 %v621, 7
        %v623 = vsub.s32 %v620, %v622
        %v624 = vrot.slane %v617, %v623
        %v625 = vcombine.low %v616, %v624
        %v627 = vunpack.c.l.s4 1934713408
        %v628 = vunpack.c.0.s8 %v627
        %v629 = vlaneseq
        %v630 = vshrl.u32 %v629, 7
        %v631 = vsub.s32 %v628, %v630
        %v632 = vrot.slane %v625, %v631
        %v633 = vcombine.high %v632, 0
        %v634 = vcombine.low %v583, %v599
        %v636 = vunpack.c.l.s4 1983009808
        %v637 = vunpack.c.0.s8 %v636
        %v638 = vlaneseq
        %v639 = vshrl.u32 %v638, 7
        %v640 = vsub.s32 %v637, %v639
        %v641 = vrot.slane %v634, %v640
        %v642 = vcombine.low %v591, %v607
        %v644 = vunpack.c.l.s4 1983009808
        %v645 = vunpack.c.0.s8 %v644
        %v646 = vlaneseq
        %v647 = vshrl.u32 %v646, 7
        %v648 = vsub.s32 %v645, %v647
        %v649 = vrot.slane %v642, %v648
        %v650 = vcombine.low %v641, %v649
        %v652 = vunpack.c.l.s4 1934713408
        %v653 = vunpack.c.0.s8 %v652
        %v654 = vlaneseq
        %v655 = vshrl.u32 %v654, 7
        %v656 = vsub.s32 %v653, %v655
        %v657 = vrot.slane %v650, %v656
        %v658 = vcombine.high %v657, 0
        %v661 = vpack.i.b16 %v657, %v632
        %v662 = vshrl.u32 %v632, 16
        %v663 = vshrl.u32 %v657, 16
        %v664 = vpack.i.b16 %v663, %v662
        %v667 = vpack.i.b16 %v658, %v633
        %v668 = vshrl.u32 %v633, 16
        %v669 = vshrl.u32 %v658, 16
        %v670 = vpack.i.b16 %v669, %v668
        %671 = vrot.lane.b32.xlu0 %v502, 96
        %v672 = vpop.permute.xlu0 %671
        %673 = vrot.lane.b32.xlu0 %v505, 96
        %v674 = vpop.permute.xlu0 %673
        %675 = vrot.lane.b32.xlu0 %v507, 96
        %v676 = vpop.permute.xlu0 %675
        %677 = vrot.lane.b32.xlu0 %v509, 96
        %v678 = vpop.permute.xlu0 %677
        %v681 = vunpack.c.l.s4 1983009808
        %v682 = vunpack.c.0.s8 %v681
        %v683 = vlaneseq
        %v684 = vshrl.u32 %v683, 7
        %v685 = vsub.s32 %v682, %v684
        %v686 = vrot.slane %v672, %v685
        %v689 = vunpack.c.l.s4 1983009808
        %v690 = vunpack.c.0.s8 %v689
        %v691 = vlaneseq
        %v692 = vshrl.u32 %v691, 7
        %v693 = vsub.s32 %v690, %v692
        %v694 = vrot.slane %v676, %v693
        %v695 = vcombine.low %v686, %v694
        %v696 = vcombine.high %v686, %v694
        %v698 = vunpack.c.l.s4 1934713408
        %v699 = vunpack.c.0.s8 %v698
        %v700 = vlaneseq
        %v701 = vshrl.u32 %v700, 7
        %v702 = vsub.s32 %v699, %v701
        %v703 = vrot.slane %v695, %v702
        %v705 = vunpack.c.l.s4 1934713408
        %v706 = vunpack.c.0.s8 %v705
        %v707 = vlaneseq
        %v708 = vshrl.u32 %v707, 7
        %v709 = vsub.s32 %v706, %v708
        %v710 = vrot.slane %v696, %v709
        %v711 = vcombine.high %v703, 0
        %v712 = vcombine.high %v710, 0
        %v715 = vunpack.c.l.s4 1983009808
        %v716 = vunpack.c.0.s8 %v715
        %v717 = vlaneseq
        %v718 = vshrl.u32 %v717, 7
        %v719 = vsub.s32 %v716, %v718
        %v720 = vrot.slane %v674, %v719
        %v723 = vunpack.c.l.s4 1983009808
        %v724 = vunpack.c.0.s8 %v723
        %v725 = vlaneseq
        %v726 = vshrl.u32 %v725, 7
        %v727 = vsub.s32 %v724, %v726
        %v728 = vrot.slane %v678, %v727
        %v729 = vcombine.low %v720, %v728
        %v730 = vcombine.high %v720, %v728
        %v732 = vunpack.c.l.s4 1934713408
        %v733 = vunpack.c.0.s8 %v732
        %v734 = vlaneseq
        %v735 = vshrl.u32 %v734, 7
        %v736 = vsub.s32 %v733, %v735
        %v737 = vrot.slane %v729, %v736
        %v739 = vunpack.c.l.s4 1934713408
        %v740 = vunpack.c.0.s8 %v739
        %v741 = vlaneseq
        %v742 = vshrl.u32 %v741, 7
        %v743 = vsub.s32 %v740, %v742
        %v744 = vrot.slane %v730, %v743
        %v745 = vcombine.high %v737, 0
        %v746 = vcombine.high %v744, 0
        %v749 = vpack.i.b16 %v737, %v703
        %v751 = vshrl.u32 %v703, 16
        %v752 = vshrl.u32 %v737, 16
        %v753 = vpack.i.b16 %v752, %v751
        %v757 = vpack.i.b16 %v745, %v711
        %v759 = vshrl.u32 %v711, 16
        %v760 = vshrl.u32 %v745, 16
        %v761 = vpack.i.b16 %v760, %v759
        %v765 = vpack.i.b16 %v744, %v710
        %v767 = vshrl.u32 %v710, 16
        %v768 = vshrl.u32 %v744, 16
        %v769 = vpack.i.b16 %v768, %v767
        %v773 = vpack.i.b16 %v746, %v712
        %v775 = vshrl.u32 %v712, 16
        %v776 = vshrl.u32 %v746, 16
        %v777 = vpack.i.b16 %v776, %v775
        %v779 = vcombine.low %v749, %v765
        %v781 = vunpack.c.l.s4 1983009808
        %v782 = vunpack.c.0.s8 %v781
        %v783 = vlaneseq
        %v784 = vshrl.u32 %v783, 7
        %v785 = vsub.s32 %v782, %v784
        %v786 = vrot.slane %v779, %v785
        %v787 = vcombine.low %v757, %v773
        %v789 = vunpack.c.l.s4 1983009808
        %v790 = vunpack.c.0.s8 %v789
        %v791 = vlaneseq
        %v792 = vshrl.u32 %v791, 7
        %v793 = vsub.s32 %v790, %v792
        %v794 = vrot.slane %v787, %v793
        %v795 = vcombine.low %v786, %v794
        %v797 = vunpack.c.l.s4 1934713408
        %v798 = vunpack.c.0.s8 %v797
        %v799 = vlaneseq
        %v800 = vshrl.u32 %v799, 7
        %v801 = vsub.s32 %v798, %v800
        %v802 = vrot.slane %v795, %v801
        %v803 = vcombine.high %v802, 0
        %v804 = vcombine.low %v753, %v769
        %v806 = vunpack.c.l.s4 1983009808
        %v807 = vunpack.c.0.s8 %v806
        %v808 = vlaneseq
        %v809 = vshrl.u32 %v808, 7
        %v810 = vsub.s32 %v807, %v809
        %v811 = vrot.slane %v804, %v810
        %v812 = vcombine.low %v761, %v777
        %v814 = vunpack.c.l.s4 1983009808
        %v815 = vunpack.c.0.s8 %v814
        %v816 = vlaneseq
        %v817 = vshrl.u32 %v816, 7
        %v818 = vsub.s32 %v815, %v817
        %v819 = vrot.slane %v812, %v818
        %v820 = vcombine.low %v811, %v819
        %v822 = vunpack.c.l.s4 1934713408
        %v823 = vunpack.c.0.s8 %v822
        %v824 = vlaneseq
        %v825 = vshrl.u32 %v824, 7
        %v826 = vsub.s32 %v823, %v825
        %v827 = vrot.slane %v820, %v826
        %v828 = vcombine.high %v827, 0
        %v831 = vpack.i.b16 %v827, %v802
        %v832 = vshrl.u32 %v802, 16
        %v833 = vshrl.u32 %v827, 16
        %v834 = vpack.i.b16 %v833, %v832
        %v837 = vpack.i.b16 %v828, %v803
        %v838 = vshrl.u32 %v803, 16
        %v839 = vshrl.u32 %v828, 16
        %v840 = vpack.i.b16 %v839, %v838
        %841 = vrot.lane.b32.xlu0 %v502, 64
        %v842 = vpop.permute.xlu0 %841
        %843 = vrot.lane.b32.xlu0 %v505, 64
        %v844 = vpop.permute.xlu0 %843
        %845 = vrot.lane.b32.xlu0 %v507, 64
        %v846 = vpop.permute.xlu0 %845
        %847 = vrot.lane.b32.xlu0 %v509, 64
        %v848 = vpop.permute.xlu0 %847
        %v851 = vunpack.c.l.s4 1983009808
        %v852 = vunpack.c.0.s8 %v851
        %v853 = vlaneseq
        %v854 = vshrl.u32 %v853, 7
        %v855 = vsub.s32 %v852, %v854
        %v856 = vrot.slane %v842, %v855
        %v859 = vunpack.c.l.s4 1983009808
        %v860 = vunpack.c.0.s8 %v859
        %v861 = vlaneseq
        %v862 = vshrl.u32 %v861, 7
        %v863 = vsub.s32 %v860, %v862
        %v864 = vrot.slane %v846, %v863
        %v865 = vcombine.low %v856, %v864
        %v866 = vcombine.high %v856, %v864
        %v868 = vunpack.c.l.s4 1934713408
        %v869 = vunpack.c.0.s8 %v868
        %v870 = vlaneseq
        %v871 = vshrl.u32 %v870, 7
        %v872 = vsub.s32 %v869, %v871
        %v873 = vrot.slane %v865, %v872
        %v875 = vunpack.c.l.s4 1934713408
        %v876 = vunpack.c.0.s8 %v875
        %v877 = vlaneseq
        %v878 = vshrl.u32 %v877, 7
        %v879 = vsub.s32 %v876, %v878
        %v880 = vrot.slane %v866, %v879
        %v881 = vcombine.high %v873, 0
        %v882 = vcombine.high %v880, 0
        %v885 = vunpack.c.l.s4 1983009808
        %v886 = vunpack.c.0.s8 %v885
        %v887 = vlaneseq
        %v888 = vshrl.u32 %v887, 7
        %v889 = vsub.s32 %v886, %v888
        %v890 = vrot.slane %v844, %v889
        %v893 = vunpack.c.l.s4 1983009808
        %v894 = vunpack.c.0.s8 %v893
        %v895 = vlaneseq
        %v896 = vshrl.u32 %v895, 7
        %v897 = vsub.s32 %v894, %v896
        %v898 = vrot.slane %v848, %v897
        %v899 = vcombine.low %v890, %v898
        %v900 = vcombine.high %v890, %v898
        %v902 = vunpack.c.l.s4 1934713408
        %v903 = vunpack.c.0.s8 %v902
        %v904 = vlaneseq
        %v905 = vshrl.u32 %v904, 7
        %v906 = vsub.s32 %v903, %v905
        %v907 = vrot.slane %v899, %v906
        %v909 = vunpack.c.l.s4 1934713408
        %v910 = vunpack.c.0.s8 %v909
        %v911 = vlaneseq
        %v912 = vshrl.u32 %v911, 7
        %v913 = vsub.s32 %v910, %v912
        %v914 = vrot.slane %v900, %v913
        %v915 = vcombine.high %v907, 0
        %v916 = vcombine.high %v914, 0
        %v919 = vpack.i.b16 %v907, %v873
        %v921 = vshrl.u32 %v873, 16
        %v922 = vshrl.u32 %v907, 16
        %v923 = vpack.i.b16 %v922, %v921
        %v927 = vpack.i.b16 %v915, %v881
        %v929 = vshrl.u32 %v881, 16
        %v930 = vshrl.u32 %v915, 16
        %v931 = vpack.i.b16 %v930, %v929
        %v935 = vpack.i.b16 %v914, %v880
        %v937 = vshrl.u32 %v880, 16
        %v938 = vshrl.u32 %v914, 16
        %v939 = vpack.i.b16 %v938, %v937
        %v943 = vpack.i.b16 %v916, %v882
        %v945 = vshrl.u32 %v882, 16
        %v946 = vshrl.u32 %v916, 16
        %v947 = vpack.i.b16 %v946, %v945
        %v949 = vcombine.low %v919, %v935
        %v951 = vunpack.c.l.s4 1983009808
        %v952 = vunpack.c.0.s8 %v951
        %v953 = vlaneseq
        %v954 = vshrl.u32 %v953, 7
        %v955 = vsub.s32 %v952, %v954
        %v956 = vrot.slane %v949, %v955
        %v957 = vcombine.low %v927, %v943
        %v959 = vunpack.c.l.s4 1983009808
        %v960 = vunpack.c.0.s8 %v959
        %v961 = vlaneseq
        %v962 = vshrl.u32 %v961, 7
        %v963 = vsub.s32 %v960, %v962
        %v964 = vrot.slane %v957, %v963
        %v965 = vcombine.low %v956, %v964
        %v967 = vunpack.c.l.s4 1934713408
        %v968 = vunpack.c.0.s8 %v967
        %v969 = vlaneseq
        %v970 = vshrl.u32 %v969, 7
        %v971 = vsub.s32 %v968, %v970
        %v972 = vrot.slane %v965, %v971
        %v973 = vcombine.high %v972, 0
        %v974 = vcombine.low %v923, %v939
        %v976 = vunpack.c.l.s4 1983009808
        %v977 = vunpack.c.0.s8 %v976
        %v978 = vlaneseq
        %v979 = vshrl.u32 %v978, 7
        %v980 = vsub.s32 %v977, %v979
        %v981 = vrot.slane %v974, %v980
        %v982 = vcombine.low %v931, %v947
        %v984 = vunpack.c.l.s4 1983009808
        %v985 = vunpack.c.0.s8 %v984
        %v986 = vlaneseq
        %v987 = vshrl.u32 %v986, 7
        %v988 = vsub.s32 %v985, %v987
        %v989 = vrot.slane %v982, %v988
        %v990 = vcombine.low %v981, %v989
        %v992 = vunpack.c.l.s4 1934713408
        %v993 = vunpack.c.0.s8 %v992
        %v994 = vlaneseq
        %v995 = vshrl.u32 %v994, 7
        %v996 = vsub.s32 %v993, %v995
        %v997 = vrot.slane %v990, %v996
        %v998 = vcombine.high %v997, 0
        %v1001 = vpack.i.b16 %v997, %v972
        %v1002 = vshrl.u32 %v972, 16
        %v1003 = vshrl.u32 %v997, 16
        %v1004 = vpack.i.b16 %v1003, %v1002
        %v1007 = vpack.i.b16 %v998, %v973
        %v1008 = vshrl.u32 %v973, 16
        %v1009 = vshrl.u32 %v998, 16
        %v1010 = vpack.i.b16 %v1009, %v1008
        %vm1011 = vcmask 64512
        %v1013 = vsel %vm1011, %v661, 0
        %v1016 = vsel %vm1011, %v831, 0
        %1018 = vmatprep.subr.bf16.mxu0 0
        %1019 = vmatpush1.bf16.xpose.msra.mxu0 0
        %1020 = vmatprep.subr.bf16.mxu0 0
        %1021 = vmatpush1.bf16.xpose.msra.mxu0 0
        %1022 = vmatprep.subr.bf16.mxu0 0
        %1023 = vmatpush1.bf16.xpose.msra.mxu0 0
        %1024 = vmatprep.subr.bf16.mxu0 0
        %1025 = vmatpush1.bf16.xpose.msra.mxu0 0
        %1026 = vmatprep.subr.bf16.mxu0 0
        %1027 = vmatpush1.bf16.xpose.msra.mxu0 0
        %1028 = vmatprep.subr.bf16.mxu0 0
        %1029 = vmatpush1.bf16.xpose.msra.mxu0 0
        %1030 = vmatprep.subr.bf16.mxu0 0
        %1031 = vmatpush1.bf16.xpose.msra.mxu0 0
        %1032 = vmatprep.subr.bf16.mxu0 0
        %1033 = vmatpush1.bf16.xpose.msra.mxu0 %v1016
        %1034 = vmatprep.subr.bf16.mxu0 0
        %1035 = vmatpush2.bf16.xpose.msra.mxu0 0
        %1036 = vmatprep.subr.bf16.mxu0 0
        %1037 = vmatpush2.bf16.xpose.msra.mxu0 0
        %1038 = vmatprep.subr.bf16.mxu0 0
        %1039 = vmatpush2.bf16.xpose.msra.mxu0 0
        %1040 = vmatprep.subr.bf16.mxu0 0
        %1041 = vmatpush2.bf16.xpose.msra.mxu0 0
        %1042 = vmatprep.subr.bf16.mxu0 0
        %1043 = vmatpush2.bf16.xpose.msra.mxu0 0
        %1044 = vmatprep.subr.bf16.mxu0 0
        %1045 = vmatpush2.bf16.xpose.msra.mxu0 0
        %1046 = vmatprep.subr.bf16.mxu0 0
        %1047 = vmatpush2.bf16.xpose.msra.mxu0 0
        %1048 = vmatprep.subr.bf16.mxu0 0
        %1049 = vmatpush2.bf16.xpose.msra.mxu0 0
        %1050 = vmatprep.mubr.bf16.mxu0 0
        %1051 = vmatmul.mubr.bf16.gmra.mxu0 %v1013
        %v1052 = vpop.f32.mrf.mxu0
        %v1053 = vadd.f32 0.0, %v1052
        %v1054 = vpop.f32.mrf.mxu0
        %v1055 = vpop.f32.mrf.mxu0
        %v1056 = vpop.f32.mrf.mxu0
        %1057 = vdwg.mxu0
        %v1059 = vsel %vm1011, %v664, 0
        %v1062 = vsel %vm1011, %v834, 0
        %1064 = vmatprep.subr.bf16.mxu0 0
        %1065 = vmatpush1.bf16.xpose.msra.mxu0 0
        %1066 = vmatprep.subr.bf16.mxu0 0
        %1067 = vmatpush1.bf16.xpose.msra.mxu0 0
        %1068 = vmatprep.subr.bf16.mxu0 0
        %1069 = vmatpush1.bf16.xpose.msra.mxu0 0
        %1070 = vmatprep.subr.bf16.mxu0 0
        %1071 = vmatpush1.bf16.xpose.msra.mxu0 0
        %1072 = vmatprep.subr.bf16.mxu0 0
        %1073 = vmatpush1.bf16.xpose.msra.mxu0 0
        %1074 = vmatprep.subr.bf16.mxu0 0
        %1075 = vmatpush1.bf16.xpose.msra.mxu0 0
        %1076 = vmatprep.subr.bf16.mxu0 0
        %1077 = vmatpush1.bf16.xpose.msra.mxu0 0
        %1078 = vmatprep.subr.bf16.mxu0 0
        %1079 = vmatpush1.bf16.xpose.msra.mxu0 %v1062
        %1080 = vmatprep.subr.bf16.mxu0 0
        %1081 = vmatpush2.bf16.xpose.msra.mxu0 0
        %1082 = vmatprep.subr.bf16.mxu0 0
        %1083 = vmatpush2.bf16.xpose.msra.mxu0 0
        %1084 = vmatprep.subr.bf16.mxu0 0
        %1085 = vmatpush2.bf16.xpose.msra.mxu0 0
        %1086 = vmatprep.subr.bf16.mxu0 0
        %1087 = vmatpush2.bf16.xpose.msra.mxu0 0
        %1088 = vmatprep.subr.bf16.mxu0 0
        %1089 = vmatpush2.bf16.xpose.msra.mxu0 0
        %1090 = vmatprep.subr.bf16.mxu0 0
        %1091 = vmatpush2.bf16.xpose.msra.mxu0 0
        %1092 = vmatprep.subr.bf16.mxu0 0
        %1093 = vmatpush2.bf16.xpose.msra.mxu0 0
        %1094 = vmatprep.subr.bf16.mxu0 0
        %1095 = vmatpush2.bf16.xpose.msra.mxu0 0
        %1096 = vmatprep.mubr.bf16.mxu0 0
        %1097 = vmatmul.mubr.bf16.gmra.mxu0 %v1059
        %v1098 = vpop.f32.mrf.mxu0
        %v1099 = vadd.f32 0.0, %v1098
        %v1100 = vpop.f32.mrf.mxu0
        %v1101 = vpop.f32.mrf.mxu0
        %v1102 = vpop.f32.mrf.mxu0
        %1103 = vdwg.mxu0
        %v1105 = vsel %vm1011, %v667, 0
        %v1108 = vsel %vm1011, %v837, 0
        %1110 = vmatprep.subr.bf16.mxu0 0
        %1111 = vmatpush1.bf16.xpose.msra.mxu0 0
        %1112 = vmatprep.subr.bf16.mxu0 0
        %1113 = vmatpush1.bf16.xpose.msra.mxu0 0
        %1114 = vmatprep.subr.bf16.mxu0 0
        %1115 = vmatpush1.bf16.xpose.msra.mxu0 0
        %1116 = vmatprep.subr.bf16.mxu0 0
        %1117 = vmatpush1.bf16.xpose.msra.mxu0 0
        %1118 = vmatprep.subr.bf16.mxu0 0
        %1119 = vmatpush1.bf16.xpose.msra.mxu0 0
        %1120 = vmatprep.subr.bf16.mxu0 0
        %1121 = vmatpush1.bf16.xpose.msra.mxu0 0
        %1122 = vmatprep.subr.bf16.mxu0 0
        %1123 = vmatpush1.bf16.xpose.msra.mxu0 0
        %1124 = vmatprep.subr.bf16.mxu0 0
        %1125 = vmatpush1.bf16.xpose.msra.mxu0 %v1108
        %1126 = vmatprep.subr.bf16.mxu0 0
        %1127 = vmatpush2.bf16.xpose.msra.mxu0 0
        %1128 = vmatprep.subr.bf16.mxu0 0
        %1129 = vmatpush2.bf16.xpose.msra.mxu0 0
        %1130 = vmatprep.subr.bf16.mxu0 0
        %1131 = vmatpush2.bf16.xpose.msra.mxu0 0
        %1132 = vmatprep.subr.bf16.mxu0 0
        %1133 = vmatpush2.bf16.xpose.msra.mxu0 0
        %1134 = vmatprep.subr.bf16.mxu0 0
        %1135 = vmatpush2.bf16.xpose.msra.mxu0 0
        %1136 = vmatprep.subr.bf16.mxu0 0
        %1137 = vmatpush2.bf16.xpose.msra.mxu0 0
        %1138 = vmatprep.subr.bf16.mxu0 0
        %1139 = vmatpush2.bf16.xpose.msra.mxu0 0
        %1140 = vmatprep.subr.bf16.mxu0 0
        %1141 = vmatpush2.bf16.xpose.msra.mxu0 0
        %1142 = vmatprep.mubr.bf16.mxu0 0
        %1143 = vmatmul.mubr.bf16.gmra.mxu0 %v1105
        %v1144 = vpop.f32.mrf.mxu0
        %v1145 = vadd.f32 0.0, %v1144
        %v1146 = vpop.f32.mrf.mxu0
        %v1147 = vpop.f32.mrf.mxu0
        %v1148 = vpop.f32.mrf.mxu0
        %1149 = vdwg.mxu0
        %v1151 = vsel %vm1011, %v670, 0
        %v1154 = vsel %vm1011, %v840, 0
        %1156 = vmatprep.subr.bf16.mxu0 0
        %1157 = vmatpush1.bf16.xpose.msra.mxu0 0
        %1158 = vmatprep.subr.bf16.mxu0 0
        %1159 = vmatpush1.bf16.xpose.msra.mxu0 0
        %1160 = vmatprep.subr.bf16.mxu0 0
        %1161 = vmatpush1.bf16.xpose.msra.mxu0 0
        %1162 = vmatprep.subr.bf16.mxu0 0
        %1163 = vmatpush1.bf16.xpose.msra.mxu0 0
        %1164 = vmatprep.subr.bf16.mxu0 0
        %1165 = vmatpush1.bf16.xpose.msra.mxu0 0
        %1166 = vmatprep.subr.bf16.mxu0 0
        %1167 = vmatpush1.bf16.xpose.msra.mxu0 0
        %1168 = vmatprep.subr.bf16.mxu0 0
        %1169 = vmatpush1.bf16.xpose.msra.mxu0 0
        %1170 = vmatprep.subr.bf16.mxu0 0
        %1171 = vmatpush1.bf16.xpose.msra.mxu0 %v1154
        %1172 = vmatprep.subr.bf16.mxu0 0
        %1173 = vmatpush2.bf16.xpose.msra.mxu0 0
        %1174 = vmatprep.subr.bf16.mxu0 0
        %1175 = vmatpush2.bf16.xpose.msra.mxu0 0
        %1176 = vmatprep.subr.bf16.mxu0 0
        %1177 = vmatpush2.bf16.xpose.msra.mxu0 0
        %1178 = vmatprep.subr.bf16.mxu0 0
        %1179 = vmatpush2.bf16.xpose.msra.mxu0 0
        %1180 = vmatprep.subr.bf16.mxu0 0
        %1181 = vmatpush2.bf16.xpose.msra.mxu0 0
        %1182 = vmatprep.subr.bf16.mxu0 0
        %1183 = vmatpush2.bf16.xpose.msra.mxu0 0
        %1184 = vmatprep.subr.bf16.mxu0 0
        %1185 = vmatpush2.bf16.xpose.msra.mxu0 0
        %1186 = vmatprep.subr.bf16.mxu0 0
        %1187 = vmatpush2.bf16.xpose.msra.mxu0 0
        %1188 = vmatprep.mubr.bf16.mxu0 0
        %1189 = vmatmul.mubr.bf16.gmra.mxu0 %v1151
        %v1190 = vpop.f32.mrf.mxu0
        %v1191 = vadd.f32 0.0, %v1190
        %v1192 = vpop.f32.mrf.mxu0
        %v1193 = vpop.f32.mrf.mxu0
        %v1194 = vpop.f32.mrf.mxu0
        %1195 = vdwg.mxu0
        %v1196 = vsel %vm1011, %v1053, -inf
        %1197 = vmax.xlane.f32.xlu0 %v1196
        %v1198 = vpop.xlane.xlu0 %1197
        %v1199 = vsel %vm1011, %v1099, -inf
        %1200 = vmax.xlane.f32.xlu0 %v1199
        %v1201 = vpop.xlane.xlu0 %1200
        %v1202 = vsel %vm1011, %v1145, -inf
        %1203 = vmax.xlane.f32.xlu0 %v1202
        %v1204 = vpop.xlane.xlu0 %1203
        %v1205 = vsel %vm1011, %v1191, -inf
        %1206 = vmax.xlane.f32.xlu0 %v1205
        %v1207 = vpop.xlane.xlu0 %1206
        %v1208 = vsub.f32 %v1053, %v1198
        %v1209 = vsub.f32 %v1099, %v1201
        %v1210 = vsub.f32 %v1145, %v1204
        %v1211 = vsub.f32 %v1191, %v1207
        %v1212 = vmul.f32 %v1208, 1.442695
        %v1213 = vpow.pop %v1212
        %v1214 = vmul.f32 %v1209, 1.442695
        %v1215 = vpow.pop %v1214
        %v1216 = vmul.f32 %v1210, 1.442695
        %v1217 = vpow.pop %v1216
        %v1218 = vmul.f32 %v1211, 1.442695
        %v1219 = vpow.pop %v1218
        %v1220 = vsel %vm1011, %v1213, 0.0
        %1221 = vadd.xlane.f32.xlu0 %v1220
        %v1222 = vpop.xlane.xlu0 %1221
        %v1223 = vsel %vm1011, %v1215, 0.0
        %1224 = vadd.xlane.f32.xlu0 %v1223
        %v1225 = vpop.xlane.xlu0 %1224
        %v1226 = vsel %vm1011, %v1217, 0.0
        %1227 = vadd.xlane.f32.xlu0 %v1226
        %v1228 = vpop.xlane.xlu0 %1227
        %v1229 = vsel %vm1011, %v1219, 0.0
        %1230 = vadd.xlane.f32.xlu0 %v1229
        %v1231 = vpop.xlane.xlu0 %1230
        %v1232 = vrcp.pop %v1222
        %v1233 = vrcp.pop %v1225
        %v1234 = vrcp.pop %v1228
        %v1235 = vrcp.pop %v1231
        %v1236 = vmul.f32 %v1213, %v1232
        %v1237 = vmul.f32 %v1215, %v1233
        %v1238 = vmul.f32 %v1217, %v1234
        %v1239 = vmul.f32 %v1219, %v1235
        %v1240 = vpack.c.bf16 %v1236, %v1236
        %v1241 = vpack.c.bf16 %v1237, %v1237
        %v1242 = vpack.c.bf16 %v1238, %v1238
        %v1243 = vpack.c.bf16 %v1239, %v1239
        %v1245 = vsel %vm1011, %v1240, 0
        %vm1247 = vcmask 1043456
        %v1249 = vsel %vm1247, %v1001, 0
        %1251 = vmatprep.subr.bf16.mxu0 0
        %1252 = vmatpush1.bf16.msra.mxu0 0
        %1253 = vmatprep.subr.bf16.mxu0 0
        %1254 = vmatpush1.bf16.msra.mxu0 0
        %1255 = vmatprep.subr.bf16.mxu0 0
        %1256 = vmatpush1.bf16.msra.mxu0 0
        %1257 = vmatprep.subr.bf16.mxu0 0
        %1258 = vmatpush1.bf16.msra.mxu0 0
        %1259 = vmatprep.subr.bf16.mxu0 0
        %1260 = vmatpush1.bf16.msra.mxu0 0
        %1261 = vmatprep.subr.bf16.mxu0 0
        %1262 = vmatpush1.bf16.msra.mxu0 0
        %1263 = vmatprep.subr.bf16.mxu0 0
        %1264 = vmatpush1.bf16.msra.mxu0 0
        %1265 = vmatprep.subr.bf16.mxu0 0
        %1266 = vmatpush1.bf16.msra.mxu0 %v1249
        %1267 = vmatprep.subr.bf16.mxu0 0
        %1268 = vmatpush2.bf16.msra.mxu0 0
        %1269 = vmatprep.subr.bf16.mxu0 0
        %1270 = vmatpush2.bf16.msra.mxu0 0
        %1271 = vmatprep.subr.bf16.mxu0 0
        %1272 = vmatpush2.bf16.msra.mxu0 0
        %1273 = vmatprep.subr.bf16.mxu0 0
        %1274 = vmatpush2.bf16.msra.mxu0 0
        %1275 = vmatprep.subr.bf16.mxu0 0
        %1276 = vmatpush2.bf16.msra.mxu0 0
        %1277 = vmatprep.subr.bf16.mxu0 0
        %1278 = vmatpush2.bf16.msra.mxu0 0
        %1279 = vmatprep.subr.bf16.mxu0 0
        %1280 = vmatpush2.bf16.msra.mxu0 0
        %1281 = vmatprep.subr.bf16.mxu0 0
        %1282 = vmatpush2.bf16.msra.mxu0 0
        %1283 = vmatprep.mubr.bf16.mxu0 0
        %1284 = vmatmul.mubr.bf16.gmra.mxu0 %v1245
        %v1285 = vpop.f32.mrf.mxu0
        %v1286 = vadd.f32 0.0, %v1285
        %v1287 = vpop.f32.mrf.mxu0
        %v1288 = vpop.f32.mrf.mxu0
        %v1289 = vpop.f32.mrf.mxu0
        %1290 = vdwg.mxu0
        %v1292 = vsel %vm1011, %v1241, 0
        %v1295 = vsel %vm1247, %v1004, 0
        %1297 = vmatprep.subr.bf16.mxu0 0
        %1298 = vmatpush1.bf16.msra.mxu0 0
        %1299 = vmatprep.subr.bf16.mxu0 0
        %1300 = vmatpush1.bf16.msra.mxu0 0
        %1301 = vmatprep.subr.bf16.mxu0 0
        %1302 = vmatpush1.bf16.msra.mxu0 0
        %1303 = vmatprep.subr.bf16.mxu0 0
        %1304 = vmatpush1.bf16.msra.mxu0 0
        %1305 = vmatprep.subr.bf16.mxu0 0
        %1306 = vmatpush1.bf16.msra.mxu0 0
        %1307 = vmatprep.subr.bf16.mxu0 0
        %1308 = vmatpush1.bf16.msra.mxu0 0
        %1309 = vmatprep.subr.bf16.mxu0 0
        %1310 = vmatpush1.bf16.msra.mxu0 0
        %1311 = vmatprep.subr.bf16.mxu0 0
        %1312 = vmatpush1.bf16.msra.mxu0 %v1295
        %1313 = vmatprep.subr.bf16.mxu0 0
        %1314 = vmatpush2.bf16.msra.mxu0 0
        %1315 = vmatprep.subr.bf16.mxu0 0
        %1316 = vmatpush2.bf16.msra.mxu0 0
        %1317 = vmatprep.subr.bf16.mxu0 0
        %1318 = vmatpush2.bf16.msra.mxu0 0
        %1319 = vmatprep.subr.bf16.mxu0 0
        %1320 = vmatpush2.bf16.msra.mxu0 0
        %1321 = vmatprep.subr.bf16.mxu0 0
        %1322 = vmatpush2.bf16.msra.mxu0 0
        %1323 = vmatprep.subr.bf16.mxu0 0
        %1324 = vmatpush2.bf16.msra.mxu0 0
        %1325 = vmatprep.subr.bf16.mxu0 0
        %1326 = vmatpush2.bf16.msra.mxu0 0
        %1327 = vmatprep.subr.bf16.mxu0 0
        %1328 = vmatpush2.bf16.msra.mxu0 0
        %1329 = vmatprep.mubr.bf16.mxu0 0
        %1330 = vmatmul.mubr.bf16.gmra.mxu0 %v1292
        %v1331 = vpop.f32.mrf.mxu0
        %v1332 = vadd.f32 0.0, %v1331
        %v1333 = vpop.f32.mrf.mxu0
        %v1334 = vpop.f32.mrf.mxu0
        %v1335 = vpop.f32.mrf.mxu0
        %1336 = vdwg.mxu0
        %v1338 = vsel %vm1011, %v1242, 0
        %v1341 = vsel %vm1247, %v1007, 0
        %1343 = vmatprep.subr.bf16.mxu0 0
        %1344 = vmatpush1.bf16.msra.mxu0 0
        %1345 = vmatprep.subr.bf16.mxu0 0
        %1346 = vmatpush1.bf16.msra.mxu0 0
        %1347 = vmatprep.subr.bf16.mxu0 0
        %1348 = vmatpush1.bf16.msra.mxu0 0
        %1349 = vmatprep.subr.bf16.mxu0 0
        %1350 = vmatpush1.bf16.msra.mxu0 0
        %1351 = vmatprep.subr.bf16.mxu0 0
        %1352 = vmatpush1.bf16.msra.mxu0 0
        %1353 = vmatprep.subr.bf16.mxu0 0
        %1354 = vmatpush1.bf16.msra.mxu0 0
        %1355 = vmatprep.subr.bf16.mxu0 0
        %1356 = vmatpush1.bf16.msra.mxu0 0
        %1357 = vmatprep.subr.bf16.mxu0 0
        %1358 = vmatpush1.bf16.msra.mxu0 %v1341
        %1359 = vmatprep.subr.bf16.mxu0 0
        %1360 = vmatpush2.bf16.msra.mxu0 0
        %1361 = vmatprep.subr.bf16.mxu0 0
        %1362 = vmatpush2.bf16.msra.mxu0 0
        %1363 = vmatprep.subr.bf16.mxu0 0
        %1364 = vmatpush2.bf16.msra.mxu0 0
        %1365 = vmatprep.subr.bf16.mxu0 0
        %1366 = vmatpush2.bf16.msra.mxu0 0
        %1367 = vmatprep.subr.bf16.mxu0 0
        %1368 = vmatpush2.bf16.msra.mxu0 0
        %1369 = vmatprep.subr.bf16.mxu0 0
        %1370 = vmatpush2.bf16.msra.mxu0 0
        %1371 = vmatprep.subr.bf16.mxu0 0
        %1372 = vmatpush2.bf16.msra.mxu0 0
        %1373 = vmatprep.subr.bf16.mxu0 0
        %1374 = vmatpush2.bf16.msra.mxu0 0
        %1375 = vmatprep.mubr.bf16.mxu0 0
        %1376 = vmatmul.mubr.bf16.gmra.mxu0 %v1338
        %v1377 = vpop.f32.mrf.mxu0
        %v1378 = vadd.f32 0.0, %v1377
        %v1379 = vpop.f32.mrf.mxu0
        %v1380 = vpop.f32.mrf.mxu0
        %v1381 = vpop.f32.mrf.mxu0
        %1382 = vdwg.mxu0
        %v1384 = vsel %vm1011, %v1243, 0
        %v1387 = vsel %vm1247, %v1010, 0
        %1389 = vmatprep.subr.bf16.mxu0 0
        %1390 = vmatpush1.bf16.msra.mxu0 0
        %1391 = vmatprep.subr.bf16.mxu0 0
        %1392 = vmatpush1.bf16.msra.mxu0 0
        %1393 = vmatprep.subr.bf16.mxu0 0
        %1394 = vmatpush1.bf16.msra.mxu0 0
        %1395 = vmatprep.subr.bf16.mxu0 0
        %1396 = vmatpush1.bf16.msra.mxu0 0
        %1397 = vmatprep.subr.bf16.mxu0 0
        %1398 = vmatpush1.bf16.msra.mxu0 0
        %1399 = vmatprep.subr.bf16.mxu0 0
        %1400 = vmatpush1.bf16.msra.mxu0 0
        %1401 = vmatprep.subr.bf16.mxu0 0
        %1402 = vmatpush1.bf16.msra.mxu0 0
        %1403 = vmatprep.subr.bf16.mxu0 0
        %1404 = vmatpush1.bf16.msra.mxu0 %v1387
        %1405 = vmatprep.subr.bf16.mxu0 0
        %1406 = vmatpush2.bf16.msra.mxu0 0
        %1407 = vmatprep.subr.bf16.mxu0 0
        %1408 = vmatpush2.bf16.msra.mxu0 0
        %1409 = vmatprep.subr.bf16.mxu0 0
        %1410 = vmatpush2.bf16.msra.mxu0 0
        %1411 = vmatprep.subr.bf16.mxu0 0
        %1412 = vmatpush2.bf16.msra.mxu0 0
        %1413 = vmatprep.subr.bf16.mxu0 0
        %1414 = vmatpush2.bf16.msra.mxu0 0
        %1415 = vmatprep.subr.bf16.mxu0 0
        %1416 = vmatpush2.bf16.msra.mxu0 0
        %1417 = vmatprep.subr.bf16.mxu0 0
        %1418 = vmatpush2.bf16.msra.mxu0 0
        %1419 = vmatprep.subr.bf16.mxu0 0
        %1420 = vmatpush2.bf16.msra.mxu0 0
        %1421 = vmatprep.mubr.bf16.mxu0 0
        %1422 = vmatmul.mubr.bf16.gmra.mxu0 %v1384
        %v1423 = vpop.f32.mrf.mxu0
        %v1424 = vadd.f32 0.0, %v1423
        %v1425 = vpop.f32.mrf.mxu0
        %v1426 = vpop.f32.mrf.mxu0
        %v1427 = vpop.f32.mrf.mxu0
        %1428 = vdwg.mxu0
        %v1429 = vcombine.low %v1286, %v1378
        %v1430 = vcombine.high %v1286, %v1378
        %v1432 = vunpack.c.l.s4 1983009808
        %v1433 = vunpack.c.0.s8 %v1432
        %v1434 = vlaneseq
        %v1435 = vshrl.u32 %v1434, 7
        %v1436 = vsub.s32 %v1433, %v1435
        %v1437 = vrot.slane %v1429, %v1436
        %v1439 = vunpack.c.l.s4 1983009808
        %v1440 = vunpack.c.0.s8 %v1439
        %v1441 = vlaneseq
        %v1442 = vshrl.u32 %v1441, 7
        %v1443 = vsub.s32 %v1440, %v1442
        %v1444 = vrot.slane %v1430, %v1443
        %v1445 = vcombine.low %v1332, %v1424
        %v1446 = vcombine.high %v1332, %v1424
        %v1448 = vunpack.c.l.s4 1983009808
        %v1449 = vunpack.c.0.s8 %v1448
        %v1450 = vlaneseq
        %v1451 = vshrl.u32 %v1450, 7
        %v1452 = vsub.s32 %v1449, %v1451
        %v1453 = vrot.slane %v1445, %v1452
        %v1455 = vunpack.c.l.s4 1983009808
        %v1456 = vunpack.c.0.s8 %v1455
        %v1457 = vlaneseq
        %v1458 = vshrl.u32 %v1457, 7
        %v1459 = vsub.s32 %v1456, %v1458
        %v1460 = vrot.slane %v1446, %v1459
        %v1461 = vcombine.low %v1437, %v1453
        %v1462 = vcombine.high %v1437, %v1453
        %v1464 = vunpack.c.l.s4 1934713408
        %v1465 = vunpack.c.0.s8 %v1464
        %v1466 = vlaneseq
        %v1467 = vshrl.u32 %v1466, 7
        %v1468 = vsub.s32 %v1465, %v1467
        %v1469 = vrot.slane %v1461, %v1468
        %v1471 = vunpack.c.l.s4 1934713408
        %v1472 = vunpack.c.0.s8 %v1471
        %v1473 = vlaneseq
        %v1474 = vshrl.u32 %v1473, 7
        %v1475 = vsub.s32 %v1472, %v1474
        %v1476 = vrot.slane %v1462, %v1475
        %v1477 = vcombine.low %v1444, %v1460
        %v1478 = vcombine.high %v1444, %v1460
        %v1480 = vunpack.c.l.s4 1934713408
        %v1481 = vunpack.c.0.s8 %v1480
        %v1482 = vlaneseq
        %v1483 = vshrl.u32 %v1482, 7
        %v1484 = vsub.s32 %v1481, %v1483
        %v1485 = vrot.slane %v1477, %v1484
        %v1487 = vunpack.c.l.s4 1934713408
        %v1488 = vunpack.c.0.s8 %v1487
        %v1489 = vlaneseq
        %v1490 = vshrl.u32 %v1489, 7
        %v1491 = vsub.s32 %v1488, %v1490
        %v1492 = vrot.slane %v1478, %v1491
        %v1493 = vcombine.high %v1469, 0.0
        %v1494 = vcombine.high %v1476, 0.0
        %v1495 = vcombine.high %v1485, 0.0
        %v1496 = vcombine.high %v1492, 0.0
        %v1497 = vcombine.low %v1469, %v1476
        %v1499 = vunpack.c.l.s4 1983009808
        %v1500 = vunpack.c.0.s8 %v1499
        %v1501 = vlaneseq
        %v1502 = vshrl.u32 %v1501, 7
        %v1503 = vsub.s32 %v1500, %v1502
        %v1504 = vrot.slane %v1497, %v1503
        %v1505 = vcombine.low %v1493, %v1494
        %v1507 = vunpack.c.l.s4 1983009808
        %v1508 = vunpack.c.0.s8 %v1507
        %v1509 = vlaneseq
        %v1510 = vshrl.u32 %v1509, 7
        %v1511 = vsub.s32 %v1508, %v1510
        %v1512 = vrot.slane %v1505, %v1511
        %v1513 = vcombine.low %v1485, %v1492
        %v1515 = vunpack.c.l.s4 1983009808
        %v1516 = vunpack.c.0.s8 %v1515
        %v1517 = vlaneseq
        %v1518 = vshrl.u32 %v1517, 7
        %v1519 = vsub.s32 %v1516, %v1518
        %v1520 = vrot.slane %v1513, %v1519
        %v1521 = vcombine.low %v1495, %v1496
        %v1523 = vunpack.c.l.s4 1983009808
        %v1524 = vunpack.c.0.s8 %v1523
        %v1525 = vlaneseq
        %v1526 = vshrl.u32 %v1525, 7
        %v1527 = vsub.s32 %v1524, %v1526
        %v1528 = vrot.slane %v1521, %v1527
        %v1529 = vcombine.low %v1504, %v1512
        %v1530 = vcombine.high %v1504, %v1512
        %v1532 = vunpack.c.l.s4 1934713408
        %v1533 = vunpack.c.0.s8 %v1532
        %v1534 = vlaneseq
        %v1535 = vshrl.u32 %v1534, 7
        %v1536 = vsub.s32 %v1533, %v1535
        %v1537 = vrot.slane %v1529, %v1536
        %v1539 = vunpack.c.l.s4 1934713408
        %v1540 = vunpack.c.0.s8 %v1539
        %v1541 = vlaneseq
        %v1542 = vshrl.u32 %v1541, 7
        %v1543 = vsub.s32 %v1540, %v1542
        %v1544 = vrot.slane %v1530, %v1543
        %v1545 = vcombine.low %v1520, %v1528
        %v1546 = vcombine.high %v1520, %v1528
        %v1548 = vunpack.c.l.s4 1934713408
        %v1549 = vunpack.c.0.s8 %v1548
        %v1550 = vlaneseq
        %v1551 = vshrl.u32 %v1550, 7
        %v1552 = vsub.s32 %v1549, %v1551
        %v1553 = vrot.slane %v1545, %v1552
        %v1555 = vunpack.c.l.s4 1934713408
        %v1556 = vunpack.c.0.s8 %v1555
        %v1557 = vlaneseq
        %v1558 = vshrl.u32 %v1557, 7
        %v1559 = vsub.s32 %v1556, %v1558
        %v1560 = vrot.slane %v1546, %v1559
        %v1561 = vcombine.low %v1537, %v1553
        %v1562 = vcombine.high %v1537, %v1553
        %v1563 = vcombine.low %v1544, %v1560
        %v1564 = vcombine.high %v1544, %v1560
        %1566 = vrot.lane.b32.xlu0 %v1562, 8
        %v1567 = vpop.permute.xlu0 %1566
        %1570 = vrot.lane.b32.xlu0 %v1563, 16
        %v1571 = vpop.permute.xlu0 %1570
        %1574 = vrot.lane.b32.xlu0 %v1564, 24
        %v1575 = vpop.permute.xlu0 %1574
        %v1577 = vsel %vm1011, %v1561, %v1567
        %vm1578 = vcmask 130048
        %v1579 = vsel %vm1578, %v1577, %v1571
        %vm1580 = vcmask 195584
        %v1581 = vsel %vm1580, %v1579, %v1575
        %v1582 = vpack.c.bf16 %v1581, %v1581
        %v1583 = vld [vmem:[%s4] sm:$0xf]
        %v1584 = vld [vmem:[%s4 + $0x4] sm:$0xf]
        %v1585 = vld [vmem:[%s4 + $0x8] sm:$0xf]
        %v1586 = vld [vmem:[%s4 + $0xc] sm:$0xf]
        %v1591 = vunpack.c.l.b16 %v1583
        %v1592 = vunpack.c.l.b16 %v1584
        %v1593 = vunpack.c.l.b16 %v1585
        %v1594 = vunpack.c.l.b16 %v1586
        %v1595 = vpack.c.b16 %v1592, %v1591
        %v1596 = vpack.c.b16 %v1594, %v1593
        %v1600 = vsel %vm413, %v1582, 0
        %1602 = vmatprep.subr.bf16.mxu0 0
        %1603 = vmatpush1.bf16.msra.mxu0 0
        %1604 = vmatprep.subr.bf16.mxu0 0
        %1605 = vmatpush1.bf16.msra.mxu0 0
        %1606 = vmatprep.subr.bf16.mxu0 0
        %1607 = vmatpush1.bf16.msra.mxu0 0
        %1608 = vmatprep.subr.bf16.mxu0 0
        %1609 = vmatpush1.bf16.msra.mxu0 0
        %1610 = vmatprep.subr.bf16.mxu0 0
        %1611 = vmatpush1.bf16.msra.mxu0 0
        %1612 = vmatprep.subr.bf16.mxu0 0
        %1613 = vmatpush1.bf16.msra.mxu0 0
        %1614 = vmatprep.subr.bf16.mxu0 0
        %1615 = vmatpush1.bf16.msra.mxu0 %v1596
        %1616 = vmatprep.subr.bf16.mxu0 0
        %1617 = vmatpush1.bf16.msra.mxu0 %v1595
        %1618 = vmatprep.subr.bf16.mxu0 0
        %1619 = vmatpush2.bf16.msra.mxu0 0
        %1620 = vmatprep.subr.bf16.mxu0 0
        %1621 = vmatpush2.bf16.msra.mxu0 0
        %1622 = vmatprep.subr.bf16.mxu0 0
        %1623 = vmatpush2.bf16.msra.mxu0 0
        %1624 = vmatprep.subr.bf16.mxu0 0
        %1625 = vmatpush2.bf16.msra.mxu0 0
        %1626 = vmatprep.subr.bf16.mxu0 0
        %1627 = vmatpush2.bf16.msra.mxu0 0
        %1628 = vmatprep.subr.bf16.mxu0 0
        %1629 = vmatpush2.bf16.msra.mxu0 0
        %1630 = vmatprep.subr.bf16.mxu0 0
        %1631 = vmatpush2.bf16.msra.mxu0 0
        %1632 = vmatprep.subr.bf16.mxu0 0
        %1633 = vmatpush2.bf16.msra.mxu0 0
        %1634 = vmatprep.mubr.bf16.mxu0 0
        %1635 = vmatmul.mubr.bf16.gmra.mxu0 %v1600
        %v1636 = vpop.f32.mrf.mxu0
        %v1637 = vadd.f32 0.0, %v1636
        %v1638 = vpop.f32.mrf.mxu0
        %v1639 = vpop.f32.mrf.mxu0
        %v1640 = vpop.f32.mrf.mxu0
        %1641 = vdwg.mxu0
        %v1642 = vadd.f32 %v410, %v1637
        %v1643 = vld [vmem:[%s5] sm:$0x1]
        %v1645 = vlaneseq
        %v1646 = vshrl.u32 %v1645, 7
        %v1647 = vsub.s32 0, %v1646
        %v1648 = vrot.slane %v1643, %v1647
        %v1650 = vadd.f32 %v1642, %v1648
        %v1651 = vld [vmem:[%s6] sm:$0x1]
        %v1652 = vld [vmem:[%s7] sm:$0x1]
        %v1653 = vsel %vm413, %v1650, 0.0
        %1654 = vadd.xlane.f32.xlu0 %v1653
        %v1655 = vpop.xlane.xlu0 %1654
        %v1656 = vmul.f32 %v1655, %v417
        %v1657 = vsub.f32 %v1650, %v1656
        %v1658 = vmul.f32 %v1657, %v1657
        %v1659 = vsel %vm413, %v1658, 0.0
        %1660 = vadd.xlane.f32.xlu0 %v1659
        %v1661 = vpop.xlane.xlu0 %1660
        %v1662 = vmul.f32 %v1661, %v417
        %v1663 = vadd.f32 %v1662, 1e-05
        %v1664 = vrsqrt.pop %v1663
        %v1665 = vmul.f32 %v1657, %v1664
        %v1667 = vlaneseq
        %v1668 = vshrl.u32 %v1667, 7
        %v1669 = vsub.s32 0, %v1668
        %v1670 = vrot.slane %v1651, %v1669
        %v1672 = vmul.f32 %v1665, %v1670
        %v1674 = vlaneseq
        %v1675 = vshrl.u32 %v1674, 7
        %v1676 = vsub.s32 0, %v1675
        %v1677 = vrot.slane %v1652, %v1676
        %v1679 = vadd.f32 %v1672, %v1677
        %v1680 = vpack.c.bf16 %v1679, %v1679
        %v1681 = vld [vmem:[%s8] sm:$0xf]
        %v1682 = vld [vmem:[%s8 + $0x4] sm:$0xf]
        %v1683 = vld [vmem:[%s8 + $0x8] sm:$0xf]
        %v1684 = vld [vmem:[%s8 + $0xc] sm:$0xf]
        %v1685 = vld [vmem:[%s9] sm:$0x1]
        %v1687 = vlaneseq
        %v1688 = vshrl.u32 %v1687, 7
        %v1689 = vsub.s32 0, %v1688
        %v1690 = vrot.slane %v1685, %v1689
        %v1696 = vunpack.c.l.b16 %v1681
        %v1697 = vunpack.c.l.b16 %v1682
        %v1698 = vunpack.c.l.b16 %v1683
        %v1699 = vunpack.c.l.b16 %v1684
        %v1700 = vpack.c.b16 %v1697, %v1696
        %v1701 = vpack.c.b16 %v1699, %v1698
        %v1705 = vsel %vm413, %v1680, 0
        %1707 = vmatprep.subr.bf16.mxu0 0
        %1708 = vmatpush1.bf16.msra.mxu0 0
        %1709 = vmatprep.subr.bf16.mxu0 0
        %1710 = vmatpush1.bf16.msra.mxu0 0
        %1711 = vmatprep.subr.bf16.mxu0 0
        %1712 = vmatpush1.bf16.msra.mxu0 0
        %1713 = vmatprep.subr.bf16.mxu0 0
        %1714 = vmatpush1.bf16.msra.mxu0 0
        %1715 = vmatprep.subr.bf16.mxu0 0
        %1716 = vmatpush1.bf16.msra.mxu0 0
        %1717 = vmatprep.subr.bf16.mxu0 0
        %1718 = vmatpush1.bf16.msra.mxu0 0
        %1719 = vmatprep.subr.bf16.mxu0 0
        %1720 = vmatpush1.bf16.msra.mxu0 %v1701
        %1721 = vmatprep.subr.bf16.mxu0 0
        %1722 = vmatpush1.bf16.msra.mxu0 %v1700
        %1723 = vmatprep.subr.bf16.mxu0 0
        %1724 = vmatpush2.bf16.msra.mxu0 0
        %1725 = vmatprep.subr.bf16.mxu0 0
        %1726 = vmatpush2.bf16.msra.mxu0 0
        %1727 = vmatprep.subr.bf16.mxu0 0
        %1728 = vmatpush2.bf16.msra.mxu0 0
        %1729 = vmatprep.subr.bf16.mxu0 0
        %1730 = vmatpush2.bf16.msra.mxu0 0
        %1731 = vmatprep.subr.bf16.mxu0 0
        %1732 = vmatpush2.bf16.msra.mxu0 0
        %1733 = vmatprep.subr.bf16.mxu0 0
        %1734 = vmatpush2.bf16.msra.mxu0 0
        %1735 = vmatprep.subr.bf16.mxu0 0
        %1736 = vmatpush2.bf16.msra.mxu0 0
        %1737 = vmatprep.subr.bf16.mxu0 0
        %1738 = vmatpush2.bf16.msra.mxu0 0
        %1739 = vmatprep.mubr.bf16.mxu0 0
        %1740 = vmatmul.mubr.bf16.gmra.mxu0 %v1705
        %v1741 = vpop.f32.mrf.mxu0
        %v1742 = vadd.f32 %v1690, %v1741
        %v1743 = vpop.f32.mrf.mxu0
        %v1744 = vpop.f32.mrf.mxu0
        %v1745 = vpop.f32.mrf.mxu0
        %1746 = vdwg.mxu0
        %v1747 = vmul.f32 %v1742, 0.5
        %v1748 = vmul.f32 %v1742, 0.044715
        %v1749 = vmul.f32 %v1748, %v1742
        %v1750 = vmul.f32 %v1749, %v1742
        %v1751 = vadd.f32 %v1742, %v1750
        %v1752 = vmul.f32 %v1751, 0.7978846
        %v1753 = vtanh.pop %v1752
        %v1754 = vadd.f32 %v1753, 1.0
        %v1755 = vmul.f32 %v1747, %v1754
        %v1756 = vpack.c.bf16 %v1755, %v1755
        %v1757 = vld [vmem:[%s10] sm:$0xf]
        %v1758 = vld [vmem:[%s10 + $0x4] sm:$0xf]
        %v1759 = vld [vmem:[%s10 + $0x8] sm:$0xf]
        %v1760 = vld [vmem:[%s10 + $0xc] sm:$0xf]
        %v1761 = vld [vmem:[%s10 + $0x10] sm:$0xf]
        %v1762 = vld [vmem:[%s10 + $0x14] sm:$0xf]
        %v1763 = vld [vmem:[%s10 + $0x18] sm:$0xf]
        %v1764 = vld [vmem:[%s10 + $0x1c] sm:$0xf]
        %v1765 = vld [vmem:[%s10 + $0x20] sm:$0xf]
        %v1766 = vld [vmem:[%s10 + $0x24] sm:$0xf]
        %v1767 = vld [vmem:[%s10 + $0x28] sm:$0xf]
        %v1768 = vld [vmem:[%s10 + $0x2c] sm:$0xf]
        %v1769 = vld [vmem:[%s10 + $0x30] sm:$0xf]
        %v1770 = vld [vmem:[%s10 + $0x34] sm:$0xf]
        %v1771 = vld [vmem:[%s10 + $0x38] sm:$0xf]
        %v1772 = vld [vmem:[%s10 + $0x3c] sm:$0xf]
        %v1773 = vld [vmem:[%s11] sm:$0x1]
        %v1775 = vlaneseq
        %v1776 = vshrl.u32 %v1775, 7
        %v1777 = vsub.s32 0, %v1776
        %v1778 = vrot.slane %v1773, %v1777
        %v1796 = vunpack.c.l.b16 %v1757
        %v1797 = vunpack.c.l.b16 %v1758
        %v1798 = vunpack.c.l.b16 %v1759
        %v1799 = vunpack.c.l.b16 %v1760
        %v1800 = vunpack.c.l.b16 %v1761
        %v1801 = vunpack.c.l.b16 %v1762
        %v1802 = vunpack.c.l.b16 %v1763
        %v1803 = vunpack.c.l.b16 %v1764
        %v1804 = vunpack.c.l.b16 %v1765
        %v1805 = vunpack.c.l.b16 %v1766
        %v1806 = vunpack.c.l.b16 %v1767
        %v1807 = vunpack.c.l.b16 %v1768
        %v1808 = vunpack.c.l.b16 %v1769
        %v1809 = vunpack.c.l.b16 %v1770
        %v1810 = vunpack.c.l.b16 %v1771
        %v1811 = vunpack.c.l.b16 %v1772
        %v1812 = vpack.c.b16 %v1797, %v1796
        %v1813 = vpack.c.b16 %v1799, %v1798
        %v1814 = vpack.c.b16 %v1801, %v1800
        %v1815 = vpack.c.b16 %v1803, %v1802
        %v1816 = vpack.c.b16 %v1805, %v1804
        %v1817 = vpack.c.b16 %v1807, %v1806
        %v1818 = vpack.c.b16 %v1809, %v1808
        %v1819 = vpack.c.b16 %v1811, %v1810
        %1828 = vmatprep.subr.bf16.mxu0 0
        %1829 = vmatpush1.bf16.msra.mxu0 %v1819
        %1830 = vmatprep.subr.bf16.mxu0 0
        %1831 = vmatpush1.bf16.msra.mxu0 %v1818
        %1832 = vmatprep.subr.bf16.mxu0 0
        %1833 = vmatpush1.bf16.msra.mxu0 %v1817
        %1834 = vmatprep.subr.bf16.mxu0 0
        %1835 = vmatpush1.bf16.msra.mxu0 %v1816
        %1836 = vmatprep.subr.bf16.mxu0 0
        %1837 = vmatpush1.bf16.msra.mxu0 %v1815
        %1838 = vmatprep.subr.bf16.mxu0 0
        %1839 = vmatpush1.bf16.msra.mxu0 %v1814
        %1840 = vmatprep.subr.bf16.mxu0 0
        %1841 = vmatpush1.bf16.msra.mxu0 %v1813
        %1842 = vmatprep.subr.bf16.mxu0 0
        %1843 = vmatpush1.bf16.msra.mxu0 %v1812
        %1844 = vmatprep.subr.bf16.mxu0 0
        %1845 = vmatpush2.bf16.msra.mxu0 0
        %1846 = vmatprep.subr.bf16.mxu0 0
        %1847 = vmatpush2.bf16.msra.mxu0 0
        %1848 = vmatprep.subr.bf16.mxu0 0
        %1849 = vmatpush2.bf16.msra.mxu0 0
        %1850 = vmatprep.subr.bf16.mxu0 0
        %1851 = vmatpush2.bf16.msra.mxu0 0
        %1852 = vmatprep.subr.bf16.mxu0 0
        %1853 = vmatpush2.bf16.msra.mxu0 0
        %1854 = vmatprep.subr.bf16.mxu0 0
        %1855 = vmatpush2.bf16.msra.mxu0 0
        %1856 = vmatprep.subr.bf16.mxu0 0
        %1857 = vmatpush2.bf16.msra.mxu0 0
        %1858 = vmatprep.subr.bf16.mxu0 0
        %1859 = vmatpush2.bf16.msra.mxu0 0
        %1860 = vmatprep.mubr.bf16.mxu0 0
        %1861 = vmatmul.mubr.bf16.gmra.mxu0 %v1756
        %v1862 = vpop.f32.mrf.mxu0
        %v1863 = vadd.f32 %v1778, %v1862
        %v1864 = vpop.f32.mrf.mxu0
        %v1865 = vpop.f32.mrf.mxu0
        %v1866 = vpop.f32.mrf.mxu0
        %1867 = vdwg.mxu0
        %v1868 = vadd.f32 %v1650, %v1863
        %1869 = vst.msk [vmem:[%s404] sm:$0xff] %vm413, %v1868
        %s1870 = sand.u32 %s291, 1
        %s1871 = scalar_lea.sflag [#allocation3], %s1870
        %s1872 = sand.u32 %s291, 1
        %s1873 = smul.addr %s1872, 8
        %s1874 = scalar_lea.vmem [#allocation2], %s1873
        // Predicated region
        $region69: #{tpu_custom_call.1} parent=67 // pred_check
          %p1875 = pneg %p301
        $region70: #{tpu_custom_call.1} parent=67 // pred_check_branch
          %1877 = sbr.rel (%p1875) target = $region72
        $region71: #{tpu_custom_call.1} parent=67 // pred_region
          %s1879 = ssub.s32 128, 128
          %1880 = vsyncadd %s1871, %s1879
          %s1881 = smul.addr %s26, 128
          %s1882 = scalar_lea.hbm %s12, %s1881
          %s1884 = sshll.u32 %s1874, 4
          %s1885 = int_to_ptr.vmem [resolvable:$true] %s1884
          %1887 = dma.vmem_to_hbm [thread:$0]  %s1885, 128, %s1882, %s1871
        $region72: #{tpu_custom_call.1} parent=67 // pred_fallthru
          _
      $region68: #{tpu_custom_call.1} parent=5 // pred_fallthru
        _
      %p1888 = scmp.le.s32.totalorder 2, %s21
      // Predicated region
      $region73: #{tpu_custom_call.1} parent=5 // pred_check
        %p1889 = pneg %p1888
      $region74: #{tpu_custom_call.1} parent=5 // pred_check_branch
        %1891 = sbr.rel (%p1889) target = $region76
      $region75: #{tpu_custom_call.1} parent=5 // pred_region
        %s1892 = ssub.s32 %s21, 2
        // Predicated region
        $region77: #{tpu_custom_call.1} parent=75 // pred_check
          %p1893 = pneg %p307
        $region78: #{tpu_custom_call.1} parent=75 // pred_check_branch
          %1895 = sbr.rel (%p1893) target = $region80
        $region79: #{tpu_custom_call.1} parent=75 // pred_region
          %s1896 = sand.u32 %s292, 1
          %s1897 = scalar_lea.sflag [#allocation3], %s1896
          %s1898 = sand.u32 %s292, 1
          %s1899 = smul.addr %s1898, 8
          %s1900 = scalar_lea.vmem [#allocation2], %s1899
          %1901 = dma.done %s1897, 128
        $region80: #{tpu_custom_call.1} parent=75 // pred_fallthru
          _
      $region76: #{tpu_custom_call.1} parent=5 // pred_fallthru
        _
    $region6: #{tpu_custom_call.1} parent=1 // loop_footer
      %s25 = sadd.s32 1, %s21
    $region7: #{tpu_custom_call.1} parent=1 // loop_footer_branch
      %20 = sbr.rel target = $region3
    $region8: #{tpu_custom_call.1} parent=1 // loop_exit
      _
    %1902 = vsyncpa [#allocation3], 1
    %s1903 = scalar_lea.sflag [#allocation3], 1
    %1904 = vsyncpa %s1903, 1

</llo_original>
